<compile_context>
chip_gen: v6e
topology: v6e:2x2x1
jax: 0.10.0
libtpu: 0.0.40
codegen_flags: <defaults>
</compile_context>

<pallas_src>
import jax
import jax.numpy as jnp
from jax.experimental import pallas as pl
from jax.experimental.pallas import tpu as pltpu

# problem sizes (from the module / example input)
N, CIN, H, W = 1, 128, 12, 12
CMID, COUT = 128, 192
KW = 7          # conv1 kernel width  (1,7), pad (0,3)
KH = 7          # conv2 kernel height (7,1), pad (3,0)
PAD = 3
HW = H * W      # 144
EPS = 1e-3


def _fused_kernel(xpad_ref, w1_ref, gamma_ref, beta_ref, w2_hbm_ref, out_ref,
                  xslab_ref, yslab_ref, ypad_ref, w2_vmem_ref, w2_sem):
    """xpad_ref:   (HW + 2*PAD, CIN) bf16 -- flattened NHWC rows, PAD zero rows
                    on each end (keeps the shifted-window loads in bounds)
       w1_ref:     (KW*CIN, CMID) bf16 -- conv1 weights, tap-major rows
       gamma_ref:  (1, CMID) f32
       beta_ref:   (1, CMID) f32
       w2_hbm_ref: (KH*CMID, COUT) bf16 -- conv2 weights, left in HBM (pl.ANY)
       out_ref:    (HW, COUT) f32
       scratch:    xslab (HW, KW*CIN) bf16, yslab (HW, KH*CMID) bf16,
                   ypad ((H+2*PAD)*W, CMID) bf16, w2_vmem (KH*CMID, COUT) bf16,
                   w2_sem: DMA semaphore
    """
    # ---- kick off the w2 HBM->VMEM copy; it overlaps conv1 + batchnorm -----
    w2_copy = pltpu.make_async_copy(w2_hbm_ref, w2_vmem_ref, w2_sem)
    w2_copy.start()

    # ---- build the conv1 K-concat slab --------------------------------------
    # xslab[r, kw*CIN:(kw+1)*CIN] = x[h, w+kw-PAD, :]   (zero when w+kw-PAD is
    # outside [0, W)),  with r = h*W + w.  The shifted rows come straight from
    # xpad; rows that would wrap across an H-row boundary are masked to zero.
    r_idx = jax.lax.broadcasted_iota(jnp.int32, (HW, CIN), 0)
    # w = r mod W via multiply-shift (exact for this range; avoids vector int div)
    h_idx = (r_idx * 10923) >> 17            # == r // 12 for 0 <= r < HW
    w_idx = r_idx - h_idx * W                # == r % 12
    for kw in range(KW):
        s = kw - PAD
        src = xpad_ref[pl.ds(kw, HW), :]     # = x_flat[r + s, :] (zero halos)
        if s == 0:
            xslab_ref[:, pl.ds(kw * CIN, CIN)] = src
        else:
            valid = jnp.logical_and(w_idx + s >= 0, w_idx + s < W)
            xslab_ref[:, pl.ds(kw * CIN, CIN)] = jnp.where(
                valid, src, jnp.zeros_like(src))

    # ---- conv1: one (HW, KW*CIN) @ (KW*CIN, CMID) MXU matmul, f32 accum ----
    acc1 = jnp.dot(xslab_ref[...], w1_ref[...],
                   preferred_element_type=jnp.float32)        # (HW, CMID) f32

    # ---- BatchNorm2d (training-mode batch stats, biased var) + ReLU --------
    # one pass over acc1: sum and sum-of-squares
    s1 = jnp.sum(acc1, axis=0, keepdims=True)                 # (1, CMID)
    s2 = jnp.sum(acc1 * acc1, axis=0, keepdims=True)
    mean = s1 * (1.0 / HW)
    var = jnp.maximum(s2 * (1.0 / HW) - mean * mean, 0.0)     # biased variance
    scale = gamma_ref[...] * jax.lax.rsqrt(var + EPS)
    shift = beta_ref[...] - mean * scale
    y = jnp.maximum(acc1 * scale + shift, 0.0).astype(jnp.bfloat16)

    # ---- zero-pad along H (halo rows only) and build the conv2 slab --------
    ypad_ref[pl.ds(0, PAD * W), :] = jnp.zeros((PAD * W, CMID), jnp.bfloat16)
    ypad_ref[pl.ds(PAD * W + HW, PAD * W), :] = jnp.zeros((PAD * W, CMID),
                                                          jnp.bfloat16)
    ypad_ref[pl.ds(PAD * W, HW), :] = y
    # yslab[r, kh*CMID:(kh+1)*CMID] = y[h+kh-PAD, w, :]  (zero outside [0, H))
    for kh in range(KH):
        yslab_ref[:, pl.ds(kh * CMID, CMID)] = ypad_ref[pl.ds(kh * W, HW), :]

    # ---- conv2: one (HW, KH*CMID) @ (KH*CMID, COUT) MXU matmul -------------
    w2_copy.wait()
    out_ref[...] = jnp.dot(yslab_ref[...], w2_vmem_ref[...],
                           preferred_element_type=jnp.float32)


def fused_forward(x_nchw, w1_torch, w2_torch, gamma, beta):
    """x_nchw:   (1, 128, 12, 12) f32
       w1_torch: (128, 128, 1, 7)   (OIHW, PyTorch conv weight layout)
       w2_torch: (192, 128, 7, 1)
       returns   (1, 192, 12, 12) f32
    """
    # glue: NCHW -> flattened NHWC rows (HW, CIN); PAD zero rows on each end
    # so the in-kernel shifted-window loads stay in bounds; cast to bf16.
    x_flat = jnp.transpose(x_nchw, (0, 2, 3, 1)).reshape(HW, CIN)
    x_pad = jnp.pad(x_flat, ((PAD, PAD), (0, 0))).astype(jnp.bfloat16)

    # glue: conv weights -> tap-major K-concat matmul matrices, bf16.
    w1_mat = jnp.transpose(w1_torch[:, :, 0, :], (2, 1, 0)) \
                .reshape(KW * CIN, CMID).astype(jnp.bfloat16)
    w2_mat = jnp.transpose(w2_torch[:, :, :, 0], (2, 1, 0)) \
                .reshape(KH * CMID, COUT).astype(jnp.bfloat16)

    out_flat = pl.pallas_call(
        _fused_kernel,
        out_shape=jax.ShapeDtypeStruct((HW, COUT), jnp.float32),
        in_specs=[
            pl.BlockSpec(memory_space=pltpu.MemorySpace.VMEM),    # x_pad
            pl.BlockSpec(memory_space=pltpu.MemorySpace.VMEM),    # w1
            pl.BlockSpec(memory_space=pltpu.MemorySpace.VMEM),    # gamma
            pl.BlockSpec(memory_space=pltpu.MemorySpace.VMEM),    # beta
            pl.BlockSpec(memory_space=pl.ANY),                    # w2 (manual DMA)
        ],
        out_specs=pl.BlockSpec(memory_space=pltpu.MemorySpace.VMEM),
        scratch_shapes=[
            pltpu.VMEM((HW, KW * CIN), jnp.bfloat16),             # xslab
            pltpu.VMEM((HW, KH * CMID), jnp.bfloat16),            # yslab
            pltpu.VMEM(((H + 2 * PAD) * W, CMID), jnp.bfloat16),  # ypad
            pltpu.VMEM((KH * CMID, COUT), jnp.bfloat16),          # w2 VMEM copy
            pltpu.SemaphoreType.DMA(()),                          # w2 DMA sem
        ],
    )(x_pad, w1_mat, gamma.reshape(1, CMID).astype(jnp.float32),
      beta.reshape(1, CMID).astype(jnp.float32), w2_mat)

    # glue: (HW, COUT) -> NCHW
    return jnp.transpose(out_flat.reshape(H, W, COUT), (2, 0, 1))[None]


def reference_forward(x_nchw, w1_torch, w2_torch, gamma, beta):
    """Pure-JAX f32 reference with identical semantics (sanity check)."""
    y = jax.lax.conv_general_dilated(
        x_nchw, w1_torch, (1, 1), ((0, 0), (PAD, PAD)),
        dimension_numbers=("NCHW", "OIHW", "NCHW"))
    mean = jnp.mean(y, axis=(0, 2, 3), keepdims=True)
    var = jnp.mean((y - mean) ** 2, axis=(0, 2, 3), keepdims=True)
    y = (y - mean) * jax.lax.rsqrt(var + EPS) * gamma.reshape(1, -1, 1, 1) \
        + beta.reshape(1, -1, 1, 1)
    y = jnp.maximum(y, 0.0)
    out = jax.lax.conv_general_dilated(
        y, w2_torch, (1, 1), ((PAD, PAD), (0, 0)),
        dimension_numbers=("NCHW", "OIHW", "NCHW"))
    return out


if __name__ == "__main__":
    key = jax.random.PRNGKey(0)
    k_x, k_w1, k_w2, k_g, k_b = jax.random.split(key, 5)

    # deterministic synthetic parameters (shapes from the module __init__)
    x = jax.random.normal(k_x, (N, CIN, H, W), jnp.float32)
    w1 = jax.random.normal(k_w1, (CMID, CIN, 1, KW), jnp.float32) * 0.05
    w2 = jax.random.normal(k_w2, (COUT, CMID, KH, 1), jnp.float32) * 0.05
    gamma = 1.0 + 0.1 * jax.random.normal(k_g, (CMID,), jnp.float32)
    beta = 0.1 * jax.random.normal(k_b, (CMID,), jnp.float32)

    out = jax.jit(fused_forward)(x, w1, w2, gamma, beta)
    out = jax.block_until_ready(out)
    assert out.shape == (N, COUT, H, W), out.shape

    ref = jax.block_until_ready(reference_forward(x, w1, w2, gamma, beta))
    err = jnp.max(jnp.abs(out - ref)) / (jnp.max(jnp.abs(ref)) + 1e-6)
    assert err < 3e-2, f"relative max error too large: {err}"

    print("KERNEL_OK")
</pallas_src>

<mosaic_0001>
module attributes {stable_mosaic.version = 11 : i64} {
  func.func @_fused_kernel(%arg0: memref<150x128xbf16, #tpu.memory_space<vmem>>, %arg1: memref<896x128xbf16, #tpu.memory_space<vmem>>, %arg2: memref<1x128xf32, #tpu.memory_space<vmem>>, %arg3: memref<1x128xf32, #tpu.memory_space<vmem>>, %arg4: memref<896x192xbf16, #tpu.memory_space<any>>, %arg5: memref<144x192xf32, #tpu.memory_space<vmem>>, %arg6: memref<144x896xbf16, #tpu.memory_space<vmem>>, %arg7: memref<144x896xbf16, #tpu.memory_space<vmem>>, %arg8: memref<216x128xbf16, #tpu.memory_space<vmem>>, %arg9: memref<896x192xbf16, #tpu.memory_space<vmem>>, %arg10: memref<!tpu.dma_semaphore, #tpu.memory_space<semaphore_mem>>) attributes {dimension_semantics = [], scalar_prefetch = 0 : i64, scratch_operands = 5 : i64, tpu.core_type = #tpu.core_type<tc>} {
    tpu.enqueue_dma source(%arg4 : memref<896x192xbf16, #tpu.memory_space<any>>) target(%arg9 : memref<896x192xbf16, #tpu.memory_space<vmem>>) target_semaphore(%arg10 : memref<!tpu.dma_semaphore, #tpu.memory_space<semaphore_mem>>)
    %0 = tpu.iota {dimensions = array<i32: 0>} : vector<144x128xi32>
    %c10923_i32 = arith.constant 10923 : i32
    %1 = vector.broadcast %c10923_i32 : i32 to vector<144x128xi32>
    %2 = arith.muli %0, %1 : vector<144x128xi32>
    %c17_i32 = arith.constant 17 : i32
    %3 = vector.broadcast %c17_i32 : i32 to vector<144x128xi32>
    %4 = arith.shrsi %2, %3 : vector<144x128xi32>
    %c12_i32 = arith.constant 12 : i32
    %5 = vector.broadcast %c12_i32 : i32 to vector<144x128xi32>
    %6 = arith.muli %4, %5 : vector<144x128xi32>
    %7 = arith.subi %0, %6 : vector<144x128xi32>
    %c0 = arith.constant 0 : index
    %c0_0 = arith.constant 0 : index
    %8 = vector.load %arg0[%c0, %c0_0] : memref<150x128xbf16, #tpu.memory_space<vmem>>, vector<144x128xbf16>
    %c-3_i32 = arith.constant -3 : i32
    %9 = vector.broadcast %c-3_i32 : i32 to vector<144x128xi32>
    %10 = arith.addi %7, %9 : vector<144x128xi32>
    %c0_i32 = arith.constant 0 : i32
    %11 = vector.broadcast %c0_i32 : i32 to vector<144x128xi32>
    %12 = arith.cmpi sge, %10, %11 : vector<144x128xi32>
    %c-3_i32_1 = arith.constant -3 : i32
    %13 = vector.broadcast %c-3_i32_1 : i32 to vector<144x128xi32>
    %14 = arith.addi %7, %13 : vector<144x128xi32>
    %c12_i32_2 = arith.constant 12 : i32
    %15 = vector.broadcast %c12_i32_2 : i32 to vector<144x128xi32>
    %16 = arith.cmpi slt, %14, %15 : vector<144x128xi32>
    %17 = arith.andi %12, %16 : vector<144x128xi1>
    %cst = arith.constant 0.000000e+00 : bf16
    %18 = vector.broadcast %cst : bf16 to vector<144x128xbf16>
    %19 = arith.select %17, %8, %18 : vector<144x128xi1>, vector<144x128xbf16>
    %c0_3 = arith.constant 0 : index
    %c0_4 = arith.constant 0 : index
    %20 = vector.load %arg6[%c0_3, %c0_4] : memref<144x896xbf16, #tpu.memory_space<vmem>>, vector<144x128xbf16>
    tpu.vector_store %arg6[%c0_3, %c0_4], %19 {strides = array<i32>} : memref<144x896xbf16, #tpu.memory_space<vmem>>, vector<144x128xbf16>,
    %c1 = arith.constant 1 : index
    %c0_5 = arith.constant 0 : index
    %21 = vector.load %arg0[%c1, %c0_5] : memref<150x128xbf16, #tpu.memory_space<vmem>>, vector<144x128xbf16>
    %c-2_i32 = arith.constant -2 : i32
    %22 = vector.broadcast %c-2_i32 : i32 to vector<144x128xi32>
    %23 = arith.addi %7, %22 : vector<144x128xi32>
    %c0_i32_6 = arith.constant 0 : i32
    %24 = vector.broadcast %c0_i32_6 : i32 to vector<144x128xi32>
    %25 = arith.cmpi sge, %23, %24 : vector<144x128xi32>
    %c-2_i32_7 = arith.constant -2 : i32
    %26 = vector.broadcast %c-2_i32_7 : i32 to vector<144x128xi32>
    %27 = arith.addi %7, %26 : vector<144x128xi32>
    %c12_i32_8 = arith.constant 12 : i32
    %28 = vector.broadcast %c12_i32_8 : i32 to vector<144x128xi32>
    %29 = arith.cmpi slt, %27, %28 : vector<144x128xi32>
    %30 = arith.andi %25, %29 : vector<144x128xi1>
    %cst_9 = arith.constant 0.000000e+00 : bf16
    %31 = vector.broadcast %cst_9 : bf16 to vector<144x128xbf16>
    %32 = arith.select %30, %21, %31 : vector<144x128xi1>, vector<144x128xbf16>
    %c0_10 = arith.constant 0 : index
    %c128 = arith.constant 128 : index
    %33 = vector.load %arg6[%c0_10, %c128] : memref<144x896xbf16, #tpu.memory_space<vmem>>, vector<144x128xbf16>
    tpu.vector_store %arg6[%c0_10, %c128], %32 {strides = array<i32>} : memref<144x896xbf16, #tpu.memory_space<vmem>>, vector<144x128xbf16>,
    %c2 = arith.constant 2 : index
    %c0_11 = arith.constant 0 : index
    %34 = vector.load %arg0[%c2, %c0_11] : memref<150x128xbf16, #tpu.memory_space<vmem>>, vector<144x128xbf16>
    %c-1_i32 = arith.constant -1 : i32
    %35 = vector.broadcast %c-1_i32 : i32 to vector<144x128xi32>
    %36 = arith.addi %7, %35 : vector<144x128xi32>
    %c0_i32_12 = arith.constant 0 : i32
    %37 = vector.broadcast %c0_i32_12 : i32 to vector<144x128xi32>
    %38 = arith.cmpi sge, %36, %37 : vector<144x128xi32>
    %c-1_i32_13 = arith.constant -1 : i32
    %39 = vector.broadcast %c-1_i32_13 : i32 to vector<144x128xi32>
    %40 = arith.addi %7, %39 : vector<144x128xi32>
    %c12_i32_14 = arith.constant 12 : i32
    %41 = vector.broadcast %c12_i32_14 : i32 to vector<144x128xi32>
    %42 = arith.cmpi slt, %40, %41 : vector<144x128xi32>
    %43 = arith.andi %38, %42 : vector<144x128xi1>
    %cst_15 = arith.constant 0.000000e+00 : bf16
    %44 = vector.broadcast %cst_15 : bf16 to vector<144x128xbf16>
    %45 = arith.select %43, %34, %44 : vector<144x128xi1>, vector<144x128xbf16>
    %c0_16 = arith.constant 0 : index
    %c256 = arith.constant 256 : index
    %46 = vector.load %arg6[%c0_16, %c256] : memref<144x896xbf16, #tpu.memory_space<vmem>>, vector<144x128xbf16>
    tpu.vector_store %arg6[%c0_16, %c256], %45 {strides = array<i32>} : memref<144x896xbf16, #tpu.memory_space<vmem>>, vector<144x128xbf16>,
    %c3 = arith.constant 3 : index
    %c0_17 = arith.constant 0 : index
    %47 = vector.load %arg0[%c3, %c0_17] : memref<150x128xbf16, #tpu.memory_space<vmem>>, vector<144x128xbf16>
    %c0_18 = arith.constant 0 : index
    %c384 = arith.constant 384 : index
    %48 = vector.load %arg6[%c0_18, %c384] : memref<144x896xbf16, #tpu.memory_space<vmem>>, vector<144x128xbf16>
    tpu.vector_store %arg6[%c0_18, %c384], %47 {strides = array<i32>} : memref<144x896xbf16, #tpu.memory_space<vmem>>, vector<144x128xbf16>,
    %c4 = arith.constant 4 : index
    %c0_19 = arith.constant 0 : index
    %49 = vector.load %arg0[%c4, %c0_19] : memref<150x128xbf16, #tpu.memory_space<vmem>>, vector<144x128xbf16>
    %c1_i32 = arith.constant 1 : i32
    %50 = vector.broadcast %c1_i32 : i32 to vector<144x128xi32>
    %51 = arith.addi %7, %50 : vector<144x128xi32>
    %c0_i32_20 = arith.constant 0 : i32
    %52 = vector.broadcast %c0_i32_20 : i32 to vector<144x128xi32>
    %53 = arith.cmpi sge, %51, %52 : vector<144x128xi32>
    %c1_i32_21 = arith.constant 1 : i32
    %54 = vector.broadcast %c1_i32_21 : i32 to vector<144x128xi32>
    %55 = arith.addi %7, %54 : vector<144x128xi32>
    %c12_i32_22 = arith.constant 12 : i32
    %56 = vector.broadcast %c12_i32_22 : i32 to vector<144x128xi32>
    %57 = arith.cmpi slt, %55, %56 : vector<144x128xi32>
    %58 = arith.andi %53, %57 : vector<144x128xi1>
    %cst_23 = arith.constant 0.000000e+00 : bf16
    %59 = vector.broadcast %cst_23 : bf16 to vector<144x128xbf16>
    %60 = arith.select %58, %49, %59 : vector<144x128xi1>, vector<144x128xbf16>
    %c0_24 = arith.constant 0 : index
    %c512 = arith.constant 512 : index
    %61 = vector.load %arg6[%c0_24, %c512] : memref<144x896xbf16, #tpu.memory_space<vmem>>, vector<144x128xbf16>
    tpu.vector_store %arg6[%c0_24, %c512], %60 {strides = array<i32>} : memref<144x896xbf16, #tpu.memory_space<vmem>>, vector<144x128xbf16>,
    %c5 = arith.constant 5 : index
    %c0_25 = arith.constant 0 : index
    %62 = vector.load %arg0[%c5, %c0_25] : memref<150x128xbf16, #tpu.memory_space<vmem>>, vector<144x128xbf16>
    %c2_i32 = arith.constant 2 : i32
    %63 = vector.broadcast %c2_i32 : i32 to vector<144x128xi32>
    %64 = arith.addi %7, %63 : vector<144x128xi32>
    %c0_i32_26 = arith.constant 0 : i32
    %65 = vector.broadcast %c0_i32_26 : i32 to vector<144x128xi32>
    %66 = arith.cmpi sge, %64, %65 : vector<144x128xi32>
    %c2_i32_27 = arith.constant 2 : i32
    %67 = vector.broadcast %c2_i32_27 : i32 to vector<144x128xi32>
    %68 = arith.addi %7, %67 : vector<144x128xi32>
    %c12_i32_28 = arith.constant 12 : i32
    %69 = vector.broadcast %c12_i32_28 : i32 to vector<144x128xi32>
    %70 = arith.cmpi slt, %68, %69 : vector<144x128xi32>
    %71 = arith.andi %66, %70 : vector<144x128xi1>
    %cst_29 = arith.constant 0.000000e+00 : bf16
    %72 = vector.broadcast %cst_29 : bf16 to vector<144x128xbf16>
    %73 = arith.select %71, %62, %72 : vector<144x128xi1>, vector<144x128xbf16>
    %c0_30 = arith.constant 0 : index
    %c640 = arith.constant 640 : index
    %74 = vector.load %arg6[%c0_30, %c640] : memref<144x896xbf16, #tpu.memory_space<vmem>>, vector<144x128xbf16>
    tpu.vector_store %arg6[%c0_30, %c640], %73 {strides = array<i32>} : memref<144x896xbf16, #tpu.memory_space<vmem>>, vector<144x128xbf16>,
    %c6 = arith.constant 6 : index
    %c0_31 = arith.constant 0 : index
    %75 = vector.load %arg0[%c6, %c0_31] : memref<150x128xbf16, #tpu.memory_space<vmem>>, vector<144x128xbf16>
    %c3_i32 = arith.constant 3 : i32
    %76 = vector.broadcast %c3_i32 : i32 to vector<144x128xi32>
    %77 = arith.addi %7, %76 : vector<144x128xi32>
    %c0_i32_32 = arith.constant 0 : i32
    %78 = vector.broadcast %c0_i32_32 : i32 to vector<144x128xi32>
    %79 = arith.cmpi sge, %77, %78 : vector<144x128xi32>
    %c3_i32_33 = arith.constant 3 : i32
    %80 = vector.broadcast %c3_i32_33 : i32 to vector<144x128xi32>
    %81 = arith.addi %7, %80 : vector<144x128xi32>
    %c12_i32_34 = arith.constant 12 : i32
    %82 = vector.broadcast %c12_i32_34 : i32 to vector<144x128xi32>
    %83 = arith.cmpi slt, %81, %82 : vector<144x128xi32>
    %84 = arith.andi %79, %83 : vector<144x128xi1>
    %cst_35 = arith.constant 0.000000e+00 : bf16
    %85 = vector.broadcast %cst_35 : bf16 to vector<144x128xbf16>
    %86 = arith.select %84, %75, %85 : vector<144x128xi1>, vector<144x128xbf16>
    %c0_36 = arith.constant 0 : index
    %c768 = arith.constant 768 : index
    %87 = vector.load %arg6[%c0_36, %c768] : memref<144x896xbf16, #tpu.memory_space<vmem>>, vector<144x128xbf16>
    tpu.vector_store %arg6[%c0_36, %c768], %86 {strides = array<i32>} : memref<144x896xbf16, #tpu.memory_space<vmem>>, vector<144x128xbf16>,
    %c0_37 = arith.constant 0 : index
    %c0_38 = arith.constant 0 : index
    %88 = vector.load %arg6[%c0_37, %c0_38] : memref<144x896xbf16, #tpu.memory_space<vmem>>, vector<144x896xbf16>
    %c0_39 = arith.constant 0 : index
    %c0_40 = arith.constant 0 : index
    %89 = vector.load %arg1[%c0_39, %c0_40] : memref<896x128xbf16, #tpu.memory_space<vmem>>, vector<896x128xbf16>
    %cst_41 = arith.constant dense<0.000000e+00> : vector<144x128xf32>
    %90 = tpu.matmul %88, %89, %cst_41 {dimension_numbers = #tpu.dot_dimension_numbers<[1], [0], [0], [1], [0, 0, 1, 1], [], []>} : vector<144x896xbf16>, vector<896x128xbf16>, vector<144x128xf32> -> vector<144x128xf32>
    %cst_42 = arith.constant dense<0.000000e+00> : vector<128xf32>
    %91 = vector.multi_reduction <add>, %90, %cst_42 [0] : vector<144x128xf32> to vector<128xf32>
    %92 = vector.shape_cast %91 : vector<128xf32> to vector<1x128xf32>
    %93 = arith.mulf %90, %90 : vector<144x128xf32>
    %cst_43 = arith.constant dense<0.000000e+00> : vector<128xf32>
    %94 = vector.multi_reduction <add>, %93, %cst_43 [0] : vector<144x128xf32> to vector<128xf32>
    %95 = vector.shape_cast %94 : vector<128xf32> to vector<1x128xf32>
    %cst_44 = arith.constant 0.0069444445 : f32
    %96 = vector.broadcast %cst_44 : f32 to vector<1x128xf32>
    %97 = arith.mulf %92, %96 : vector<1x128xf32>
    %cst_45 = arith.constant 0.0069444445 : f32
    %98 = vector.broadcast %cst_45 : f32 to vector<1x128xf32>
    %99 = arith.mulf %95, %98 : vector<1x128xf32>
    %100 = arith.mulf %97, %97 : vector<1x128xf32>
    %101 = arith.subf %99, %100 : vector<1x128xf32>
    %cst_46 = arith.constant 0.000000e+00 : f32
    %102 = vector.broadcast %cst_46 : f32 to vector<1x128xf32>
    %103 = arith.maximumf %101, %102 : vector<1x128xf32>
    %c0_47 = arith.constant 0 : index
    %c0_48 = arith.constant 0 : index
    %104 = vector.load %arg2[%c0_47, %c0_48] : memref<1x128xf32, #tpu.memory_space<vmem>>, vector<1x128xf32>
    %cst_49 = arith.constant 1.000000e-03 : f32
    %105 = vector.broadcast %cst_49 : f32 to vector<1x128xf32>
    %106 = arith.addf %103, %105 : vector<1x128xf32>
    %107 = math.rsqrt %106 : vector<1x128xf32>
    %108 = arith.mulf %104, %107 : vector<1x128xf32>
    %c0_50 = arith.constant 0 : index
    %c0_51 = arith.constant 0 : index
    %109 = vector.load %arg3[%c0_50, %c0_51] : memref<1x128xf32, #tpu.memory_space<vmem>>, vector<1x128xf32>
    %110 = arith.mulf %97, %108 : vector<1x128xf32>
    %111 = arith.subf %109, %110 : vector<1x128xf32>
    %112 = vector.broadcast %108 : vector<1x128xf32> to vector<144x128xf32>
    %113 = arith.mulf %90, %112 : vector<144x128xf32>
    %114 = vector.broadcast %111 : vector<1x128xf32> to vector<144x128xf32>
    %115 = arith.addf %113, %114 : vector<144x128xf32>
    %cst_52 = arith.constant 0.000000e+00 : f32
    %116 = vector.broadcast %cst_52 : f32 to vector<144x128xf32>
    %117 = arith.maximumf %115, %116 : vector<144x128xf32>
    %118 = arith.truncf %117 : vector<144x128xf32> to vector<144x128xbf16>
    %cst_53 = arith.constant 0.000000e+00 : bf16
    %119 = vector.broadcast %cst_53 : bf16 to vector<36x128xbf16>
    %c0_54 = arith.constant 0 : index
    %c0_55 = arith.constant 0 : index
    %120 = vector.load %arg8[%c0_54, %c0_55] : memref<216x128xbf16, #tpu.memory_space<vmem>>, vector<36x128xbf16>
    tpu.vector_store %arg8[%c0_54, %c0_55], %119 {strides = array<i32>} : memref<216x128xbf16, #tpu.memory_space<vmem>>, vector<36x128xbf16>,
    %cst_56 = arith.constant 0.000000e+00 : bf16
    %121 = vector.broadcast %cst_56 : bf16 to vector<36x128xbf16>
    %c180 = arith.constant 180 : index
    %c0_57 = arith.constant 0 : index
    %122 = vector.load %arg8[%c180, %c0_57] : memref<216x128xbf16, #tpu.memory_space<vmem>>, vector<36x128xbf16>
    tpu.vector_store %arg8[%c180, %c0_57], %121 {strides = array<i32>} : memref<216x128xbf16, #tpu.memory_space<vmem>>, vector<36x128xbf16>,
    %c36 = arith.constant 36 : index
    %c0_58 = arith.constant 0 : index
    %123 = vector.load %arg8[%c36, %c0_58] : memref<216x128xbf16, #tpu.memory_space<vmem>>, vector<144x128xbf16>
    tpu.vector_store %arg8[%c36, %c0_58], %118 {strides = array<i32>} : memref<216x128xbf16, #tpu.memory_space<vmem>>, vector<144x128xbf16>,
    %c0_59 = arith.constant 0 : index
    %c0_60 = arith.constant 0 : index
    %124 = vector.load %arg8[%c0_59, %c0_60] : memref<216x128xbf16, #tpu.memory_space<vmem>>, vector<144x128xbf16>
    %c0_61 = arith.constant 0 : index
    %c0_62 = arith.constant 0 : index
    %125 = vector.load %arg7[%c0_61, %c0_62] : memref<144x896xbf16, #tpu.memory_space<vmem>>, vector<144x128xbf16>
    tpu.vector_store %arg7[%c0_61, %c0_62], %124 {strides = array<i32>} : memref<144x896xbf16, #tpu.memory_space<vmem>>, vector<144x128xbf16>,
    %c12 = arith.constant 12 : index
    %c0_63 = arith.constant 0 : index
    %126 = vector.load %arg8[%c12, %c0_63] : memref<216x128xbf16, #tpu.memory_space<vmem>>, vector<144x128xbf16>
    %c0_64 = arith.constant 0 : index
    %c128_65 = arith.constant 128 : index
    %127 = vector.load %arg7[%c0_64, %c128_65] : memref<144x896xbf16, #tpu.memory_space<vmem>>, vector<144x128xbf16>
    tpu.vector_store %arg7[%c0_64, %c128_65], %126 {strides = array<i32>} : memref<144x896xbf16, #tpu.memory_space<vmem>>, vector<144x128xbf16>,
    %c24 = arith.constant 24 : index
    %c0_66 = arith.constant 0 : index
    %128 = vector.load %arg8[%c24, %c0_66] : memref<216x128xbf16, #tpu.memory_space<vmem>>, vector<144x128xbf16>
    %c0_67 = arith.constant 0 : index
    %c256_68 = arith.constant 256 : index
    %129 = vector.load %arg7[%c0_67, %c256_68] : memref<144x896xbf16, #tpu.memory_space<vmem>>, vector<144x128xbf16>
    tpu.vector_store %arg7[%c0_67, %c256_68], %128 {strides = array<i32>} : memref<144x896xbf16, #tpu.memory_space<vmem>>, vector<144x128xbf16>,
    %c36_69 = arith.constant 36 : index
    %c0_70 = arith.constant 0 : index
    %130 = vector.load %arg8[%c36_69, %c0_70] : memref<216x128xbf16, #tpu.memory_space<vmem>>, vector<144x128xbf16>
    %c0_71 = arith.constant 0 : index
    %c384_72 = arith.constant 384 : index
    %131 = vector.load %arg7[%c0_71, %c384_72] : memref<144x896xbf16, #tpu.memory_space<vmem>>, vector<144x128xbf16>
    tpu.vector_store %arg7[%c0_71, %c384_72], %130 {strides = array<i32>} : memref<144x896xbf16, #tpu.memory_space<vmem>>, vector<144x128xbf16>,
    %c48 = arith.constant 48 : index
    %c0_73 = arith.constant 0 : index
    %132 = vector.load %arg8[%c48, %c0_73] : memref<216x128xbf16, #tpu.memory_space<vmem>>, vector<144x128xbf16>
    %c0_74 = arith.constant 0 : index
    %c512_75 = arith.constant 512 : index
    %133 = vector.load %arg7[%c0_74, %c512_75] : memref<144x896xbf16, #tpu.memory_space<vmem>>, vector<144x128xbf16>
    tpu.vector_store %arg7[%c0_74, %c512_75], %132 {strides = array<i32>} : memref<144x896xbf16, #tpu.memory_space<vmem>>, vector<144x128xbf16>,
    %c60 = arith.constant 60 : index
    %c0_76 = arith.constant 0 : index
    %134 = vector.load %arg8[%c60, %c0_76] : memref<216x128xbf16, #tpu.memory_space<vmem>>, vector<144x128xbf16>
    %c0_77 = arith.constant 0 : index
    %c640_78 = arith.constant 640 : index
    %135 = vector.load %arg7[%c0_77, %c640_78] : memref<144x896xbf16, #tpu.memory_space<vmem>>, vector<144x128xbf16>
    tpu.vector_store %arg7[%c0_77, %c640_78], %134 {strides = array<i32>} : memref<144x896xbf16, #tpu.memory_space<vmem>>, vector<144x128xbf16>,
    %c72 = arith.constant 72 : index
    %c0_79 = arith.constant 0 : index
    %136 = vector.load %arg8[%c72, %c0_79] : memref<216x128xbf16, #tpu.memory_space<vmem>>, vector<144x128xbf16>
    %c0_80 = arith.constant 0 : index
    %c768_81 = arith.constant 768 : index
    %137 = vector.load %arg7[%c0_80, %c768_81] : memref<144x896xbf16, #tpu.memory_space<vmem>>, vector<144x128xbf16>
    tpu.vector_store %arg7[%c0_80, %c768_81], %136 {strides = array<i32>} : memref<144x896xbf16, #tpu.memory_space<vmem>>, vector<144x128xbf16>,
    tpu.wait_dma2 semaphore(%arg10 : memref<!tpu.dma_semaphore, #tpu.memory_space<semaphore_mem>>) src(%arg4 : memref<896x192xbf16, #tpu.memory_space<any>>) dst(%arg9 : memref<896x192xbf16, #tpu.memory_space<vmem>>)
    %c0_82 = arith.constant 0 : index
    %c0_83 = arith.constant 0 : index
    %138 = vector.load %arg7[%c0_82, %c0_83] : memref<144x896xbf16, #tpu.memory_space<vmem>>, vector<144x896xbf16>
    %c0_84 = arith.constant 0 : index
    %c0_85 = arith.constant 0 : index
    %139 = vector.load %arg9[%c0_84, %c0_85] : memref<896x192xbf16, #tpu.memory_space<vmem>>, vector<896x192xbf16>
    %cst_86 = arith.constant dense<0.000000e+00> : vector<144x192xf32>
    %140 = tpu.matmul %138, %139, %cst_86 {dimension_numbers = #tpu.dot_dimension_numbers<[1], [0], [0], [1], [0, 0, 1, 1], [], []>} : vector<144x896xbf16>, vector<896x192xbf16>, vector<144x192xf32> -> vector<144x192xf32>
    %c0_87 = arith.constant 0 : index
    %c0_88 = arith.constant 0 : index
    %141 = vector.load %arg5[%c0_87, %c0_88] : memref<144x192xf32, #tpu.memory_space<vmem>>, vector<144x192xf32>
    tpu.vector_store %arg5[%c0_87, %c0_88], %140 {strides = array<i32>} : memref<144x192xf32, #tpu.memory_space<vmem>>, vector<144x192xf32>,
    return
  }
}

</mosaic_0001>

<llo_original>
// kernel: fused_forward.1
$region0: #{fused_forward.1}
  #allocation0 [shape = 'u32[]', space=smem, size = 0x4, offset = 0x4, fixed_abs, tag = 'smem constant byte address 0x4 - core index']
  #allocation1 [shape = 'u32[144,128]{1,0:T(1,128)}', space=vmem, size = 0x12000, scoped, tag = 'internal scratch']
  #allocation2 [shape = 'bf16[144,896]{1,0:T(8,128)(2,1)}', space=vmem, size = 0x3f000, scoped, tag = 'scratch operand']
  #allocation3 [shape = 'bf16[144,896]{1,0:T(8,128)(2,1)}', space=vmem, size = 0x3f000, scoped, tag = 'scratch operand']
  #allocation4 [shape = 'bf16[216,128]{1,0:T(8,128)(2,1)}', space=vmem, size = 0xd800, scoped, tag = 'scratch operand']
  #allocation5 [shape = 'bf16[896,192]{1,0:T(8,128)(2,1)}', space=vmem, size = 0x70000, scoped, tag = 'scratch operand']
  #allocation6 [shape = 's32[1]{0}', space=sflag, size = 0x4, scoped, tag = 'scratch operand']
  #allocation7 [shape = 's32[]', space=sflag, size = 0x4, offset = 0, fixed_abs, tag = 'sflag constant byte address 0x0 - dummy sync flag']
  %s0 = inlined_call_operand.vmem [shape: bf16[150,128], index: 0, kind: input, shape index: {}]
  %s1 = inlined_call_operand.vmem [shape: bf16[896,128], index: 1, kind: input, shape index: {}]
  %s2 = inlined_call_operand.vmem [shape: f32[1,128], index: 2, kind: input, shape index: {}]
  %s3 = inlined_call_operand.vmem [shape: f32[1,128], index: 3, kind: input, shape index: {}]
  %s4 = inlined_call_operand.vmem [shape: bf16[896,192], index: 4, kind: input, shape index: {}]
  %s5 = inlined_call_operand.vmem [shape: f32[144,192], index: 5, kind: output, shape index: {}]
  %s6 = sld [smem:[#allocation0]]
  $region60: #{fused_forward.1} parent=0
    _
  %s8 = ssub.s32 1, %s6
  %s9 = scalar_select 0, %s8, %s6
  // Predicated region
  $region2: #{fused_forward.1} parent=0 // pred_check
    _
  $region3: #{fused_forward.1} parent=0 // pred_check_branch
    %11 = sbr.rel (0) target = $region5
  $region4: #{fused_forward.1} parent=0 // pred_region
    _
  $region5: #{fused_forward.1} parent=0 // pred_fallthru
    _
  // Predicated region
  $region6: #{fused_forward.1} parent=0 // pred_check
    _
  $region7: #{fused_forward.1} parent=0 // pred_check_branch
    %13 = sbr.rel (0) target = $region9
  $region8: #{fused_forward.1} parent=0 // pred_region
    _
  $region9: #{fused_forward.1} parent=0 // pred_fallthru
    _
  // Predicated region
  $region10: #{fused_forward.1} parent=0 // pred_check
    _
  $region11: #{fused_forward.1} parent=0 // pred_check_branch
    %15 = sbr.rel (0) target = $region13
  $region12: #{fused_forward.1} parent=0 // pred_region
    _
  $region13: #{fused_forward.1} parent=0 // pred_fallthru
    _
  // Predicated region
  $region14: #{fused_forward.1} parent=0 // pred_check
    _
  $region15: #{fused_forward.1} parent=0 // pred_check_branch
    %17 = sbr.rel (0) target = $region17
  $region16: #{fused_forward.1} parent=0 // pred_region
    _
  $region17: #{fused_forward.1} parent=0 // pred_fallthru
    _
  %p22 = scmp.lt.u32.totalorder 896, 8
  %p23 = pneg %p22
  // Predicated region
  $region18: #{fused_forward.1} parent=0 // pred_check
    _
  $region19: #{fused_forward.1} parent=0 // pred_check_branch
    %25 = sbr.rel (%p22) target = $region21
  $region20: #{fused_forward.1} parent=0 // pred_region
    %s41 = sand.u32 896, 7
    %p42 = scmp.eq.s32.totalorder %s41, 0
    // Predicated region
    $region33: #{fused_forward.1} parent=20 // pred_check
      %p43 = pneg %p42
    $region34: #{fused_forward.1} parent=20 // pred_check_branch
      %45 = sbr.rel (%p43) target = $region36
    $region35: #{fused_forward.1} parent=20 // pred_region
      loop: start=0, step=1, limit=1
      $region37: #{fused_forward.1} parent=35 // loop_pre_header
        _
      $region38: #{fused_forward.1} parent=35 // loop_header
        %s47 = sphi 0, %s51
        %p48 = scmp.ge.s32.totalorder %s47, 1
        %s52 = sphi %s4, %s4
        %s53 = sphi [#allocation5], [#allocation5]
      $region39: #{fused_forward.1} parent=35 // loop_header_branch
        %50 = sbr.rel (%p48) target = $region43
      $region40: #{fused_forward.1} parent=35 // loop_body
        %v54 = vld [vmem:[%s52] sm:$0xff]
        %55 = vst [vmem:[%s53] sm:$0xff] %v54
        %v56 = vld [vmem:[%s52 + $0x8] sm:$0xff]
        %57 = vst [vmem:[%s53 + $0x8] sm:$0xff] %v56
        %v58 = vld [vmem:[%s52 + $0x10] sm:$0xff]
        %59 = vst [vmem:[%s53 + $0x10] sm:$0xff] %v58
        %v60 = vld [vmem:[%s52 + $0x18] sm:$0xff]
        %61 = vst [vmem:[%s53 + $0x18] sm:$0xff] %v60
        %v62 = vld [vmem:[%s52 + $0x20] sm:$0xff]
        %63 = vst [vmem:[%s53 + $0x20] sm:$0xff] %v62
        %v64 = vld [vmem:[%s52 + $0x28] sm:$0xff]
        %65 = vst [vmem:[%s53 + $0x28] sm:$0xff] %v64
        %v66 = vld [vmem:[%s52 + $0x30] sm:$0xff]
        %67 = vst [vmem:[%s53 + $0x30] sm:$0xff] %v66
        %v68 = vld [vmem:[%s52 + $0x38] sm:$0xff]
        %69 = vst [vmem:[%s53 + $0x38] sm:$0xff] %v68
        %v70 = vld [vmem:[%s52 + $0x40] sm:$0xff]
        %71 = vst [vmem:[%s53 + $0x40] sm:$0xff] %v70
        %v72 = vld [vmem:[%s52 + $0x48] sm:$0xff]
        %73 = vst [vmem:[%s53 + $0x48] sm:$0xff] %v72
        %v74 = vld [vmem:[%s52 + $0x50] sm:$0xff]
        %75 = vst [vmem:[%s53 + $0x50] sm:$0xff] %v74
        %v76 = vld [vmem:[%s52 + $0x58] sm:$0xff]
        %77 = vst [vmem:[%s53 + $0x58] sm:$0xff] %v76
        %v78 = vld [vmem:[%s52 + $0x60] sm:$0xff]
        %79 = vst [vmem:[%s53 + $0x60] sm:$0xff] %v78
        %v80 = vld [vmem:[%s52 + $0x68] sm:$0xff]
        %81 = vst [vmem:[%s53 + $0x68] sm:$0xff] %v80
        %v82 = vld [vmem:[%s52 + $0x70] sm:$0xff]
        %83 = vst [vmem:[%s53 + $0x70] sm:$0xff] %v82
        %v84 = vld [vmem:[%s52 + $0x78] sm:$0xff]
        %85 = vst [vmem:[%s53 + $0x78] sm:$0xff] %v84
        %v86 = vld [vmem:[%s52 + $0x80] sm:$0xff]
        %87 = vst [vmem:[%s53 + $0x80] sm:$0xff] %v86
        %v88 = vld [vmem:[%s52 + $0x88] sm:$0xff]
        %89 = vst [vmem:[%s53 + $0x88] sm:$0xff] %v88
        %v90 = vld [vmem:[%s52 + $0x90] sm:$0xff]
        %91 = vst [vmem:[%s53 + $0x90] sm:$0xff] %v90
        %v92 = vld [vmem:[%s52 + $0x98] sm:$0xff]
        %93 = vst [vmem:[%s53 + $0x98] sm:$0xff] %v92
        %v94 = vld [vmem:[%s52 + $0xa0] sm:$0xff]
        %95 = vst [vmem:[%s53 + $0xa0] sm:$0xff] %v94
        %v96 = vld [vmem:[%s52 + $0xa8] sm:$0xff]
        %97 = vst [vmem:[%s53 + $0xa8] sm:$0xff] %v96
        %v98 = vld [vmem:[%s52 + $0xb0] sm:$0xff]
        %99 = vst [vmem:[%s53 + $0xb0] sm:$0xff] %v98
        %v100 = vld [vmem:[%s52 + $0xb8] sm:$0xff]
        %101 = vst [vmem:[%s53 + $0xb8] sm:$0xff] %v100
        %v102 = vld [vmem:[%s52 + $0xc0] sm:$0xff]
        %103 = vst [vmem:[%s53 + $0xc0] sm:$0xff] %v102
        %v104 = vld [vmem:[%s52 + $0xc8] sm:$0xff]
        %105 = vst [vmem:[%s53 + $0xc8] sm:$0xff] %v104
        %v106 = vld [vmem:[%s52 + $0xd0] sm:$0xff]
        %107 = vst [vmem:[%s53 + $0xd0] sm:$0xff] %v106
        %v108 = vld [vmem:[%s52 + $0xd8] sm:$0xff]
        %109 = vst [vmem:[%s53 + $0xd8] sm:$0xff] %v108
        %v110 = vld [vmem:[%s52 + $0xe0] sm:$0xff]
        %111 = vst [vmem:[%s53 + $0xe0] sm:$0xff] %v110
        %v112 = vld [vmem:[%s52 + $0xe8] sm:$0xff]
        %113 = vst [vmem:[%s53 + $0xe8] sm:$0xff] %v112
        %v114 = vld [vmem:[%s52 + $0xf0] sm:$0xff]
        %115 = vst [vmem:[%s53 + $0xf0] sm:$0xff] %v114
        %v116 = vld [vmem:[%s52 + $0xf8] sm:$0xff]
        %117 = vst [vmem:[%s53 + $0xf8] sm:$0xff] %v116
        %v118 = vld [vmem:[%s52 + $0x100] sm:$0xff]
        %119 = vst [vmem:[%s53 + $0x100] sm:$0xff] %v118
        %v120 = vld [vmem:[%s52 + $0x108] sm:$0xff]
        %121 = vst [vmem:[%s53 + $0x108] sm:$0xff] %v120
        %v122 = vld [vmem:[%s52 + $0x110] sm:$0xff]
        %123 = vst [vmem:[%s53 + $0x110] sm:$0xff] %v122
        %v124 = vld [vmem:[%s52 + $0x118] sm:$0xff]
        %125 = vst [vmem:[%s53 + $0x118] sm:$0xff] %v124
        %v126 = vld [vmem:[%s52 + $0x120] sm:$0xff]
        %127 = vst [vmem:[%s53 + $0x120] sm:$0xff] %v126
        %v128 = vld [vmem:[%s52 + $0x128] sm:$0xff]
        %129 = vst [vmem:[%s53 + $0x128] sm:$0xff] %v128
        %v130 = vld [vmem:[%s52 + $0x130] sm:$0xff]
        %131 = vst [vmem:[%s53 + $0x130] sm:$0xff] %v130
        %v132 = vld [vmem:[%s52 + $0x138] sm:$0xff]
        %133 = vst [vmem:[%s53 + $0x138] sm:$0xff] %v132
        %v134 = vld [vmem:[%s52 + $0x140] sm:$0xff]
        %135 = vst [vmem:[%s53 + $0x140] sm:$0xff] %v134
        %v136 = vld [vmem:[%s52 + $0x148] sm:$0xff]
        %137 = vst [vmem:[%s53 + $0x148] sm:$0xff] %v136
        %v138 = vld [vmem:[%s52 + $0x150] sm:$0xff]
        %139 = vst [vmem:[%s53 + $0x150] sm:$0xff] %v138
        %v140 = vld [vmem:[%s52 + $0x158] sm:$0xff]
        %141 = vst [vmem:[%s53 + $0x158] sm:$0xff] %v140
        %v142 = vld [vmem:[%s52 + $0x160] sm:$0xff]
        %143 = vst [vmem:[%s53 + $0x160] sm:$0xff] %v142
        %v144 = vld [vmem:[%s52 + $0x168] sm:$0xff]
        %145 = vst [vmem:[%s53 + $0x168] sm:$0xff] %v144
        %v146 = vld [vmem:[%s52 + $0x170] sm:$0xff]
        %147 = vst [vmem:[%s53 + $0x170] sm:$0xff] %v146
        %v148 = vld [vmem:[%s52 + $0x178] sm:$0xff]
        %149 = vst [vmem:[%s53 + $0x178] sm:$0xff] %v148
        %v150 = vld [vmem:[%s52 + $0x180] sm:$0xff]
        %151 = vst [vmem:[%s53 + $0x180] sm:$0xff] %v150
        %v152 = vld [vmem:[%s52 + $0x188] sm:$0xff]
        %153 = vst [vmem:[%s53 + $0x188] sm:$0xff] %v152
        %v154 = vld [vmem:[%s52 + $0x190] sm:$0xff]
        %155 = vst [vmem:[%s53 + $0x190] sm:$0xff] %v154
        %v156 = vld [vmem:[%s52 + $0x198] sm:$0xff]
        %157 = vst [vmem:[%s53 + $0x198] sm:$0xff] %v156
        %v158 = vld [vmem:[%s52 + $0x1a0] sm:$0xff]
        %159 = vst [vmem:[%s53 + $0x1a0] sm:$0xff] %v158
        %v160 = vld [vmem:[%s52 + $0x1a8] sm:$0xff]
        %161 = vst [vmem:[%s53 + $0x1a8] sm:$0xff] %v160
        %v162 = vld [vmem:[%s52 + $0x1b0] sm:$0xff]
        %163 = vst [vmem:[%s53 + $0x1b0] sm:$0xff] %v162
        %v164 = vld [vmem:[%s52 + $0x1b8] sm:$0xff]
        %165 = vst [vmem:[%s53 + $0x1b8] sm:$0xff] %v164
        %v166 = vld [vmem:[%s52 + $0x1c0] sm:$0xff]
        %167 = vst [vmem:[%s53 + $0x1c0] sm:$0xff] %v166
        %v168 = vld [vmem:[%s52 + $0x1c8] sm:$0xff]
        %169 = vst [vmem:[%s53 + $0x1c8] sm:$0xff] %v168
        %v170 = vld [vmem:[%s52 + $0x1d0] sm:$0xff]
        %171 = vst [vmem:[%s53 + $0x1d0] sm:$0xff] %v170
        %v172 = vld [vmem:[%s52 + $0x1d8] sm:$0xff]
        %173 = vst [vmem:[%s53 + $0x1d8] sm:$0xff] %v172
        %v174 = vld [vmem:[%s52 + $0x1e0] sm:$0xff]
        %175 = vst [vmem:[%s53 + $0x1e0] sm:$0xff] %v174
        %v176 = vld [vmem:[%s52 + $0x1e8] sm:$0xff]
        %177 = vst [vmem:[%s53 + $0x1e8] sm:$0xff] %v176
        %v178 = vld [vmem:[%s52 + $0x1f0] sm:$0xff]
        %179 = vst [vmem:[%s53 + $0x1f0] sm:$0xff] %v178
        %v180 = vld [vmem:[%s52 + $0x1f8] sm:$0xff]
        %181 = vst [vmem:[%s53 + $0x1f8] sm:$0xff] %v180
        %v182 = vld [vmem:[%s52 + $0x200] sm:$0xff]
        %183 = vst [vmem:[%s53 + $0x200] sm:$0xff] %v182
        %v184 = vld [vmem:[%s52 + $0x208] sm:$0xff]
        %185 = vst [vmem:[%s53 + $0x208] sm:$0xff] %v184
        %v186 = vld [vmem:[%s52 + $0x210] sm:$0xff]
        %187 = vst [vmem:[%s53 + $0x210] sm:$0xff] %v186
        %v188 = vld [vmem:[%s52 + $0x218] sm:$0xff]
        %189 = vst [vmem:[%s53 + $0x218] sm:$0xff] %v188
        %v190 = vld [vmem:[%s52 + $0x220] sm:$0xff]
        %191 = vst [vmem:[%s53 + $0x220] sm:$0xff] %v190
        %v192 = vld [vmem:[%s52 + $0x228] sm:$0xff]
        %193 = vst [vmem:[%s53 + $0x228] sm:$0xff] %v192
        %v194 = vld [vmem:[%s52 + $0x230] sm:$0xff]
        %195 = vst [vmem:[%s53 + $0x230] sm:$0xff] %v194
        %v196 = vld [vmem:[%s52 + $0x238] sm:$0xff]
        %197 = vst [vmem:[%s53 + $0x238] sm:$0xff] %v196
        %v198 = vld [vmem:[%s52 + $0x240] sm:$0xff]
        %199 = vst [vmem:[%s53 + $0x240] sm:$0xff] %v198
        %v200 = vld [vmem:[%s52 + $0x248] sm:$0xff]
        %201 = vst [vmem:[%s53 + $0x248] sm:$0xff] %v200
        %v202 = vld [vmem:[%s52 + $0x250] sm:$0xff]
        %203 = vst [vmem:[%s53 + $0x250] sm:$0xff] %v202
        %v204 = vld [vmem:[%s52 + $0x258] sm:$0xff]
        %205 = vst [vmem:[%s53 + $0x258] sm:$0xff] %v204
        %v206 = vld [vmem:[%s52 + $0x260] sm:$0xff]
        %207 = vst [vmem:[%s53 + $0x260] sm:$0xff] %v206
        %v208 = vld [vmem:[%s52 + $0x268] sm:$0xff]
        %209 = vst [vmem:[%s53 + $0x268] sm:$0xff] %v208
        %v210 = vld [vmem:[%s52 + $0x270] sm:$0xff]
        %211 = vst [vmem:[%s53 + $0x270] sm:$0xff] %v210
        %v212 = vld [vmem:[%s52 + $0x278] sm:$0xff]
        %213 = vst [vmem:[%s53 + $0x278] sm:$0xff] %v212
        %v214 = vld [vmem:[%s52 + $0x280] sm:$0xff]
        %215 = vst [vmem:[%s53 + $0x280] sm:$0xff] %v214
        %v216 = vld [vmem:[%s52 + $0x288] sm:$0xff]
        %217 = vst [vmem:[%s53 + $0x288] sm:$0xff] %v216
        %v218 = vld [vmem:[%s52 + $0x290] sm:$0xff]
        %219 = vst [vmem:[%s53 + $0x290] sm:$0xff] %v218
        %v220 = vld [vmem:[%s52 + $0x298] sm:$0xff]
        %221 = vst [vmem:[%s53 + $0x298] sm:$0xff] %v220
        %v222 = vld [vmem:[%s52 + $0x2a0] sm:$0xff]
        %223 = vst [vmem:[%s53 + $0x2a0] sm:$0xff] %v222
        %v224 = vld [vmem:[%s52 + $0x2a8] sm:$0xff]
        %225 = vst [vmem:[%s53 + $0x2a8] sm:$0xff] %v224
        %v226 = vld [vmem:[%s52 + $0x2b0] sm:$0xff]
        %227 = vst [vmem:[%s53 + $0x2b0] sm:$0xff] %v226
        %v228 = vld [vmem:[%s52 + $0x2b8] sm:$0xff]
        %229 = vst [vmem:[%s53 + $0x2b8] sm:$0xff] %v228
        %v230 = vld [vmem:[%s52 + $0x2c0] sm:$0xff]
        %231 = vst [vmem:[%s53 + $0x2c0] sm:$0xff] %v230
        %v232 = vld [vmem:[%s52 + $0x2c8] sm:$0xff]
        %233 = vst [vmem:[%s53 + $0x2c8] sm:$0xff] %v232
        %v234 = vld [vmem:[%s52 + $0x2d0] sm:$0xff]
        %235 = vst [vmem:[%s53 + $0x2d0] sm:$0xff] %v234
        %v236 = vld [vmem:[%s52 + $0x2d8] sm:$0xff]
        %237 = vst [vmem:[%s53 + $0x2d8] sm:$0xff] %v236
        %v238 = vld [vmem:[%s52 + $0x2e0] sm:$0xff]
        %239 = vst [vmem:[%s53 + $0x2e0] sm:$0xff] %v238
        %v240 = vld [vmem:[%s52 + $0x2e8] sm:$0xff]
        %241 = vst [vmem:[%s53 + $0x2e8] sm:$0xff] %v240
        %v242 = vld [vmem:[%s52 + $0x2f0] sm:$0xff]
        %243 = vst [vmem:[%s53 + $0x2f0] sm:$0xff] %v242
        %v244 = vld [vmem:[%s52 + $0x2f8] sm:$0xff]
        %245 = vst [vmem:[%s53 + $0x2f8] sm:$0xff] %v244
        %v246 = vld [vmem:[%s52 + $0x300] sm:$0xff]
        %247 = vst [vmem:[%s53 + $0x300] sm:$0xff] %v246
        %v248 = vld [vmem:[%s52 + $0x308] sm:$0xff]
        %249 = vst [vmem:[%s53 + $0x308] sm:$0xff] %v248
        %v250 = vld [vmem:[%s52 + $0x310] sm:$0xff]
        %251 = vst [vmem:[%s53 + $0x310] sm:$0xff] %v250
        %v252 = vld [vmem:[%s52 + $0x318] sm:$0xff]
        %253 = vst [vmem:[%s53 + $0x318] sm:$0xff] %v252
        %v254 = vld [vmem:[%s52 + $0x320] sm:$0xff]
        %255 = vst [vmem:[%s53 + $0x320] sm:$0xff] %v254
        %v256 = vld [vmem:[%s52 + $0x328] sm:$0xff]
        %257 = vst [vmem:[%s53 + $0x328] sm:$0xff] %v256
        %v258 = vld [vmem:[%s52 + $0x330] sm:$0xff]
        %259 = vst [vmem:[%s53 + $0x330] sm:$0xff] %v258
        %v260 = vld [vmem:[%s52 + $0x338] sm:$0xff]
        %261 = vst [vmem:[%s53 + $0x338] sm:$0xff] %v260
        %v262 = vld [vmem:[%s52 + $0x340] sm:$0xff]
        %263 = vst [vmem:[%s53 + $0x340] sm:$0xff] %v262
        %v264 = vld [vmem:[%s52 + $0x348] sm:$0xff]
        %265 = vst [vmem:[%s53 + $0x348] sm:$0xff] %v264
        %v266 = vld [vmem:[%s52 + $0x350] sm:$0xff]
        %267 = vst [vmem:[%s53 + $0x350] sm:$0xff] %v266
        %v268 = vld [vmem:[%s52 + $0x358] sm:$0xff]
        %269 = vst [vmem:[%s53 + $0x358] sm:$0xff] %v268
        %v270 = vld [vmem:[%s52 + $0x360] sm:$0xff]
        %271 = vst [vmem:[%s53 + $0x360] sm:$0xff] %v270
        %v272 = vld [vmem:[%s52 + $0x368] sm:$0xff]
        %273 = vst [vmem:[%s53 + $0x368] sm:$0xff] %v272
        %v274 = vld [vmem:[%s52 + $0x370] sm:$0xff]
        %275 = vst [vmem:[%s53 + $0x370] sm:$0xff] %v274
        %v276 = vld [vmem:[%s52 + $0x378] sm:$0xff]
        %277 = vst [vmem:[%s53 + $0x378] sm:$0xff] %v276
      $region41: #{fused_forward.1} parent=35 // loop_footer
        %s51 = sadd.s32 1, %s47
      $region42: #{fused_forward.1} parent=35 // loop_footer_branch
        %46 = sbr.rel target = $region38
      $region43: #{fused_forward.1} parent=35 // loop_exit
        _
    $region36: #{fused_forward.1} parent=20 // pred_fallthru
      _
    %p278 = pneg %p42
    // Predicated region
    $region44: #{fused_forward.1} parent=20 // pred_check
      _
    $region45: #{fused_forward.1} parent=20 // pred_check_branch
      %280 = sbr.rel (%p42) target = $region47
    $region46: #{fused_forward.1} parent=20 // pred_region
      %s281 = sand.u32 896, 7
    $region47: #{fused_forward.1} parent=20 // pred_fallthru
      _
  $region21: #{fused_forward.1} parent=0 // pred_fallthru
    _
  // Predicated region
  $region22: #{fused_forward.1} parent=0 // pred_check
    %p26 = pneg %p22
  $region23: #{fused_forward.1} parent=0 // pred_check_branch
    %28 = sbr.rel (%p26) target = $region25
  $region24: #{fused_forward.1} parent=0 // pred_region
    %s29 = sshll.u32 1, 896
    %s30 = ssub.s32 %s29, 1
    loop: start=0, step=1, limit=1
    $region26: #{fused_forward.1} parent=24 // loop_pre_header
      _
    $region27: #{fused_forward.1} parent=24 // loop_header
      %s32 = sphi 0, %s36
      %p33 = scmp.ge.s32.totalorder %s32, 1
      %s37 = sphi %s4, %s4
      %s38 = sphi [#allocation5], [#allocation5]
    $region28: #{fused_forward.1} parent=24 // loop_header_branch
      %35 = sbr.rel (%p33) target = $region32
    $region29: #{fused_forward.1} parent=24 // loop_body
      %v39 = vld [vmem:[%s37] sm:%s30]
      %40 = vst [vmem:[%s38] sm:%s30] %v39
    $region30: #{fused_forward.1} parent=24 // loop_footer
      %s36 = sadd.s32 1, %s32
    $region31: #{fused_forward.1} parent=24 // loop_footer_branch
      %31 = sbr.rel target = $region27
    $region32: #{fused_forward.1} parent=24 // loop_exit
      _
  $region25: #{fused_forward.1} parent=0 // pred_fallthru
    _
  // Predicated region
  $region48: #{fused_forward.1} parent=0 // pred_check
    _
  $region49: #{fused_forward.1} parent=0 // pred_check_branch
    %284 = sbr.rel (0) target = $region51
  $region50: #{fused_forward.1} parent=0 // pred_region
    %285 = vsyncadd [#allocation6], 14336
  $region51: #{fused_forward.1} parent=0 // pred_fallthru
    _
  %v286 = vlaneseq
  %v287 = vshrl.u32 %v286, 7
  %v288 = vadd.s32 %v287, 8
  %v289 = vadd.s32 %v287, 16
  %v290 = vadd.s32 %v287, 24
  %v291 = vadd.s32 %v287, 32
  %v292 = vadd.s32 %v287, 40
  %v293 = vadd.s32 %v287, 48
  %v294 = vadd.s32 %v287, 56
  %v295 = vadd.s32 %v287, 64
  %v296 = vadd.s32 %v287, 72
  %v297 = vadd.s32 %v287, 80
  %v298 = vadd.s32 %v287, 88
  %v299 = vadd.s32 %v287, 96
  %v300 = vadd.s32 %v287, 104
  %v301 = vadd.s32 %v287, 112
  %v302 = vadd.s32 %v287, 120
  %v303 = vadd.s32 %v287, 128
  %v304 = vadd.s32 %v287, 136
  %v305 = vmul.u32 %v287, 10923
  %v306 = vmul.u32 %v288, 10923
  %v307 = vmul.u32 %v289, 10923
  %v308 = vmul.u32 %v290, 10923
  %v309 = vmul.u32 %v291, 10923
  %v310 = vmul.u32 %v292, 10923
  %v311 = vmul.u32 %v293, 10923
  %v312 = vmul.u32 %v294, 10923
  %v313 = vmul.u32 %v295, 10923
  %v314 = vmul.u32 %v296, 10923
  %v315 = vmul.u32 %v297, 10923
  %v316 = vmul.u32 %v298, 10923
  %v317 = vmul.u32 %v299, 10923
  %v318 = vmul.u32 %v300, 10923
  %v319 = vmul.u32 %v301, 10923
  %v320 = vmul.u32 %v302, 10923
  %v321 = vmul.u32 %v303, 10923
  %v322 = vmul.u32 %v304, 10923
  %v323 = vshra.s32 %v305, 17
  %v324 = vshra.s32 %v306, 17
  %v325 = vshra.s32 %v307, 17
  %v326 = vshra.s32 %v308, 17
  %v327 = vshra.s32 %v309, 17
  %v328 = vshra.s32 %v310, 17
  %v329 = vshra.s32 %v311, 17
  %v330 = vshra.s32 %v312, 17
  %v331 = vshra.s32 %v313, 17
  %v332 = vshra.s32 %v314, 17
  %v333 = vshra.s32 %v315, 17
  %v334 = vshra.s32 %v316, 17
  %v335 = vshra.s32 %v317, 17
  %v336 = vshra.s32 %v318, 17
  %v337 = vshra.s32 %v319, 17
  %v338 = vshra.s32 %v320, 17
  %v339 = vshra.s32 %v321, 17
  %v340 = vshra.s32 %v322, 17
  %v341 = vmul.u32 %v323, 12
  %v342 = vmul.u32 %v324, 12
  %v343 = vmul.u32 %v325, 12
  %v344 = vmul.u32 %v326, 12
  %v345 = vmul.u32 %v327, 12
  %v346 = vmul.u32 %v328, 12
  %v347 = vmul.u32 %v329, 12
  %v348 = vmul.u32 %v330, 12
  %v349 = vmul.u32 %v331, 12
  %v350 = vmul.u32 %v332, 12
  %v351 = vmul.u32 %v333, 12
  %v352 = vmul.u32 %v334, 12
  %v353 = vmul.u32 %v335, 12
  %v354 = vmul.u32 %v336, 12
  %v355 = vmul.u32 %v337, 12
  %v356 = vmul.u32 %v338, 12
  %v357 = vmul.u32 %v339, 12
  %v358 = vmul.u32 %v340, 12
  %v359 = vsub.s32 %v287, %v341
  %v360 = vsub.s32 %v288, %v342
  %v361 = vsub.s32 %v289, %v343
  %v362 = vsub.s32 %v290, %v344
  %v363 = vsub.s32 %v291, %v345
  %v364 = vsub.s32 %v292, %v346
  %v365 = vsub.s32 %v293, %v347
  %v366 = vsub.s32 %v294, %v348
  %v367 = vsub.s32 %v295, %v349
  %v368 = vsub.s32 %v296, %v350
  %v369 = vsub.s32 %v297, %v351
  %v370 = vsub.s32 %v298, %v352
  %v371 = vsub.s32 %v299, %v353
  %v372 = vsub.s32 %v300, %v354
  %v373 = vsub.s32 %v301, %v355
  %v374 = vsub.s32 %v302, %v356
  %v375 = vsub.s32 %v303, %v357
  %v376 = vsub.s32 %v304, %v358
  %v377 = vld [vmem:[%s0] sm:$0xf]
  %v378 = vld [vmem:[%s0 + $0x4] sm:$0xf]
  %v379 = vld [vmem:[%s0 + $0x8] sm:$0xf]
  %v380 = vld [vmem:[%s0 + $0xc] sm:$0xf]
  %v381 = vld [vmem:[%s0 + $0x10] sm:$0xf]
  %v382 = vld [vmem:[%s0 + $0x14] sm:$0xf]
  %v383 = vld [vmem:[%s0 + $0x18] sm:$0xf]
  %v384 = vld [vmem:[%s0 + $0x1c] sm:$0xf]
  %v385 = vld [vmem:[%s0 + $0x20] sm:$0xf]
  %v386 = vld [vmem:[%s0 + $0x24] sm:$0xf]
  %v387 = vld [vmem:[%s0 + $0x28] sm:$0xf]
  %v388 = vld [vmem:[%s0 + $0x2c] sm:$0xf]
  %v389 = vld [vmem:[%s0 + $0x30] sm:$0xf]
  %v390 = vld [vmem:[%s0 + $0x34] sm:$0xf]
  %v391 = vld [vmem:[%s0 + $0x38] sm:$0xf]
  %v392 = vld [vmem:[%s0 + $0x3c] sm:$0xf]
  %v393 = vld [vmem:[%s0 + $0x40] sm:$0xf]
  %v394 = vld [vmem:[%s0 + $0x44] sm:$0xf]
  %v395 = vadd.s32 %v359, 4294967293
  %v396 = vadd.s32 %v360, 4294967293
  %v397 = vadd.s32 %v361, 4294967293
  %v398 = vadd.s32 %v362, 4294967293
  %v399 = vadd.s32 %v363, 4294967293
  %v400 = vadd.s32 %v364, 4294967293
  %v401 = vadd.s32 %v365, 4294967293
  %v402 = vadd.s32 %v366, 4294967293
  %v403 = vadd.s32 %v367, 4294967293
  %v404 = vadd.s32 %v368, 4294967293
  %v405 = vadd.s32 %v369, 4294967293
  %v406 = vadd.s32 %v370, 4294967293
  %v407 = vadd.s32 %v371, 4294967293
  %v408 = vadd.s32 %v372, 4294967293
  %v409 = vadd.s32 %v373, 4294967293
  %v410 = vadd.s32 %v374, 4294967293
  %v411 = vadd.s32 %v375, 4294967293
  %v412 = vadd.s32 %v376, 4294967293
  %vm413 = vcmp.ge.s32.totalorder %v395, 0
  %vm414 = vcmp.ge.s32.totalorder %v396, 0
  %vm415 = vcmp.ge.s32.totalorder %v397, 0
  %vm416 = vcmp.ge.s32.totalorder %v398, 0
  %vm417 = vcmp.ge.s32.totalorder %v399, 0
  %vm418 = vcmp.ge.s32.totalorder %v400, 0
  %vm419 = vcmp.ge.s32.totalorder %v401, 0
  %vm420 = vcmp.ge.s32.totalorder %v402, 0
  %vm421 = vcmp.ge.s32.totalorder %v403, 0
  %vm422 = vcmp.ge.s32.totalorder %v404, 0
  %vm423 = vcmp.ge.s32.totalorder %v405, 0
  %vm424 = vcmp.ge.s32.totalorder %v406, 0
  %vm425 = vcmp.ge.s32.totalorder %v407, 0
  %vm426 = vcmp.ge.s32.totalorder %v408, 0
  %vm427 = vcmp.ge.s32.totalorder %v409, 0
  %vm428 = vcmp.ge.s32.totalorder %v410, 0
  %vm429 = vcmp.ge.s32.totalorder %v411, 0
  %vm430 = vcmp.ge.s32.totalorder %v412, 0
  %vm431 = vcmp.lt.s32.totalorder %v395, 12
  %vm432 = vcmp.lt.s32.totalorder %v396, 12
  %vm433 = vcmp.lt.s32.totalorder %v397, 12
  %vm434 = vcmp.lt.s32.totalorder %v398, 12
  %vm435 = vcmp.lt.s32.totalorder %v399, 12
  %vm436 = vcmp.lt.s32.totalorder %v400, 12
  %vm437 = vcmp.lt.s32.totalorder %v401, 12
  %vm438 = vcmp.lt.s32.totalorder %v402, 12
  %vm439 = vcmp.lt.s32.totalorder %v403, 12
  %vm440 = vcmp.lt.s32.totalorder %v404, 12
  %vm441 = vcmp.lt.s32.totalorder %v405, 12
  %vm442 = vcmp.lt.s32.totalorder %v406, 12
  %vm443 = vcmp.lt.s32.totalorder %v407, 12
  %vm444 = vcmp.lt.s32.totalorder %v408, 12
  %vm445 = vcmp.lt.s32.totalorder %v409, 12
  %vm446 = vcmp.lt.s32.totalorder %v410, 12
  %vm447 = vcmp.lt.s32.totalorder %v411, 12
  %vm448 = vcmp.lt.s32.totalorder %v412, 12
  %vm449 = vmand %vm413, %vm431
  %vm450 = vmand %vm414, %vm432
  %vm451 = vmand %vm415, %vm433
  %vm452 = vmand %vm416, %vm434
  %vm453 = vmand %vm417, %vm435
  %vm454 = vmand %vm418, %vm436
  %vm455 = vmand %vm419, %vm437
  %vm456 = vmand %vm420, %vm438
  %vm457 = vmand %vm421, %vm439
  %vm458 = vmand %vm422, %vm440
  %vm459 = vmand %vm423, %vm441
  %vm460 = vmand %vm424, %vm442
  %vm461 = vmand %vm425, %vm443
  %vm462 = vmand %vm426, %vm444
  %vm463 = vmand %vm427, %vm445
  %vm464 = vmand %vm428, %vm446
  %vm465 = vmand %vm429, %vm447
  %vm466 = vmand %vm430, %vm448
  %vm467 = vmpackc.low %vm449, %vm449
  %vm468 = vmpackc.low %vm450, %vm450
  %vm469 = vmpackc.low %vm451, %vm451
  %vm470 = vmpackc.low %vm452, %vm452
  %vm471 = vmpackc.low %vm453, %vm453
  %vm472 = vmpackc.low %vm454, %vm454
  %vm473 = vmpackc.low %vm455, %vm455
  %vm474 = vmpackc.low %vm456, %vm456
  %vm475 = vmpackc.low %vm457, %vm457
  %vm476 = vmpackc.low %vm458, %vm458
  %vm477 = vmpackc.low %vm459, %vm459
  %vm478 = vmpackc.low %vm460, %vm460
  %vm479 = vmpackc.low %vm461, %vm461
  %vm480 = vmpackc.low %vm462, %vm462
  %vm481 = vmpackc.low %vm463, %vm463
  %vm482 = vmpackc.low %vm464, %vm464
  %vm483 = vmpackc.low %vm465, %vm465
  %vm484 = vmpackc.low %vm466, %vm466
  %v485 = vsel %vm467, %v377, 0
  %v486 = vsel %vm468, %v378, 0
  %v487 = vsel %vm469, %v379, 0
  %v488 = vsel %vm470, %v380, 0
  %v489 = vsel %vm471, %v381, 0
  %v490 = vsel %vm472, %v382, 0
  %v491 = vsel %vm473, %v383, 0
  %v492 = vsel %vm474, %v384, 0
  %v493 = vsel %vm475, %v385, 0
  %v494 = vsel %vm476, %v386, 0
  %v495 = vsel %vm477, %v387, 0
  %v496 = vsel %vm478, %v388, 0
  %v497 = vsel %vm479, %v389, 0
  %v498 = vsel %vm480, %v390, 0
  %v499 = vsel %vm481, %v391, 0
  %v500 = vsel %vm482, %v392, 0
  %v501 = vsel %vm483, %v393, 0
  %v502 = vsel %vm484, %v394, 0
  %503 = vst [vmem:[#allocation2] sm:$0xf] %v485
  %504 = vst [vmem:[#allocation2 + $0x1c] sm:$0xf] %v486
  %505 = vst [vmem:[#allocation2 + $0x38] sm:$0xf] %v487
  %506 = vst [vmem:[#allocation2 + $0x54] sm:$0xf] %v488
  %507 = vst [vmem:[#allocation2 + $0x70] sm:$0xf] %v489
  %508 = vst [vmem:[#allocation2 + $0x8c] sm:$0xf] %v490
  %509 = vst [vmem:[#allocation2 + $0xa8] sm:$0xf] %v491
  %510 = vst [vmem:[#allocation2 + $0xc4] sm:$0xf] %v492
  %511 = vst [vmem:[#allocation2 + $0xe0] sm:$0xf] %v493
  %512 = vst [vmem:[#allocation2 + $0xfc] sm:$0xf] %v494
  %513 = vst [vmem:[#allocation2 + $0x118] sm:$0xf] %v495
  %514 = vst [vmem:[#allocation2 + $0x134] sm:$0xf] %v496
  %515 = vst [vmem:[#allocation2 + $0x150] sm:$0xf] %v497
  %516 = vst [vmem:[#allocation2 + $0x16c] sm:$0xf] %v498
  %517 = vst [vmem:[#allocation2 + $0x188] sm:$0xf] %v499
  %518 = vst [vmem:[#allocation2 + $0x1a4] sm:$0xf] %v500
  %519 = vst [vmem:[#allocation2 + $0x1c0] sm:$0xf] %v501
  %520 = vst [vmem:[#allocation2 + $0x1dc] sm:$0xf] %v502
  %v521 = vld [vmem:[%s0] sm:$0xf]
  %v522 = vld [vmem:[%s0 + $0x4] sm:$0xf]
  %v523 = vld [vmem:[%s0 + $0x8] sm:$0xf]
  %v524 = vld [vmem:[%s0 + $0xc] sm:$0xf]
  %v525 = vld [vmem:[%s0 + $0x10] sm:$0xf]
  %v526 = vld [vmem:[%s0 + $0x14] sm:$0xf]
  %v527 = vld [vmem:[%s0 + $0x18] sm:$0xf]
  %v528 = vld [vmem:[%s0 + $0x1c] sm:$0xf]
  %v529 = vld [vmem:[%s0 + $0x20] sm:$0xf]
  %v530 = vld [vmem:[%s0 + $0x24] sm:$0xf]
  %v531 = vld [vmem:[%s0 + $0x28] sm:$0xf]
  %v532 = vld [vmem:[%s0 + $0x2c] sm:$0xf]
  %v533 = vld [vmem:[%s0 + $0x30] sm:$0xf]
  %v534 = vld [vmem:[%s0 + $0x34] sm:$0xf]
  %v535 = vld [vmem:[%s0 + $0x38] sm:$0xf]
  %v536 = vld [vmem:[%s0 + $0x3c] sm:$0xf]
  %v537 = vld [vmem:[%s0 + $0x40] sm:$0xf]
  %v538 = vld [vmem:[%s0 + $0x44] sm:$0xf]
  %v539 = vld [vmem:[%s0 + $0x48] sm:$0x1]
  %v540 = vadd.s32 %v359, 4294967294
  %v541 = vadd.s32 %v360, 4294967294
  %v542 = vadd.s32 %v361, 4294967294
  %v543 = vadd.s32 %v362, 4294967294
  %v544 = vadd.s32 %v363, 4294967294
  %v545 = vadd.s32 %v364, 4294967294
  %v546 = vadd.s32 %v365, 4294967294
  %v547 = vadd.s32 %v366, 4294967294
  %v548 = vadd.s32 %v367, 4294967294
  %v549 = vadd.s32 %v368, 4294967294
  %v550 = vadd.s32 %v369, 4294967294
  %v551 = vadd.s32 %v370, 4294967294
  %v552 = vadd.s32 %v371, 4294967294
  %v553 = vadd.s32 %v372, 4294967294
  %v554 = vadd.s32 %v373, 4294967294
  %v555 = vadd.s32 %v374, 4294967294
  %v556 = vadd.s32 %v375, 4294967294
  %v557 = vadd.s32 %v376, 4294967294
  %vm558 = vcmp.ge.s32.totalorder %v540, 0
  %vm559 = vcmp.ge.s32.totalorder %v541, 0
  %vm560 = vcmp.ge.s32.totalorder %v542, 0
  %vm561 = vcmp.ge.s32.totalorder %v543, 0
  %vm562 = vcmp.ge.s32.totalorder %v544, 0
  %vm563 = vcmp.ge.s32.totalorder %v545, 0
  %vm564 = vcmp.ge.s32.totalorder %v546, 0
  %vm565 = vcmp.ge.s32.totalorder %v547, 0
  %vm566 = vcmp.ge.s32.totalorder %v548, 0
  %vm567 = vcmp.ge.s32.totalorder %v549, 0
  %vm568 = vcmp.ge.s32.totalorder %v550, 0
  %vm569 = vcmp.ge.s32.totalorder %v551, 0
  %vm570 = vcmp.ge.s32.totalorder %v552, 0
  %vm571 = vcmp.ge.s32.totalorder %v553, 0
  %vm572 = vcmp.ge.s32.totalorder %v554, 0
  %vm573 = vcmp.ge.s32.totalorder %v555, 0
  %vm574 = vcmp.ge.s32.totalorder %v556, 0
  %vm575 = vcmp.ge.s32.totalorder %v557, 0
  %vm576 = vcmp.lt.s32.totalorder %v540, 12
  %vm577 = vcmp.lt.s32.totalorder %v541, 12
  %vm578 = vcmp.lt.s32.totalorder %v542, 12
  %vm579 = vcmp.lt.s32.totalorder %v543, 12
  %vm580 = vcmp.lt.s32.totalorder %v544, 12
  %vm581 = vcmp.lt.s32.totalorder %v545, 12
  %vm582 = vcmp.lt.s32.totalorder %v546, 12
  %vm583 = vcmp.lt.s32.totalorder %v547, 12
  %vm584 = vcmp.lt.s32.totalorder %v548, 12
  %vm585 = vcmp.lt.s32.totalorder %v549, 12
  %vm586 = vcmp.lt.s32.totalorder %v550, 12
  %vm587 = vcmp.lt.s32.totalorder %v551, 12
  %vm588 = vcmp.lt.s32.totalorder %v552, 12
  %vm589 = vcmp.lt.s32.totalorder %v553, 12
  %vm590 = vcmp.lt.s32.totalorder %v554, 12
  %vm591 = vcmp.lt.s32.totalorder %v555, 12
  %vm592 = vcmp.lt.s32.totalorder %v556, 12
  %vm593 = vcmp.lt.s32.totalorder %v557, 12
  %vm594 = vmand %vm558, %vm576
  %vm595 = vmand %vm559, %vm577
  %vm596 = vmand %vm560, %vm578
  %vm597 = vmand %vm561, %vm579
  %vm598 = vmand %vm562, %vm580
  %vm599 = vmand %vm563, %vm581
  %vm600 = vmand %vm564, %vm582
  %vm601 = vmand %vm565, %vm583
  %vm602 = vmand %vm566, %vm584
  %vm603 = vmand %vm567, %vm585
  %vm604 = vmand %vm568, %vm586
  %vm605 = vmand %vm569, %vm587
  %vm606 = vmand %vm570, %vm588
  %vm607 = vmand %vm571, %vm589
  %vm608 = vmand %vm572, %vm590
  %vm609 = vmand %vm573, %vm591
  %vm610 = vmand %vm574, %vm592
  %vm611 = vmand %vm575, %vm593
  %vm612 = vmpackc.low %vm594, %vm594
  %vm613 = vmpackc.low %vm595, %vm595
  %vm614 = vmpackc.low %vm596, %vm596
  %vm615 = vmpackc.low %vm597, %vm597
  %vm616 = vmpackc.low %vm598, %vm598
  %vm617 = vmpackc.low %vm599, %vm599
  %vm618 = vmpackc.low %vm600, %vm600
  %vm619 = vmpackc.low %vm601, %vm601
  %vm620 = vmpackc.low %vm602, %vm602
  %vm621 = vmpackc.low %vm603, %vm603
  %vm622 = vmpackc.low %vm604, %vm604
  %vm623 = vmpackc.low %vm605, %vm605
  %vm624 = vmpackc.low %vm606, %vm606
  %vm625 = vmpackc.low %vm607, %vm607
  %vm626 = vmpackc.low %vm608, %vm608
  %vm627 = vmpackc.low %vm609, %vm609
  %vm628 = vmpackc.low %vm610, %vm610
  %vm629 = vmpackc.low %vm611, %vm611
  %v630 = vsel %vm612, 65537, 0
  %v631 = vsel %vm613, 65537, 0
  %v632 = vsel %vm614, 65537, 0
  %v633 = vsel %vm615, 65537, 0
  %v634 = vsel %vm616, 65537, 0
  %v635 = vsel %vm617, 65537, 0
  %v636 = vsel %vm618, 65537, 0
  %v637 = vsel %vm619, 65537, 0
  %v638 = vsel %vm620, 65537, 0
  %v639 = vsel %vm621, 65537, 0
  %v640 = vsel %vm622, 65537, 0
  %v641 = vsel %vm623, 65537, 0
  %v642 = vsel %vm624, 65537, 0
  %v643 = vsel %vm625, 65537, 0
  %v644 = vsel %vm626, 65537, 0
  %v645 = vsel %vm627, 65537, 0
  %v646 = vsel %vm628, 65537, 0
  %v647 = vsel %vm629, 65537, 0
  %vm648 = vsmask.f32 256
  %vm649 = vsmask.f32 4368
  %vm650 = vmor %vm648, %vm649
  %v652 = vshrl.u32 %v630, 16
  %v654 = vrot.slane %v652, 7
  %v655 = vshll.u32 %v630, 16
  %v657 = vor.u32 %v654, %v655
  %v658 = vrot.slane %v654, 4
  %v660 = vshrl.u32 %v631, 16
  %v662 = vrot.slane %v660, 7
  %v663 = vshll.u32 %v631, 16
  %v665 = vor.u32 %v662, %v663
  %v666 = vsel %vm650, %v658, %v665
  %v667 = vrot.slane %v662, 4
  %v669 = vshrl.u32 %v632, 16
  %v671 = vrot.slane %v669, 7
  %v672 = vshll.u32 %v632, 16
  %v674 = vor.u32 %v671, %v672
  %v675 = vsel %vm650, %v667, %v674
  %v676 = vrot.slane %v671, 4
  %v678 = vshrl.u32 %v633, 16
  %v680 = vrot.slane %v678, 7
  %v681 = vshll.u32 %v633, 16
  %v683 = vor.u32 %v680, %v681
  %v684 = vsel %vm650, %v676, %v683
  %v685 = vrot.slane %v680, 4
  %v687 = vshrl.u32 %v634, 16
  %v689 = vrot.slane %v687, 7
  %v690 = vshll.u32 %v634, 16
  %v692 = vor.u32 %v689, %v690
  %v693 = vsel %vm650, %v685, %v692
  %v694 = vrot.slane %v689, 4
  %v696 = vshrl.u32 %v635, 16
  %v698 = vrot.slane %v696, 7
  %v699 = vshll.u32 %v635, 16
  %v701 = vor.u32 %v698, %v699
  %v702 = vsel %vm650, %v694, %v701
  %v703 = vrot.slane %v698, 4
  %v705 = vshrl.u32 %v636, 16
  %v707 = vrot.slane %v705, 7
  %v708 = vshll.u32 %v636, 16
  %v710 = vor.u32 %v707, %v708
  %v711 = vsel %vm650, %v703, %v710
  %v712 = vrot.slane %v707, 4
  %v714 = vshrl.u32 %v637, 16
  %v716 = vrot.slane %v714, 7
  %v717 = vshll.u32 %v637, 16
  %v719 = vor.u32 %v716, %v717
  %v720 = vsel %vm650, %v712, %v719
  %v721 = vrot.slane %v716, 4
  %v723 = vshrl.u32 %v638, 16
  %v725 = vrot.slane %v723, 7
  %v726 = vshll.u32 %v638, 16
  %v728 = vor.u32 %v725, %v726
  %v729 = vsel %vm650, %v721, %v728
  %v730 = vrot.slane %v725, 4
  %v732 = vshrl.u32 %v639, 16
  %v734 = vrot.slane %v732, 7
  %v735 = vshll.u32 %v639, 16
  %v737 = vor.u32 %v734, %v735
  %v738 = vsel %vm650, %v730, %v737
  %v739 = vrot.slane %v734, 4
  %v741 = vshrl.u32 %v640, 16
  %v743 = vrot.slane %v741, 7
  %v744 = vshll.u32 %v640, 16
  %v746 = vor.u32 %v743, %v744
  %v747 = vsel %vm650, %v739, %v746
  %v748 = vrot.slane %v743, 4
  %v750 = vshrl.u32 %v641, 16
  %v752 = vrot.slane %v750, 7
  %v753 = vshll.u32 %v641, 16
  %v755 = vor.u32 %v752, %v753
  %v756 = vsel %vm650, %v748, %v755
  %v757 = vrot.slane %v752, 4
  %v759 = vshrl.u32 %v642, 16
  %v761 = vrot.slane %v759, 7
  %v762 = vshll.u32 %v642, 16
  %v764 = vor.u32 %v761, %v762
  %v765 = vsel %vm650, %v757, %v764
  %v766 = vrot.slane %v761, 4
  %v768 = vshrl.u32 %v643, 16
  %v770 = vrot.slane %v768, 7
  %v771 = vshll.u32 %v643, 16
  %v773 = vor.u32 %v770, %v771
  %v774 = vsel %vm650, %v766, %v773
  %v775 = vrot.slane %v770, 4
  %v777 = vshrl.u32 %v644, 16
  %v779 = vrot.slane %v777, 7
  %v780 = vshll.u32 %v644, 16
  %v782 = vor.u32 %v779, %v780
  %v783 = vsel %vm650, %v775, %v782
  %v784 = vrot.slane %v779, 4
  %v786 = vshrl.u32 %v645, 16
  %v788 = vrot.slane %v786, 7
  %v789 = vshll.u32 %v645, 16
  %v791 = vor.u32 %v788, %v789
  %v792 = vsel %vm650, %v784, %v791
  %v793 = vrot.slane %v788, 4
  %v795 = vshrl.u32 %v646, 16
  %v797 = vrot.slane %v795, 7
  %v798 = vshll.u32 %v646, 16
  %v800 = vor.u32 %v797, %v798
  %v801 = vsel %vm650, %v793, %v800
  %v802 = vrot.slane %v797, 4
  %v804 = vshrl.u32 %v647, 16
  %v806 = vrot.slane %v804, 7
  %v807 = vshll.u32 %v647, 16
  %v809 = vor.u32 %v806, %v807
  %v810 = vsel %vm650, %v802, %v809
  %v811 = vrot.slane %v806, 4
  %vm812 = vcmp.ne.s16.totalorder %v657, 0
  %vm813 = vcmp.ne.s16.totalorder %v666, 0
  %vm814 = vcmp.ne.s16.totalorder %v675, 0
  %vm815 = vcmp.ne.s16.totalorder %v684, 0
  %vm816 = vcmp.ne.s16.totalorder %v693, 0
  %vm817 = vcmp.ne.s16.totalorder %v702, 0
  %vm818 = vcmp.ne.s16.totalorder %v711, 0
  %vm819 = vcmp.ne.s16.totalorder %v720, 0
  %vm820 = vcmp.ne.s16.totalorder %v729, 0
  %vm821 = vcmp.ne.s16.totalorder %v738, 0
  %vm822 = vcmp.ne.s16.totalorder %v747, 0
  %vm823 = vcmp.ne.s16.totalorder %v756, 0
  %vm824 = vcmp.ne.s16.totalorder %v765, 0
  %vm825 = vcmp.ne.s16.totalorder %v774, 0
  %vm826 = vcmp.ne.s16.totalorder %v783, 0
  %vm827 = vcmp.ne.s16.totalorder %v792, 0
  %vm828 = vcmp.ne.s16.totalorder %v801, 0
  %vm829 = vcmp.ne.s16.totalorder %v810, 0
  %vm830 = vcmp.ne.s16.totalorder %v811, 0
  %v831 = vsel %vm812, %v521, 0
  %v832 = vsel %vm813, %v522, 0
  %v833 = vsel %vm814, %v523, 0
  %v834 = vsel %vm815, %v524, 0
  %v835 = vsel %vm816, %v525, 0
  %v836 = vsel %vm817, %v526, 0
  %v837 = vsel %vm818, %v527, 0
  %v838 = vsel %vm819, %v528, 0
  %v839 = vsel %vm820, %v529, 0
  %v840 = vsel %vm821, %v530, 0
  %v841 = vsel %vm822, %v531, 0
  %v842 = vsel %vm823, %v532, 0
  %v843 = vsel %vm824, %v533, 0
  %v844 = vsel %vm825, %v534, 0
  %v845 = vsel %vm826, %v535, 0
  %v846 = vsel %vm827, %v536, 0
  %v847 = vsel %vm828, %v537, 0
  %v848 = vsel %vm829, %v538, 0
  %v849 = vsel %vm830, %v539, 0
  %vm850 = vsmask.f32 3328
  %vm851 = vsmask.f32 7440
  %vm852 = vmor %vm850, %vm851
  %v854 = vshrl.u32 %v831, 16
  %v856 = vrot.slane %v854, 4
  %v857 = vshll.u32 %v831, 16
  %v859 = vrot.slane %v857, 5
  %v860 = vor.u32 %v856, %v859
  %v861 = vrot.slane %v860, 4
  %v863 = vshll.u32 %v832, 16
  %v865 = vrot.slane %v863, 5
  %v866 = vsel %vm852, %v861, %v865
  %v867 = vshrl.u32 %v832, 16
  %v869 = vrot.slane %v867, 4
  %v870 = vor.u32 %v869, %v865
  %v871 = vrot.slane %v870, 4
  %v873 = vshll.u32 %v833, 16
  %v875 = vrot.slane %v873, 5
  %v876 = vsel %vm852, %v871, %v875
  %v877 = vshrl.u32 %v833, 16
  %v879 = vrot.slane %v877, 4
  %v880 = vor.u32 %v879, %v875
  %v881 = vrot.slane %v880, 4
  %v883 = vshll.u32 %v834, 16
  %v885 = vrot.slane %v883, 5
  %v886 = vsel %vm852, %v881, %v885
  %v887 = vshrl.u32 %v834, 16
  %v889 = vrot.slane %v887, 4
  %v890 = vor.u32 %v889, %v885
  %v891 = vrot.slane %v890, 4
  %v893 = vshll.u32 %v835, 16
  %v895 = vrot.slane %v893, 5
  %v896 = vsel %vm852, %v891, %v895
  %v897 = vshrl.u32 %v835, 16
  %v899 = vrot.slane %v897, 4
  %v900 = vor.u32 %v899, %v895
  %v901 = vrot.slane %v900, 4
  %v903 = vshll.u32 %v836, 16
  %v905 = vrot.slane %v903, 5
  %v906 = vsel %vm852, %v901, %v905
  %v907 = vshrl.u32 %v836, 16
  %v909 = vrot.slane %v907, 4
  %v910 = vor.u32 %v909, %v905
  %v911 = vrot.slane %v910, 4
  %v913 = vshll.u32 %v837, 16
  %v915 = vrot.slane %v913, 5
  %v916 = vsel %vm852, %v911, %v915
  %v917 = vshrl.u32 %v837, 16
  %v919 = vrot.slane %v917, 4
  %v920 = vor.u32 %v919, %v915
  %v921 = vrot.slane %v920, 4
  %v923 = vshll.u32 %v838, 16
  %v925 = vrot.slane %v923, 5
  %v926 = vsel %vm852, %v921, %v925
  %v927 = vshrl.u32 %v838, 16
  %v929 = vrot.slane %v927, 4
  %v930 = vor.u32 %v929, %v925
  %v931 = vrot.slane %v930, 4
  %v933 = vshll.u32 %v839, 16
  %v935 = vrot.slane %v933, 5
  %v936 = vsel %vm852, %v931, %v935
  %v937 = vshrl.u32 %v839, 16
  %v939 = vrot.slane %v937, 4
  %v940 = vor.u32 %v939, %v935
  %v941 = vrot.slane %v940, 4
  %v943 = vshll.u32 %v840, 16
  %v945 = vrot.slane %v943, 5
  %v946 = vsel %vm852, %v941, %v945
  %v947 = vshrl.u32 %v840, 16
  %v949 = vrot.slane %v947, 4
  %v950 = vor.u32 %v949, %v945
  %v951 = vrot.slane %v950, 4
  %v953 = vshll.u32 %v841, 16
  %v955 = vrot.slane %v953, 5
  %v956 = vsel %vm852, %v951, %v955
  %v957 = vshrl.u32 %v841, 16
  %v959 = vrot.slane %v957, 4
  %v960 = vor.u32 %v959, %v955
  %v961 = vrot.slane %v960, 4
  %v963 = vshll.u32 %v842, 16
  %v965 = vrot.slane %v963, 5
  %v966 = vsel %vm852, %v961, %v965
  %v967 = vshrl.u32 %v842, 16
  %v969 = vrot.slane %v967, 4
  %v970 = vor.u32 %v969, %v965
  %v971 = vrot.slane %v970, 4
  %v973 = vshll.u32 %v843, 16
  %v975 = vrot.slane %v973, 5
  %v976 = vsel %vm852, %v971, %v975
  %v977 = vshrl.u32 %v843, 16
  %v979 = vrot.slane %v977, 4
  %v980 = vor.u32 %v979, %v975
  %v981 = vrot.slane %v980, 4
  %v983 = vshll.u32 %v844, 16
  %v985 = vrot.slane %v983, 5
  %v986 = vsel %vm852, %v981, %v985
  %v987 = vshrl.u32 %v844, 16
  %v989 = vrot.slane %v987, 4
  %v990 = vor.u32 %v989, %v985
  %v991 = vrot.slane %v990, 4
  %v993 = vshll.u32 %v845, 16
  %v995 = vrot.slane %v993, 5
  %v996 = vsel %vm852, %v991, %v995
  %v997 = vshrl.u32 %v845, 16
  %v999 = vrot.slane %v997, 4
  %v1000 = vor.u32 %v999, %v995
  %v1001 = vrot.slane %v1000, 4
  %v1003 = vshll.u32 %v846, 16
  %v1005 = vrot.slane %v1003, 5
  %v1006 = vsel %vm852, %v1001, %v1005
  %v1007 = vshrl.u32 %v846, 16
  %v1009 = vrot.slane %v1007, 4
  %v1010 = vor.u32 %v1009, %v1005
  %v1011 = vrot.slane %v1010, 4
  %v1013 = vshll.u32 %v847, 16
  %v1015 = vrot.slane %v1013, 5
  %v1016 = vsel %vm852, %v1011, %v1015
  %v1017 = vshrl.u32 %v847, 16
  %v1019 = vrot.slane %v1017, 4
  %v1020 = vor.u32 %v1019, %v1015
  %v1021 = vrot.slane %v1020, 4
  %v1023 = vshll.u32 %v848, 16
  %v1025 = vrot.slane %v1023, 5
  %v1026 = vsel %vm852, %v1021, %v1025
  %v1027 = vshrl.u32 %v848, 16
  %v1029 = vrot.slane %v1027, 4
  %v1030 = vor.u32 %v1029, %v1025
  %v1031 = vrot.slane %v1030, 4
  %v1033 = vshll.u32 %v849, 16
  %v1035 = vrot.slane %v1033, 5
  %v1036 = vsel %vm852, %v1031, %v1035
  %1055 = vst [vmem:[#allocation2 + $0x4] sm:$0xf] %v866
  %1056 = vst [vmem:[#allocation2 + $0x20] sm:$0xf] %v876
  %1057 = vst [vmem:[#allocation2 + $0x3c] sm:$0xf] %v886
  %1058 = vst [vmem:[#allocation2 + $0x58] sm:$0xf] %v896
  %1059 = vst [vmem:[#allocation2 + $0x74] sm:$0xf] %v906
  %1060 = vst [vmem:[#allocation2 + $0x90] sm:$0xf] %v916
  %1061 = vst [vmem:[#allocation2 + $0xac] sm:$0xf] %v926
  %1062 = vst [vmem:[#allocation2 + $0xc8] sm:$0xf] %v936
  %1063 = vst [vmem:[#allocation2 + $0xe4] sm:$0xf] %v946
  %1064 = vst [vmem:[#allocation2 + $0x100] sm:$0xf] %v956
  %1065 = vst [vmem:[#allocation2 + $0x11c] sm:$0xf] %v966
  %1066 = vst [vmem:[#allocation2 + $0x138] sm:$0xf] %v976
  %1067 = vst [vmem:[#allocation2 + $0x154] sm:$0xf] %v986
  %1068 = vst [vmem:[#allocation2 + $0x170] sm:$0xf] %v996
  %1069 = vst [vmem:[#allocation2 + $0x18c] sm:$0xf] %v1006
  %1070 = vst [vmem:[#allocation2 + $0x1a8] sm:$0xf] %v1016
  %1071 = vst [vmem:[#allocation2 + $0x1c4] sm:$0xf] %v1026
  %1072 = vst [vmem:[#allocation2 + $0x1e0] sm:$0xf] %v1036
  %v1073 = vld [vmem:[%s0] sm:$0xe]
  %v1074 = vld [vmem:[%s0 + $0x4] sm:$0xf]
  %v1075 = vld [vmem:[%s0 + $0x8] sm:$0xf]
  %v1076 = vld [vmem:[%s0 + $0xc] sm:$0xf]
  %v1077 = vld [vmem:[%s0 + $0x10] sm:$0xf]
  %v1078 = vld [vmem:[%s0 + $0x14] sm:$0xf]
  %v1079 = vld [vmem:[%s0 + $0x18] sm:$0xf]
  %v1080 = vld [vmem:[%s0 + $0x1c] sm:$0xf]
  %v1081 = vld [vmem:[%s0 + $0x20] sm:$0xf]
  %v1082 = vld [vmem:[%s0 + $0x24] sm:$0xf]
  %v1083 = vld [vmem:[%s0 + $0x28] sm:$0xf]
  %v1084 = vld [vmem:[%s0 + $0x2c] sm:$0xf]
  %v1085 = vld [vmem:[%s0 + $0x30] sm:$0xf]
  %v1086 = vld [vmem:[%s0 + $0x34] sm:$0xf]
  %v1087 = vld [vmem:[%s0 + $0x38] sm:$0xf]
  %v1088 = vld [vmem:[%s0 + $0x3c] sm:$0xf]
  %v1089 = vld [vmem:[%s0 + $0x40] sm:$0xf]
  %v1090 = vld [vmem:[%s0 + $0x44] sm:$0xf]
  %v1091 = vld [vmem:[%s0 + $0x48] sm:$0x1]
  %v1092 = vadd.s32 %v359, 4294967295
  %v1093 = vadd.s32 %v360, 4294967295
  %v1094 = vadd.s32 %v361, 4294967295
  %v1095 = vadd.s32 %v362, 4294967295
  %v1096 = vadd.s32 %v363, 4294967295
  %v1097 = vadd.s32 %v364, 4294967295
  %v1098 = vadd.s32 %v365, 4294967295
  %v1099 = vadd.s32 %v366, 4294967295
  %v1100 = vadd.s32 %v367, 4294967295
  %v1101 = vadd.s32 %v368, 4294967295
  %v1102 = vadd.s32 %v369, 4294967295
  %v1103 = vadd.s32 %v370, 4294967295
  %v1104 = vadd.s32 %v371, 4294967295
  %v1105 = vadd.s32 %v372, 4294967295
  %v1106 = vadd.s32 %v373, 4294967295
  %v1107 = vadd.s32 %v374, 4294967295
  %v1108 = vadd.s32 %v375, 4294967295
  %v1109 = vadd.s32 %v376, 4294967295
  %vm1110 = vcmp.ge.s32.totalorder %v1092, 0
  %vm1111 = vcmp.ge.s32.totalorder %v1093, 0
  %vm1112 = vcmp.ge.s32.totalorder %v1094, 0
  %vm1113 = vcmp.ge.s32.totalorder %v1095, 0
  %vm1114 = vcmp.ge.s32.totalorder %v1096, 0
  %vm1115 = vcmp.ge.s32.totalorder %v1097, 0
  %vm1116 = vcmp.ge.s32.totalorder %v1098, 0
  %vm1117 = vcmp.ge.s32.totalorder %v1099, 0
  %vm1118 = vcmp.ge.s32.totalorder %v1100, 0
  %vm1119 = vcmp.ge.s32.totalorder %v1101, 0
  %vm1120 = vcmp.ge.s32.totalorder %v1102, 0
  %vm1121 = vcmp.ge.s32.totalorder %v1103, 0
  %vm1122 = vcmp.ge.s32.totalorder %v1104, 0
  %vm1123 = vcmp.ge.s32.totalorder %v1105, 0
  %vm1124 = vcmp.ge.s32.totalorder %v1106, 0
  %vm1125 = vcmp.ge.s32.totalorder %v1107, 0
  %vm1126 = vcmp.ge.s32.totalorder %v1108, 0
  %vm1127 = vcmp.ge.s32.totalorder %v1109, 0
  %vm1128 = vcmp.lt.s32.totalorder %v1092, 12
  %vm1129 = vcmp.lt.s32.totalorder %v1093, 12
  %vm1130 = vcmp.lt.s32.totalorder %v1094, 12
  %vm1131 = vcmp.lt.s32.totalorder %v1095, 12
  %vm1132 = vcmp.lt.s32.totalorder %v1096, 12
  %vm1133 = vcmp.lt.s32.totalorder %v1097, 12
  %vm1134 = vcmp.lt.s32.totalorder %v1098, 12
  %vm1135 = vcmp.lt.s32.totalorder %v1099, 12
  %vm1136 = vcmp.lt.s32.totalorder %v1100, 12
  %vm1137 = vcmp.lt.s32.totalorder %v1101, 12
  %vm1138 = vcmp.lt.s32.totalorder %v1102, 12
  %vm1139 = vcmp.lt.s32.totalorder %v1103, 12
  %vm1140 = vcmp.lt.s32.totalorder %v1104, 12
  %vm1141 = vcmp.lt.s32.totalorder %v1105, 12
  %vm1142 = vcmp.lt.s32.totalorder %v1106, 12
  %vm1143 = vcmp.lt.s32.totalorder %v1107, 12
  %vm1144 = vcmp.lt.s32.totalorder %v1108, 12
  %vm1145 = vcmp.lt.s32.totalorder %v1109, 12
  %vm1146 = vmand %vm1110, %vm1128
  %vm1147 = vmand %vm1111, %vm1129
  %vm1148 = vmand %vm1112, %vm1130
  %vm1149 = vmand %vm1113, %vm1131
  %vm1150 = vmand %vm1114, %vm1132
  %vm1151 = vmand %vm1115, %vm1133
  %vm1152 = vmand %vm1116, %vm1134
  %vm1153 = vmand %vm1117, %vm1135
  %vm1154 = vmand %vm1118, %vm1136
  %vm1155 = vmand %vm1119, %vm1137
  %vm1156 = vmand %vm1120, %vm1138
  %vm1157 = vmand %vm1121, %vm1139
  %vm1158 = vmand %vm1122, %vm1140
  %vm1159 = vmand %vm1123, %vm1141
  %vm1160 = vmand %vm1124, %vm1142
  %vm1161 = vmand %vm1125, %vm1143
  %vm1162 = vmand %vm1126, %vm1144
  %vm1163 = vmand %vm1127, %vm1145
  %vm1164 = vmpackc.low %vm1146, %vm1146
  %vm1165 = vmpackc.low %vm1147, %vm1147
  %vm1166 = vmpackc.low %vm1148, %vm1148
  %vm1167 = vmpackc.low %vm1149, %vm1149
  %vm1168 = vmpackc.low %vm1150, %vm1150
  %vm1169 = vmpackc.low %vm1151, %vm1151
  %vm1170 = vmpackc.low %vm1152, %vm1152
  %vm1171 = vmpackc.low %vm1153, %vm1153
  %vm1172 = vmpackc.low %vm1154, %vm1154
  %vm1173 = vmpackc.low %vm1155, %vm1155
  %vm1174 = vmpackc.low %vm1156, %vm1156
  %vm1175 = vmpackc.low %vm1157, %vm1157
  %vm1176 = vmpackc.low %vm1158, %vm1158
  %vm1177 = vmpackc.low %vm1159, %vm1159
  %vm1178 = vmpackc.low %vm1160, %vm1160
  %vm1179 = vmpackc.low %vm1161, %vm1161
  %vm1180 = vmpackc.low %vm1162, %vm1162
  %vm1181 = vmpackc.low %vm1163, %vm1163
  %v1182 = vsel %vm1164, 65537, 0
  %v1183 = vsel %vm1165, 65537, 0
  %v1184 = vsel %vm1166, 65537, 0
  %v1185 = vsel %vm1167, 65537, 0
  %v1186 = vsel %vm1168, 65537, 0
  %v1187 = vsel %vm1169, 65537, 0
  %v1188 = vsel %vm1170, 65537, 0
  %v1189 = vsel %vm1171, 65537, 0
  %v1190 = vsel %vm1172, 65537, 0
  %v1191 = vsel %vm1173, 65537, 0
  %v1192 = vsel %vm1174, 65537, 0
  %v1193 = vsel %vm1175, 65537, 0
  %v1194 = vsel %vm1176, 65537, 0
  %v1195 = vsel %vm1177, 65537, 0
  %v1196 = vsel %vm1178, 65537, 0
  %v1197 = vsel %vm1179, 65537, 0
  %v1198 = vsel %vm1180, 65537, 0
  %v1199 = vsel %vm1181, 65537, 0
  %vm1200 = vcmask 1040384
  %vm1201 = vcmask 1044484
  %vm1202 = vmor %vm1200, %vm1201
  %v1203 = vrot.slane %v1182, 7
  %v1204 = vrot.slane %v1203, 4
  %v1205 = vrot.slane %v1183, 7
  %v1206 = vsel %vm1202, %v1204, %v1205
  %v1207 = vrot.slane %v1205, 4
  %v1208 = vrot.slane %v1184, 7
  %v1209 = vsel %vm1202, %v1207, %v1208
  %v1210 = vrot.slane %v1208, 4
  %v1211 = vrot.slane %v1185, 7
  %v1212 = vsel %vm1202, %v1210, %v1211
  %v1213 = vrot.slane %v1211, 4
  %v1214 = vrot.slane %v1186, 7
  %v1215 = vsel %vm1202, %v1213, %v1214
  %v1216 = vrot.slane %v1214, 4
  %v1217 = vrot.slane %v1187, 7
  %v1218 = vsel %vm1202, %v1216, %v1217
  %v1219 = vrot.slane %v1217, 4
  %v1220 = vrot.slane %v1188, 7
  %v1221 = vsel %vm1202, %v1219, %v1220
  %v1222 = vrot.slane %v1220, 4
  %v1223 = vrot.slane %v1189, 7
  %v1224 = vsel %vm1202, %v1222, %v1223
  %v1225 = vrot.slane %v1223, 4
  %v1226 = vrot.slane %v1190, 7
  %v1227 = vsel %vm1202, %v1225, %v1226
  %v1228 = vrot.slane %v1226, 4
  %v1229 = vrot.slane %v1191, 7
  %v1230 = vsel %vm1202, %v1228, %v1229
  %v1231 = vrot.slane %v1229, 4
  %v1232 = vrot.slane %v1192, 7
  %v1233 = vsel %vm1202, %v1231, %v1232
  %v1234 = vrot.slane %v1232, 4
  %v1235 = vrot.slane %v1193, 7
  %v1236 = vsel %vm1202, %v1234, %v1235
  %v1237 = vrot.slane %v1235, 4
  %v1238 = vrot.slane %v1194, 7
  %v1239 = vsel %vm1202, %v1237, %v1238
  %v1240 = vrot.slane %v1238, 4
  %v1241 = vrot.slane %v1195, 7
  %v1242 = vsel %vm1202, %v1240, %v1241
  %v1243 = vrot.slane %v1241, 4
  %v1244 = vrot.slane %v1196, 7
  %v1245 = vsel %vm1202, %v1243, %v1244
  %v1246 = vrot.slane %v1244, 4
  %v1247 = vrot.slane %v1197, 7
  %v1248 = vsel %vm1202, %v1246, %v1247
  %v1249 = vrot.slane %v1247, 4
  %v1250 = vrot.slane %v1198, 7
  %v1251 = vsel %vm1202, %v1249, %v1250
  %v1252 = vrot.slane %v1250, 4
  %v1253 = vrot.slane %v1199, 7
  %v1254 = vsel %vm1202, %v1252, %v1253
  %v1255 = vrot.slane %v1253, 4
  %vm1256 = vcmp.ne.s16.totalorder %v1203, 0
  %vm1257 = vcmp.ne.s16.totalorder %v1206, 0
  %vm1258 = vcmp.ne.s16.totalorder %v1209, 0
  %vm1259 = vcmp.ne.s16.totalorder %v1212, 0
  %vm1260 = vcmp.ne.s16.totalorder %v1215, 0
  %vm1261 = vcmp.ne.s16.totalorder %v1218, 0
  %vm1262 = vcmp.ne.s16.totalorder %v1221, 0
  %vm1263 = vcmp.ne.s16.totalorder %v1224, 0
  %vm1264 = vcmp.ne.s16.totalorder %v1227, 0
  %vm1265 = vcmp.ne.s16.totalorder %v1230, 0
  %vm1266 = vcmp.ne.s16.totalorder %v1233, 0
  %vm1267 = vcmp.ne.s16.totalorder %v1236, 0
  %vm1268 = vcmp.ne.s16.totalorder %v1239, 0
  %vm1269 = vcmp.ne.s16.totalorder %v1242, 0
  %vm1270 = vcmp.ne.s16.totalorder %v1245, 0
  %vm1271 = vcmp.ne.s16.totalorder %v1248, 0
  %vm1272 = vcmp.ne.s16.totalorder %v1251, 0
  %vm1273 = vcmp.ne.s16.totalorder %v1254, 0
  %vm1274 = vcmp.ne.s16.totalorder %v1255, 0
  %v1275 = vsel %vm1256, %v1073, 0
  %v1276 = vsel %vm1257, %v1074, 0
  %v1277 = vsel %vm1258, %v1075, 0
  %v1278 = vsel %vm1259, %v1076, 0
  %v1279 = vsel %vm1260, %v1077, 0
  %v1280 = vsel %vm1261, %v1078, 0
  %v1281 = vsel %vm1262, %v1079, 0
  %v1282 = vsel %vm1263, %v1080, 0
  %v1283 = vsel %vm1264, %v1081, 0
  %v1284 = vsel %vm1265, %v1082, 0
  %v1285 = vsel %vm1266, %v1083, 0
  %v1286 = vsel %vm1267, %v1084, 0
  %v1287 = vsel %vm1268, %v1085, 0
  %v1288 = vsel %vm1269, %v1086, 0
  %v1289 = vsel %vm1270, %v1087, 0
  %v1290 = vsel %vm1271, %v1088, 0
  %v1291 = vsel %vm1272, %v1089, 0
  %v1292 = vsel %vm1273, %v1090, 0
  %v1293 = vsel %vm1274, %v1091, 0
  %vm1313 = vcmask 1042432
  %vm1314 = vcmask 1046532
  %vm1315 = vmor %vm1313, %vm1314
  %v1316 = vrot.slane %v1275, 5
  %v1317 = vrot.slane %v1316, 4
  %v1318 = vrot.slane %v1276, 5
  %v1319 = vsel %vm1315, %v1317, %v1318
  %v1320 = vrot.slane %v1318, 4
  %v1321 = vrot.slane %v1277, 5
  %v1322 = vsel %vm1315, %v1320, %v1321
  %v1323 = vrot.slane %v1321, 4
  %v1324 = vrot.slane %v1278, 5
  %v1325 = vsel %vm1315, %v1323, %v1324
  %v1326 = vrot.slane %v1324, 4
  %v1327 = vrot.slane %v1279, 5
  %v1328 = vsel %vm1315, %v1326, %v1327
  %v1329 = vrot.slane %v1327, 4
  %v1330 = vrot.slane %v1280, 5
  %v1331 = vsel %vm1315, %v1329, %v1330
  %v1332 = vrot.slane %v1330, 4
  %v1333 = vrot.slane %v1281, 5
  %v1334 = vsel %vm1315, %v1332, %v1333
  %v1335 = vrot.slane %v1333, 4
  %v1336 = vrot.slane %v1282, 5
  %v1337 = vsel %vm1315, %v1335, %v1336
  %v1338 = vrot.slane %v1336, 4
  %v1339 = vrot.slane %v1283, 5
  %v1340 = vsel %vm1315, %v1338, %v1339
  %v1341 = vrot.slane %v1339, 4
  %v1342 = vrot.slane %v1284, 5
  %v1343 = vsel %vm1315, %v1341, %v1342
  %v1344 = vrot.slane %v1342, 4
  %v1345 = vrot.slane %v1285, 5
  %v1346 = vsel %vm1315, %v1344, %v1345
  %v1347 = vrot.slane %v1345, 4
  %v1348 = vrot.slane %v1286, 5
  %v1349 = vsel %vm1315, %v1347, %v1348
  %v1350 = vrot.slane %v1348, 4
  %v1351 = vrot.slane %v1287, 5
  %v1352 = vsel %vm1315, %v1350, %v1351
  %v1353 = vrot.slane %v1351, 4
  %v1354 = vrot.slane %v1288, 5
  %v1355 = vsel %vm1315, %v1353, %v1354
  %v1356 = vrot.slane %v1354, 4
  %v1357 = vrot.slane %v1289, 5
  %v1358 = vsel %vm1315, %v1356, %v1357
  %v1359 = vrot.slane %v1357, 4
  %v1360 = vrot.slane %v1290, 5
  %v1361 = vsel %vm1315, %v1359, %v1360
  %v1362 = vrot.slane %v1360, 4
  %v1363 = vrot.slane %v1291, 5
  %v1364 = vsel %vm1315, %v1362, %v1363
  %v1365 = vrot.slane %v1363, 4
  %v1366 = vrot.slane %v1292, 5
  %v1367 = vsel %vm1315, %v1365, %v1366
  %v1368 = vrot.slane %v1366, 4
  %v1369 = vrot.slane %v1293, 5
  %v1370 = vsel %vm1315, %v1368, %v1369
  %1389 = vst [vmem:[#allocation2 + $0x8] sm:$0xf] %v1319
  %1390 = vst [vmem:[#allocation2 + $0x24] sm:$0xf] %v1322
  %1391 = vst [vmem:[#allocation2 + $0x40] sm:$0xf] %v1325
  %1392 = vst [vmem:[#allocation2 + $0x5c] sm:$0xf] %v1328
  %1393 = vst [vmem:[#allocation2 + $0x78] sm:$0xf] %v1331
  %1394 = vst [vmem:[#allocation2 + $0x94] sm:$0xf] %v1334
  %1395 = vst [vmem:[#allocation2 + $0xb0] sm:$0xf] %v1337
  %1396 = vst [vmem:[#allocation2 + $0xcc] sm:$0xf] %v1340
  %1397 = vst [vmem:[#allocation2 + $0xe8] sm:$0xf] %v1343
  %1398 = vst [vmem:[#allocation2 + $0x104] sm:$0xf] %v1346
  %1399 = vst [vmem:[#allocation2 + $0x120] sm:$0xf] %v1349
  %1400 = vst [vmem:[#allocation2 + $0x13c] sm:$0xf] %v1352
  %1401 = vst [vmem:[#allocation2 + $0x158] sm:$0xf] %v1355
  %1402 = vst [vmem:[#allocation2 + $0x174] sm:$0xf] %v1358
  %1403 = vst [vmem:[#allocation2 + $0x190] sm:$0xf] %v1361
  %1404 = vst [vmem:[#allocation2 + $0x1ac] sm:$0xf] %v1364
  %1405 = vst [vmem:[#allocation2 + $0x1c8] sm:$0xf] %v1367
  %1406 = vst [vmem:[#allocation2 + $0x1e4] sm:$0xf] %v1370
  %v1407 = vld [vmem:[%s0] sm:$0xe]
  %v1408 = vld [vmem:[%s0 + $0x4] sm:$0xf]
  %v1409 = vld [vmem:[%s0 + $0x8] sm:$0xf]
  %v1410 = vld [vmem:[%s0 + $0xc] sm:$0xf]
  %v1411 = vld [vmem:[%s0 + $0x10] sm:$0xf]
  %v1412 = vld [vmem:[%s0 + $0x14] sm:$0xf]
  %v1413 = vld [vmem:[%s0 + $0x18] sm:$0xf]
  %v1414 = vld [vmem:[%s0 + $0x1c] sm:$0xf]
  %v1415 = vld [vmem:[%s0 + $0x20] sm:$0xf]
  %v1416 = vld [vmem:[%s0 + $0x24] sm:$0xf]
  %v1417 = vld [vmem:[%s0 + $0x28] sm:$0xf]
  %v1418 = vld [vmem:[%s0 + $0x2c] sm:$0xf]
  %v1419 = vld [vmem:[%s0 + $0x30] sm:$0xf]
  %v1420 = vld [vmem:[%s0 + $0x34] sm:$0xf]
  %v1421 = vld [vmem:[%s0 + $0x38] sm:$0xf]
  %v1422 = vld [vmem:[%s0 + $0x3c] sm:$0xf]
  %v1423 = vld [vmem:[%s0 + $0x40] sm:$0xf]
  %v1424 = vld [vmem:[%s0 + $0x44] sm:$0xf]
  %v1425 = vld [vmem:[%s0 + $0x48] sm:$0x3]
  %vm1426 = vsmask.f32 2304
  %vm1427 = vsmask.f32 6416
  %vm1428 = vmor %vm1426, %vm1427
  %v1430 = vshrl.u32 %v1407, 16
  %v1432 = vrot.slane %v1430, 5
  %v1433 = vshll.u32 %v1407, 16
  %v1435 = vrot.slane %v1433, 6
  %v1436 = vor.u32 %v1432, %v1435
  %v1437 = vrot.slane %v1436, 4
  %v1439 = vshrl.u32 %v1408, 16
  %v1441 = vrot.slane %v1439, 5
  %v1442 = vshll.u32 %v1408, 16
  %v1444 = vrot.slane %v1442, 6
  %v1445 = vor.u32 %v1441, %v1444
  %v1446 = vsel %vm1428, %v1437, %v1445
  %v1447 = vrot.slane %v1445, 4
  %v1449 = vshrl.u32 %v1409, 16
  %v1451 = vrot.slane %v1449, 5
  %v1452 = vshll.u32 %v1409, 16
  %v1454 = vrot.slane %v1452, 6
  %v1455 = vor.u32 %v1451, %v1454
  %v1456 = vsel %vm1428, %v1447, %v1455
  %v1457 = vrot.slane %v1455, 4
  %v1459 = vshrl.u32 %v1410, 16
  %v1461 = vrot.slane %v1459, 5
  %v1462 = vshll.u32 %v1410, 16
  %v1464 = vrot.slane %v1462, 6
  %v1465 = vor.u32 %v1461, %v1464
  %v1466 = vsel %vm1428, %v1457, %v1465
  %v1467 = vrot.slane %v1465, 4
  %v1469 = vshrl.u32 %v1411, 16
  %v1471 = vrot.slane %v1469, 5
  %v1472 = vshll.u32 %v1411, 16
  %v1474 = vrot.slane %v1472, 6
  %v1475 = vor.u32 %v1471, %v1474
  %v1476 = vsel %vm1428, %v1467, %v1475
  %v1477 = vrot.slane %v1475, 4
  %v1479 = vshrl.u32 %v1412, 16
  %v1481 = vrot.slane %v1479, 5
  %v1482 = vshll.u32 %v1412, 16
  %v1484 = vrot.slane %v1482, 6
  %v1485 = vor.u32 %v1481, %v1484
  %v1486 = vsel %vm1428, %v1477, %v1485
  %v1487 = vrot.slane %v1485, 4
  %v1489 = vshrl.u32 %v1413, 16
  %v1491 = vrot.slane %v1489, 5
  %v1492 = vshll.u32 %v1413, 16
  %v1494 = vrot.slane %v1492, 6
  %v1495 = vor.u32 %v1491, %v1494
  %v1496 = vsel %vm1428, %v1487, %v1495
  %v1497 = vrot.slane %v1495, 4
  %v1499 = vshrl.u32 %v1414, 16
  %v1501 = vrot.slane %v1499, 5
  %v1502 = vshll.u32 %v1414, 16
  %v1504 = vrot.slane %v1502, 6
  %v1505 = vor.u32 %v1501, %v1504
  %v1506 = vsel %vm1428, %v1497, %v1505
  %v1507 = vrot.slane %v1505, 4
  %v1509 = vshrl.u32 %v1415, 16
  %v1511 = vrot.slane %v1509, 5
  %v1512 = vshll.u32 %v1415, 16
  %v1514 = vrot.slane %v1512, 6
  %v1515 = vor.u32 %v1511, %v1514
  %v1516 = vsel %vm1428, %v1507, %v1515
  %v1517 = vrot.slane %v1515, 4
  %v1519 = vshrl.u32 %v1416, 16
  %v1521 = vrot.slane %v1519, 5
  %v1522 = vshll.u32 %v1416, 16
  %v1524 = vrot.slane %v1522, 6
  %v1525 = vor.u32 %v1521, %v1524
  %v1526 = vsel %vm1428, %v1517, %v1525
  %v1527 = vrot.slane %v1525, 4
  %v1529 = vshrl.u32 %v1417, 16
  %v1531 = vrot.slane %v1529, 5
  %v1532 = vshll.u32 %v1417, 16
  %v1534 = vrot.slane %v1532, 6
  %v1535 = vor.u32 %v1531, %v1534
  %v1536 = vsel %vm1428, %v1527, %v1535
  %v1537 = vrot.slane %v1535, 4
  %v1539 = vshrl.u32 %v1418, 16
  %v1541 = vrot.slane %v1539, 5
  %v1542 = vshll.u32 %v1418, 16
  %v1544 = vrot.slane %v1542, 6
  %v1545 = vor.u32 %v1541, %v1544
  %v1546 = vsel %vm1428, %v1537, %v1545
  %v1547 = vrot.slane %v1545, 4
  %v1549 = vshrl.u32 %v1419, 16
  %v1551 = vrot.slane %v1549, 5
  %v1552 = vshll.u32 %v1419, 16
  %v1554 = vrot.slane %v1552, 6
  %v1555 = vor.u32 %v1551, %v1554
  %v1556 = vsel %vm1428, %v1547, %v1555
  %v1557 = vrot.slane %v1555, 4
  %v1559 = vshrl.u32 %v1420, 16
  %v1561 = vrot.slane %v1559, 5
  %v1562 = vshll.u32 %v1420, 16
  %v1564 = vrot.slane %v1562, 6
  %v1565 = vor.u32 %v1561, %v1564
  %v1566 = vsel %vm1428, %v1557, %v1565
  %v1567 = vrot.slane %v1565, 4
  %v1569 = vshrl.u32 %v1421, 16
  %v1571 = vrot.slane %v1569, 5
  %v1572 = vshll.u32 %v1421, 16
  %v1574 = vrot.slane %v1572, 6
  %v1575 = vor.u32 %v1571, %v1574
  %v1576 = vsel %vm1428, %v1567, %v1575
  %v1577 = vrot.slane %v1575, 4
  %v1579 = vshrl.u32 %v1422, 16
  %v1581 = vrot.slane %v1579, 5
  %v1582 = vshll.u32 %v1422, 16
  %v1584 = vrot.slane %v1582, 6
  %v1585 = vor.u32 %v1581, %v1584
  %v1586 = vsel %vm1428, %v1577, %v1585
  %v1587 = vrot.slane %v1585, 4
  %v1589 = vshrl.u32 %v1423, 16
  %v1591 = vrot.slane %v1589, 5
  %v1592 = vshll.u32 %v1423, 16
  %v1594 = vrot.slane %v1592, 6
  %v1595 = vor.u32 %v1591, %v1594
  %v1596 = vsel %vm1428, %v1587, %v1595
  %v1597 = vrot.slane %v1595, 4
  %v1599 = vshrl.u32 %v1424, 16
  %v1601 = vrot.slane %v1599, 5
  %v1602 = vshll.u32 %v1424, 16
  %v1604 = vrot.slane %v1602, 6
  %v1605 = vor.u32 %v1601, %v1604
  %v1606 = vsel %vm1428, %v1597, %v1605
  %v1607 = vrot.slane %v1605, 4
  %v1609 = vshrl.u32 %v1425, 16
  %v1611 = vrot.slane %v1609, 5
  %v1612 = vshll.u32 %v1425, 16
  %v1614 = vrot.slane %v1612, 6
  %v1615 = vor.u32 %v1611, %v1614
  %v1616 = vsel %vm1428, %v1607, %v1615
  %1635 = vst [vmem:[#allocation2 + $0xc] sm:$0xf] %v1446
  %1636 = vst [vmem:[#allocation2 + $0x28] sm:$0xf] %v1456
  %1637 = vst [vmem:[#allocation2 + $0x44] sm:$0xf] %v1466
  %1638 = vst [vmem:[#allocation2 + $0x60] sm:$0xf] %v1476
  %1639 = vst [vmem:[#allocation2 + $0x7c] sm:$0xf] %v1486
  %1640 = vst [vmem:[#allocation2 + $0x98] sm:$0xf] %v1496
  %1641 = vst [vmem:[#allocation2 + $0xb4] sm:$0xf] %v1506
  %1642 = vst [vmem:[#allocation2 + $0xd0] sm:$0xf] %v1516
  %1643 = vst [vmem:[#allocation2 + $0xec] sm:$0xf] %v1526
  %1644 = vst [vmem:[#allocation2 + $0x108] sm:$0xf] %v1536
  %1645 = vst [vmem:[#allocation2 + $0x124] sm:$0xf] %v1546
  %1646 = vst [vmem:[#allocation2 + $0x140] sm:$0xf] %v1556
  %1647 = vst [vmem:[#allocation2 + $0x15c] sm:$0xf] %v1566
  %1648 = vst [vmem:[#allocation2 + $0x178] sm:$0xf] %v1576
  %1649 = vst [vmem:[#allocation2 + $0x194] sm:$0xf] %v1586
  %1650 = vst [vmem:[#allocation2 + $0x1b0] sm:$0xf] %v1596
  %1651 = vst [vmem:[#allocation2 + $0x1cc] sm:$0xf] %v1606
  %1652 = vst [vmem:[#allocation2 + $0x1e8] sm:$0xf] %v1616
  %v1653 = vld [vmem:[%s0] sm:$0xc]
  %v1654 = vld [vmem:[%s0 + $0x4] sm:$0xf]
  %v1655 = vld [vmem:[%s0 + $0x8] sm:$0xf]
  %v1656 = vld [vmem:[%s0 + $0xc] sm:$0xf]
  %v1657 = vld [vmem:[%s0 + $0x10] sm:$0xf]
  %v1658 = vld [vmem:[%s0 + $0x14] sm:$0xf]
  %v1659 = vld [vmem:[%s0 + $0x18] sm:$0xf]
  %v1660 = vld [vmem:[%s0 + $0x1c] sm:$0xf]
  %v1661 = vld [vmem:[%s0 + $0x20] sm:$0xf]
  %v1662 = vld [vmem:[%s0 + $0x24] sm:$0xf]
  %v1663 = vld [vmem:[%s0 + $0x28] sm:$0xf]
  %v1664 = vld [vmem:[%s0 + $0x2c] sm:$0xf]
  %v1665 = vld [vmem:[%s0 + $0x30] sm:$0xf]
  %v1666 = vld [vmem:[%s0 + $0x34] sm:$0xf]
  %v1667 = vld [vmem:[%s0 + $0x38] sm:$0xf]
  %v1668 = vld [vmem:[%s0 + $0x3c] sm:$0xf]
  %v1669 = vld [vmem:[%s0 + $0x40] sm:$0xf]
  %v1670 = vld [vmem:[%s0 + $0x44] sm:$0xf]
  %v1671 = vld [vmem:[%s0 + $0x48] sm:$0x3]
  %v1672 = vadd.s32 %v359, 1
  %v1673 = vadd.s32 %v360, 1
  %v1674 = vadd.s32 %v361, 1
  %v1675 = vadd.s32 %v362, 1
  %v1676 = vadd.s32 %v363, 1
  %v1677 = vadd.s32 %v364, 1
  %v1678 = vadd.s32 %v365, 1
  %v1679 = vadd.s32 %v366, 1
  %v1680 = vadd.s32 %v367, 1
  %v1681 = vadd.s32 %v368, 1
  %v1682 = vadd.s32 %v369, 1
  %v1683 = vadd.s32 %v370, 1
  %v1684 = vadd.s32 %v371, 1
  %v1685 = vadd.s32 %v372, 1
  %v1686 = vadd.s32 %v373, 1
  %v1687 = vadd.s32 %v374, 1
  %v1688 = vadd.s32 %v375, 1
  %v1689 = vadd.s32 %v376, 1
  %vm1690 = vcmp.ge.s32.totalorder %v1672, 0
  %vm1691 = vcmp.ge.s32.totalorder %v1673, 0
  %vm1692 = vcmp.ge.s32.totalorder %v1674, 0
  %vm1693 = vcmp.ge.s32.totalorder %v1675, 0
  %vm1694 = vcmp.ge.s32.totalorder %v1676, 0
  %vm1695 = vcmp.ge.s32.totalorder %v1677, 0
  %vm1696 = vcmp.ge.s32.totalorder %v1678, 0
  %vm1697 = vcmp.ge.s32.totalorder %v1679, 0
  %vm1698 = vcmp.ge.s32.totalorder %v1680, 0
  %vm1699 = vcmp.ge.s32.totalorder %v1681, 0
  %vm1700 = vcmp.ge.s32.totalorder %v1682, 0
  %vm1701 = vcmp.ge.s32.totalorder %v1683, 0
  %vm1702 = vcmp.ge.s32.totalorder %v1684, 0
  %vm1703 = vcmp.ge.s32.totalorder %v1685, 0
  %vm1704 = vcmp.ge.s32.totalorder %v1686, 0
  %vm1705 = vcmp.ge.s32.totalorder %v1687, 0
  %vm1706 = vcmp.ge.s32.totalorder %v1688, 0
  %vm1707 = vcmp.ge.s32.totalorder %v1689, 0
  %vm1708 = vcmp.lt.s32.totalorder %v1672, 12
  %vm1709 = vcmp.lt.s32.totalorder %v1673, 12
  %vm1710 = vcmp.lt.s32.totalorder %v1674, 12
  %vm1711 = vcmp.lt.s32.totalorder %v1675, 12
  %vm1712 = vcmp.lt.s32.totalorder %v1676, 12
  %vm1713 = vcmp.lt.s32.totalorder %v1677, 12
  %vm1714 = vcmp.lt.s32.totalorder %v1678, 12
  %vm1715 = vcmp.lt.s32.totalorder %v1679, 12
  %vm1716 = vcmp.lt.s32.totalorder %v1680, 12
  %vm1717 = vcmp.lt.s32.totalorder %v1681, 12
  %vm1718 = vcmp.lt.s32.totalorder %v1682, 12
  %vm1719 = vcmp.lt.s32.totalorder %v1683, 12
  %vm1720 = vcmp.lt.s32.totalorder %v1684, 12
  %vm1721 = vcmp.lt.s32.totalorder %v1685, 12
  %vm1722 = vcmp.lt.s32.totalorder %v1686, 12
  %vm1723 = vcmp.lt.s32.totalorder %v1687, 12
  %vm1724 = vcmp.lt.s32.totalorder %v1688, 12
  %vm1725 = vcmp.lt.s32.totalorder %v1689, 12
  %vm1726 = vmand %vm1690, %vm1708
  %vm1727 = vmand %vm1691, %vm1709
  %vm1728 = vmand %vm1692, %vm1710
  %vm1729 = vmand %vm1693, %vm1711
  %vm1730 = vmand %vm1694, %vm1712
  %vm1731 = vmand %vm1695, %vm1713
  %vm1732 = vmand %vm1696, %vm1714
  %vm1733 = vmand %vm1697, %vm1715
  %vm1734 = vmand %vm1698, %vm1716
  %vm1735 = vmand %vm1699, %vm1717
  %vm1736 = vmand %vm1700, %vm1718
  %vm1737 = vmand %vm1701, %vm1719
  %vm1738 = vmand %vm1702, %vm1720
  %vm1739 = vmand %vm1703, %vm1721
  %vm1740 = vmand %vm1704, %vm1722
  %vm1741 = vmand %vm1705, %vm1723
  %vm1742 = vmand %vm1706, %vm1724
  %vm1743 = vmand %vm1707, %vm1725
  %vm1744 = vmpackc.low %vm1726, %vm1726
  %vm1745 = vmpackc.low %vm1727, %vm1727
  %vm1746 = vmpackc.low %vm1728, %vm1728
  %vm1747 = vmpackc.low %vm1729, %vm1729
  %vm1748 = vmpackc.low %vm1730, %vm1730
  %vm1749 = vmpackc.low %vm1731, %vm1731
  %vm1750 = vmpackc.low %vm1732, %vm1732
  %vm1751 = vmpackc.low %vm1733, %vm1733
  %vm1752 = vmpackc.low %vm1734, %vm1734
  %vm1753 = vmpackc.low %vm1735, %vm1735
  %vm1754 = vmpackc.low %vm1736, %vm1736
  %vm1755 = vmpackc.low %vm1737, %vm1737
  %vm1756 = vmpackc.low %vm1738, %vm1738
  %vm1757 = vmpackc.low %vm1739, %vm1739
  %vm1758 = vmpackc.low %vm1740, %vm1740
  %vm1759 = vmpackc.low %vm1741, %vm1741
  %vm1760 = vmpackc.low %vm1742, %vm1742
  %vm1761 = vmpackc.low %vm1743, %vm1743
  %v1762 = vsel %vm1744, 65537, 0
  %v1763 = vsel %vm1745, 65537, 0
  %v1764 = vsel %vm1746, 65537, 0
  %v1765 = vsel %vm1747, 65537, 0
  %v1766 = vsel %vm1748, 65537, 0
  %v1767 = vsel %vm1749, 65537, 0
  %v1768 = vsel %vm1750, 65537, 0
  %v1769 = vsel %vm1751, 65537, 0
  %v1770 = vsel %vm1752, 65537, 0
  %v1771 = vsel %vm1753, 65537, 0
  %v1772 = vsel %vm1754, 65537, 0
  %v1773 = vsel %vm1755, 65537, 0
  %v1774 = vsel %vm1756, 65537, 0
  %v1775 = vsel %vm1757, 65537, 0
  %v1776 = vsel %vm1758, 65537, 0
  %v1777 = vsel %vm1759, 65537, 0
  %v1778 = vsel %vm1760, 65537, 0
  %v1779 = vsel %vm1761, 65537, 0
  %vm1780 = vcmask 1041408
  %vm1781 = vcmask 1045508
  %vm1782 = vmor %vm1780, %vm1781
  %v1783 = vrot.slane %v1762, 6
  %v1784 = vrot.slane %v1783, 4
  %v1785 = vrot.slane %v1763, 6
  %v1786 = vsel %vm1782, %v1784, %v1785
  %v1787 = vrot.slane %v1785, 4
  %v1788 = vrot.slane %v1764, 6
  %v1789 = vsel %vm1782, %v1787, %v1788
  %v1790 = vrot.slane %v1788, 4
  %v1791 = vrot.slane %v1765, 6
  %v1792 = vsel %vm1782, %v1790, %v1791
  %v1793 = vrot.slane %v1791, 4
  %v1794 = vrot.slane %v1766, 6
  %v1795 = vsel %vm1782, %v1793, %v1794
  %v1796 = vrot.slane %v1794, 4
  %v1797 = vrot.slane %v1767, 6
  %v1798 = vsel %vm1782, %v1796, %v1797
  %v1799 = vrot.slane %v1797, 4
  %v1800 = vrot.slane %v1768, 6
  %v1801 = vsel %vm1782, %v1799, %v1800
  %v1802 = vrot.slane %v1800, 4
  %v1803 = vrot.slane %v1769, 6
  %v1804 = vsel %vm1782, %v1802, %v1803
  %v1805 = vrot.slane %v1803, 4
  %v1806 = vrot.slane %v1770, 6
  %v1807 = vsel %vm1782, %v1805, %v1806
  %v1808 = vrot.slane %v1806, 4
  %v1809 = vrot.slane %v1771, 6
  %v1810 = vsel %vm1782, %v1808, %v1809
  %v1811 = vrot.slane %v1809, 4
  %v1812 = vrot.slane %v1772, 6
  %v1813 = vsel %vm1782, %v1811, %v1812
  %v1814 = vrot.slane %v1812, 4
  %v1815 = vrot.slane %v1773, 6
  %v1816 = vsel %vm1782, %v1814, %v1815
  %v1817 = vrot.slane %v1815, 4
  %v1818 = vrot.slane %v1774, 6
  %v1819 = vsel %vm1782, %v1817, %v1818
  %v1820 = vrot.slane %v1818, 4
  %v1821 = vrot.slane %v1775, 6
  %v1822 = vsel %vm1782, %v1820, %v1821
  %v1823 = vrot.slane %v1821, 4
  %v1824 = vrot.slane %v1776, 6
  %v1825 = vsel %vm1782, %v1823, %v1824
  %v1826 = vrot.slane %v1824, 4
  %v1827 = vrot.slane %v1777, 6
  %v1828 = vsel %vm1782, %v1826, %v1827
  %v1829 = vrot.slane %v1827, 4
  %v1830 = vrot.slane %v1778, 6
  %v1831 = vsel %vm1782, %v1829, %v1830
  %v1832 = vrot.slane %v1830, 4
  %v1833 = vrot.slane %v1779, 6
  %v1834 = vsel %vm1782, %v1832, %v1833
  %v1835 = vrot.slane %v1833, 4
  %vm1836 = vcmp.ne.s16.totalorder %v1783, 0
  %vm1837 = vcmp.ne.s16.totalorder %v1786, 0
  %vm1838 = vcmp.ne.s16.totalorder %v1789, 0
  %vm1839 = vcmp.ne.s16.totalorder %v1792, 0
  %vm1840 = vcmp.ne.s16.totalorder %v1795, 0
  %vm1841 = vcmp.ne.s16.totalorder %v1798, 0
  %vm1842 = vcmp.ne.s16.totalorder %v1801, 0
  %vm1843 = vcmp.ne.s16.totalorder %v1804, 0
  %vm1844 = vcmp.ne.s16.totalorder %v1807, 0
  %vm1845 = vcmp.ne.s16.totalorder %v1810, 0
  %vm1846 = vcmp.ne.s16.totalorder %v1813, 0
  %vm1847 = vcmp.ne.s16.totalorder %v1816, 0
  %vm1848 = vcmp.ne.s16.totalorder %v1819, 0
  %vm1849 = vcmp.ne.s16.totalorder %v1822, 0
  %vm1850 = vcmp.ne.s16.totalorder %v1825, 0
  %vm1851 = vcmp.ne.s16.totalorder %v1828, 0
  %vm1852 = vcmp.ne.s16.totalorder %v1831, 0
  %vm1853 = vcmp.ne.s16.totalorder %v1834, 0
  %vm1854 = vcmp.ne.s16.totalorder %v1835, 0
  %v1855 = vsel %vm1836, %v1653, 0
  %v1856 = vsel %vm1837, %v1654, 0
  %v1857 = vsel %vm1838, %v1655, 0
  %v1858 = vsel %vm1839, %v1656, 0
  %v1859 = vsel %vm1840, %v1657, 0
  %v1860 = vsel %vm1841, %v1658, 0
  %v1861 = vsel %vm1842, %v1659, 0
  %v1862 = vsel %vm1843, %v1660, 0
  %v1863 = vsel %vm1844, %v1661, 0
  %v1864 = vsel %vm1845, %v1662, 0
  %v1865 = vsel %vm1846, %v1663, 0
  %v1866 = vsel %vm1847, %v1664, 0
  %v1867 = vsel %vm1848, %v1665, 0
  %v1868 = vsel %vm1849, %v1666, 0
  %v1869 = vsel %vm1850, %v1667, 0
  %v1870 = vsel %vm1851, %v1668, 0
  %v1871 = vsel %vm1852, %v1669, 0
  %v1872 = vsel %vm1853, %v1670, 0
  %v1873 = vsel %vm1854, %v1671, 0
  %v1893 = vrot.slane %v1855, 6
  %v1894 = vrot.slane %v1893, 4
  %v1895 = vrot.slane %v1856, 6
  %v1896 = vsel %vm1782, %v1894, %v1895
  %v1897 = vrot.slane %v1895, 4
  %v1898 = vrot.slane %v1857, 6
  %v1899 = vsel %vm1782, %v1897, %v1898
  %v1900 = vrot.slane %v1898, 4
  %v1901 = vrot.slane %v1858, 6
  %v1902 = vsel %vm1782, %v1900, %v1901
  %v1903 = vrot.slane %v1901, 4
  %v1904 = vrot.slane %v1859, 6
  %v1905 = vsel %vm1782, %v1903, %v1904
  %v1906 = vrot.slane %v1904, 4
  %v1907 = vrot.slane %v1860, 6
  %v1908 = vsel %vm1782, %v1906, %v1907
  %v1909 = vrot.slane %v1907, 4
  %v1910 = vrot.slane %v1861, 6
  %v1911 = vsel %vm1782, %v1909, %v1910
  %v1912 = vrot.slane %v1910, 4
  %v1913 = vrot.slane %v1862, 6
  %v1914 = vsel %vm1782, %v1912, %v1913
  %v1915 = vrot.slane %v1913, 4
  %v1916 = vrot.slane %v1863, 6
  %v1917 = vsel %vm1782, %v1915, %v1916
  %v1918 = vrot.slane %v1916, 4
  %v1919 = vrot.slane %v1864, 6
  %v1920 = vsel %vm1782, %v1918, %v1919
  %v1921 = vrot.slane %v1919, 4
  %v1922 = vrot.slane %v1865, 6
  %v1923 = vsel %vm1782, %v1921, %v1922
  %v1924 = vrot.slane %v1922, 4
  %v1925 = vrot.slane %v1866, 6
  %v1926 = vsel %vm1782, %v1924, %v1925
  %v1927 = vrot.slane %v1925, 4
  %v1928 = vrot.slane %v1867, 6
  %v1929 = vsel %vm1782, %v1927, %v1928
  %v1930 = vrot.slane %v1928, 4
  %v1931 = vrot.slane %v1868, 6
  %v1932 = vsel %vm1782, %v1930, %v1931
  %v1933 = vrot.slane %v1931, 4
  %v1934 = vrot.slane %v1869, 6
  %v1935 = vsel %vm1782, %v1933, %v1934
  %v1936 = vrot.slane %v1934, 4
  %v1937 = vrot.slane %v1870, 6
  %v1938 = vsel %vm1782, %v1936, %v1937
  %v1939 = vrot.slane %v1937, 4
  %v1940 = vrot.slane %v1871, 6
  %v1941 = vsel %vm1782, %v1939, %v1940
  %v1942 = vrot.slane %v1940, 4
  %v1943 = vrot.slane %v1872, 6
  %v1944 = vsel %vm1782, %v1942, %v1943
  %v1945 = vrot.slane %v1943, 4
  %v1946 = vrot.slane %v1873, 6
  %v1947 = vsel %vm1782, %v1945, %v1946
  %1966 = vst [vmem:[#allocation2 + $0x10] sm:$0xf] %v1896
  %1967 = vst [vmem:[#allocation2 + $0x2c] sm:$0xf] %v1899
  %1968 = vst [vmem:[#allocation2 + $0x48] sm:$0xf] %v1902
  %1969 = vst [vmem:[#allocation2 + $0x64] sm:$0xf] %v1905
  %1970 = vst [vmem:[#allocation2 + $0x80] sm:$0xf] %v1908
  %1971 = vst [vmem:[#allocation2 + $0x9c] sm:$0xf] %v1911
  %1972 = vst [vmem:[#allocation2 + $0xb8] sm:$0xf] %v1914
  %1973 = vst [vmem:[#allocation2 + $0xd4] sm:$0xf] %v1917
  %1974 = vst [vmem:[#allocation2 + $0xf0] sm:$0xf] %v1920
  %1975 = vst [vmem:[#allocation2 + $0x10c] sm:$0xf] %v1923
  %1976 = vst [vmem:[#allocation2 + $0x128] sm:$0xf] %v1926
  %1977 = vst [vmem:[#allocation2 + $0x144] sm:$0xf] %v1929
  %1978 = vst [vmem:[#allocation2 + $0x160] sm:$0xf] %v1932
  %1979 = vst [vmem:[#allocation2 + $0x17c] sm:$0xf] %v1935
  %1980 = vst [vmem:[#allocation2 + $0x198] sm:$0xf] %v1938
  %1981 = vst [vmem:[#allocation2 + $0x1b4] sm:$0xf] %v1941
  %1982 = vst [vmem:[#allocation2 + $0x1d0] sm:$0xf] %v1944
  %1983 = vst [vmem:[#allocation2 + $0x1ec] sm:$0xf] %v1947
  %v1984 = vld [vmem:[%s0] sm:$0xc]
  %v1985 = vld [vmem:[%s0 + $0x4] sm:$0xf]
  %v1986 = vld [vmem:[%s0 + $0x8] sm:$0xf]
  %v1987 = vld [vmem:[%s0 + $0xc] sm:$0xf]
  %v1988 = vld [vmem:[%s0 + $0x10] sm:$0xf]
  %v1989 = vld [vmem:[%s0 + $0x14] sm:$0xf]
  %v1990 = vld [vmem:[%s0 + $0x18] sm:$0xf]
  %v1991 = vld [vmem:[%s0 + $0x1c] sm:$0xf]
  %v1992 = vld [vmem:[%s0 + $0x20] sm:$0xf]
  %v1993 = vld [vmem:[%s0 + $0x24] sm:$0xf]
  %v1994 = vld [vmem:[%s0 + $0x28] sm:$0xf]
  %v1995 = vld [vmem:[%s0 + $0x2c] sm:$0xf]
  %v1996 = vld [vmem:[%s0 + $0x30] sm:$0xf]
  %v1997 = vld [vmem:[%s0 + $0x34] sm:$0xf]
  %v1998 = vld [vmem:[%s0 + $0x38] sm:$0xf]
  %v1999 = vld [vmem:[%s0 + $0x3c] sm:$0xf]
  %v2000 = vld [vmem:[%s0 + $0x40] sm:$0xf]
  %v2001 = vld [vmem:[%s0 + $0x44] sm:$0xf]
  %v2002 = vld [vmem:[%s0 + $0x48] sm:$0x7]
  %v2003 = vadd.s32 %v359, 2
  %v2004 = vadd.s32 %v360, 2
  %v2005 = vadd.s32 %v361, 2
  %v2006 = vadd.s32 %v362, 2
  %v2007 = vadd.s32 %v363, 2
  %v2008 = vadd.s32 %v364, 2
  %v2009 = vadd.s32 %v365, 2
  %v2010 = vadd.s32 %v366, 2
  %v2011 = vadd.s32 %v367, 2
  %v2012 = vadd.s32 %v368, 2
  %v2013 = vadd.s32 %v369, 2
  %v2014 = vadd.s32 %v370, 2
  %v2015 = vadd.s32 %v371, 2
  %v2016 = vadd.s32 %v372, 2
  %v2017 = vadd.s32 %v373, 2
  %v2018 = vadd.s32 %v374, 2
  %v2019 = vadd.s32 %v375, 2
  %v2020 = vadd.s32 %v376, 2
  %vm2021 = vcmp.ge.s32.totalorder %v2003, 0
  %vm2022 = vcmp.ge.s32.totalorder %v2004, 0
  %vm2023 = vcmp.ge.s32.totalorder %v2005, 0
  %vm2024 = vcmp.ge.s32.totalorder %v2006, 0
  %vm2025 = vcmp.ge.s32.totalorder %v2007, 0
  %vm2026 = vcmp.ge.s32.totalorder %v2008, 0
  %vm2027 = vcmp.ge.s32.totalorder %v2009, 0
  %vm2028 = vcmp.ge.s32.totalorder %v2010, 0
  %vm2029 = vcmp.ge.s32.totalorder %v2011, 0
  %vm2030 = vcmp.ge.s32.totalorder %v2012, 0
  %vm2031 = vcmp.ge.s32.totalorder %v2013, 0
  %vm2032 = vcmp.ge.s32.totalorder %v2014, 0
  %vm2033 = vcmp.ge.s32.totalorder %v2015, 0
  %vm2034 = vcmp.ge.s32.totalorder %v2016, 0
  %vm2035 = vcmp.ge.s32.totalorder %v2017, 0
  %vm2036 = vcmp.ge.s32.totalorder %v2018, 0
  %vm2037 = vcmp.ge.s32.totalorder %v2019, 0
  %vm2038 = vcmp.ge.s32.totalorder %v2020, 0
  %vm2039 = vcmp.lt.s32.totalorder %v2003, 12
  %vm2040 = vcmp.lt.s32.totalorder %v2004, 12
  %vm2041 = vcmp.lt.s32.totalorder %v2005, 12
  %vm2042 = vcmp.lt.s32.totalorder %v2006, 12
  %vm2043 = vcmp.lt.s32.totalorder %v2007, 12
  %vm2044 = vcmp.lt.s32.totalorder %v2008, 12
  %vm2045 = vcmp.lt.s32.totalorder %v2009, 12
  %vm2046 = vcmp.lt.s32.totalorder %v2010, 12
  %vm2047 = vcmp.lt.s32.totalorder %v2011, 12
  %vm2048 = vcmp.lt.s32.totalorder %v2012, 12
  %vm2049 = vcmp.lt.s32.totalorder %v2013, 12
  %vm2050 = vcmp.lt.s32.totalorder %v2014, 12
  %vm2051 = vcmp.lt.s32.totalorder %v2015, 12
  %vm2052 = vcmp.lt.s32.totalorder %v2016, 12
  %vm2053 = vcmp.lt.s32.totalorder %v2017, 12
  %vm2054 = vcmp.lt.s32.totalorder %v2018, 12
  %vm2055 = vcmp.lt.s32.totalorder %v2019, 12
  %vm2056 = vcmp.lt.s32.totalorder %v2020, 12
  %vm2057 = vmand %vm2021, %vm2039
  %vm2058 = vmand %vm2022, %vm2040
  %vm2059 = vmand %vm2023, %vm2041
  %vm2060 = vmand %vm2024, %vm2042
  %vm2061 = vmand %vm2025, %vm2043
  %vm2062 = vmand %vm2026, %vm2044
  %vm2063 = vmand %vm2027, %vm2045
  %vm2064 = vmand %vm2028, %vm2046
  %vm2065 = vmand %vm2029, %vm2047
  %vm2066 = vmand %vm2030, %vm2048
  %vm2067 = vmand %vm2031, %vm2049
  %vm2068 = vmand %vm2032, %vm2050
  %vm2069 = vmand %vm2033, %vm2051
  %vm2070 = vmand %vm2034, %vm2052
  %vm2071 = vmand %vm2035, %vm2053
  %vm2072 = vmand %vm2036, %vm2054
  %vm2073 = vmand %vm2037, %vm2055
  %vm2074 = vmand %vm2038, %vm2056
  %vm2075 = vmpackc.low %vm2057, %vm2057
  %vm2076 = vmpackc.low %vm2058, %vm2058
  %vm2077 = vmpackc.low %vm2059, %vm2059
  %vm2078 = vmpackc.low %vm2060, %vm2060
  %vm2079 = vmpackc.low %vm2061, %vm2061
  %vm2080 = vmpackc.low %vm2062, %vm2062
  %vm2081 = vmpackc.low %vm2063, %vm2063
  %vm2082 = vmpackc.low %vm2064, %vm2064
  %vm2083 = vmpackc.low %vm2065, %vm2065
  %vm2084 = vmpackc.low %vm2066, %vm2066
  %vm2085 = vmpackc.low %vm2067, %vm2067
  %vm2086 = vmpackc.low %vm2068, %vm2068
  %vm2087 = vmpackc.low %vm2069, %vm2069
  %vm2088 = vmpackc.low %vm2070, %vm2070
  %vm2089 = vmpackc.low %vm2071, %vm2071
  %vm2090 = vmpackc.low %vm2072, %vm2072
  %vm2091 = vmpackc.low %vm2073, %vm2073
  %vm2092 = vmpackc.low %vm2074, %vm2074
  %v2093 = vsel %vm2075, 65537, 0
  %v2094 = vsel %vm2076, 65537, 0
  %v2095 = vsel %vm2077, 65537, 0
  %v2096 = vsel %vm2078, 65537, 0
  %v2097 = vsel %vm2079, 65537, 0
  %v2098 = vsel %vm2080, 65537, 0
  %v2099 = vsel %vm2081, 65537, 0
  %v2100 = vsel %vm2082, 65537, 0
  %v2101 = vsel %vm2083, 65537, 0
  %v2102 = vsel %vm2084, 65537, 0
  %v2103 = vsel %vm2085, 65537, 0
  %v2104 = vsel %vm2086, 65537, 0
  %v2105 = vsel %vm2087, 65537, 0
  %v2106 = vsel %vm2088, 65537, 0
  %v2107 = vsel %vm2089, 65537, 0
  %v2108 = vsel %vm2090, 65537, 0
  %v2109 = vsel %vm2091, 65537, 0
  %v2110 = vsel %vm2092, 65537, 0
  %v2112 = vshrl.u32 %v2093, 16
  %v2114 = vrot.slane %v2112, 5
  %v2115 = vshll.u32 %v2093, 16
  %v2117 = vrot.slane %v2115, 6
  %v2118 = vor.u32 %v2114, %v2117
  %v2119 = vrot.slane %v2118, 4
  %v2121 = vshrl.u32 %v2094, 16
  %v2123 = vrot.slane %v2121, 5
  %v2124 = vshll.u32 %v2094, 16
  %v2126 = vrot.slane %v2124, 6
  %v2127 = vor.u32 %v2123, %v2126
  %v2128 = vsel %vm1428, %v2119, %v2127
  %v2129 = vrot.slane %v2127, 4
  %v2131 = vshrl.u32 %v2095, 16
  %v2133 = vrot.slane %v2131, 5
  %v2134 = vshll.u32 %v2095, 16
  %v2136 = vrot.slane %v2134, 6
  %v2137 = vor.u32 %v2133, %v2136
  %v2138 = vsel %vm1428, %v2129, %v2137
  %v2139 = vrot.slane %v2137, 4
  %v2141 = vshrl.u32 %v2096, 16
  %v2143 = vrot.slane %v2141, 5
  %v2144 = vshll.u32 %v2096, 16
  %v2146 = vrot.slane %v2144, 6
  %v2147 = vor.u32 %v2143, %v2146
  %v2148 = vsel %vm1428, %v2139, %v2147
  %v2149 = vrot.slane %v2147, 4
  %v2151 = vshrl.u32 %v2097, 16
  %v2153 = vrot.slane %v2151, 5
  %v2154 = vshll.u32 %v2097, 16
  %v2156 = vrot.slane %v2154, 6
  %v2157 = vor.u32 %v2153, %v2156
  %v2158 = vsel %vm1428, %v2149, %v2157
  %v2159 = vrot.slane %v2157, 4
  %v2161 = vshrl.u32 %v2098, 16
  %v2163 = vrot.slane %v2161, 5
  %v2164 = vshll.u32 %v2098, 16
  %v2166 = vrot.slane %v2164, 6
  %v2167 = vor.u32 %v2163, %v2166
  %v2168 = vsel %vm1428, %v2159, %v2167
  %v2169 = vrot.slane %v2167, 4
  %v2171 = vshrl.u32 %v2099, 16
  %v2173 = vrot.slane %v2171, 5
  %v2174 = vshll.u32 %v2099, 16
  %v2176 = vrot.slane %v2174, 6
  %v2177 = vor.u32 %v2173, %v2176
  %v2178 = vsel %vm1428, %v2169, %v2177
  %v2179 = vrot.slane %v2177, 4
  %v2181 = vshrl.u32 %v2100, 16
  %v2183 = vrot.slane %v2181, 5
  %v2184 = vshll.u32 %v2100, 16
  %v2186 = vrot.slane %v2184, 6
  %v2187 = vor.u32 %v2183, %v2186
  %v2188 = vsel %vm1428, %v2179, %v2187
  %v2189 = vrot.slane %v2187, 4
  %v2191 = vshrl.u32 %v2101, 16
  %v2193 = vrot.slane %v2191, 5
  %v2194 = vshll.u32 %v2101, 16
  %v2196 = vrot.slane %v2194, 6
  %v2197 = vor.u32 %v2193, %v2196
  %v2198 = vsel %vm1428, %v2189, %v2197
  %v2199 = vrot.slane %v2197, 4
  %v2201 = vshrl.u32 %v2102, 16
  %v2203 = vrot.slane %v2201, 5
  %v2204 = vshll.u32 %v2102, 16
  %v2206 = vrot.slane %v2204, 6
  %v2207 = vor.u32 %v2203, %v2206
  %v2208 = vsel %vm1428, %v2199, %v2207
  %v2209 = vrot.slane %v2207, 4
  %v2211 = vshrl.u32 %v2103, 16
  %v2213 = vrot.slane %v2211, 5
  %v2214 = vshll.u32 %v2103, 16
  %v2216 = vrot.slane %v2214, 6
  %v2217 = vor.u32 %v2213, %v2216
  %v2218 = vsel %vm1428, %v2209, %v2217
  %v2219 = vrot.slane %v2217, 4
  %v2221 = vshrl.u32 %v2104, 16
  %v2223 = vrot.slane %v2221, 5
  %v2224 = vshll.u32 %v2104, 16
  %v2226 = vrot.slane %v2224, 6
  %v2227 = vor.u32 %v2223, %v2226
  %v2228 = vsel %vm1428, %v2219, %v2227
  %v2229 = vrot.slane %v2227, 4
  %v2231 = vshrl.u32 %v2105, 16
  %v2233 = vrot.slane %v2231, 5
  %v2234 = vshll.u32 %v2105, 16
  %v2236 = vrot.slane %v2234, 6
  %v2237 = vor.u32 %v2233, %v2236
  %v2238 = vsel %vm1428, %v2229, %v2237
  %v2239 = vrot.slane %v2237, 4
  %v2241 = vshrl.u32 %v2106, 16
  %v2243 = vrot.slane %v2241, 5
  %v2244 = vshll.u32 %v2106, 16
  %v2246 = vrot.slane %v2244, 6
  %v2247 = vor.u32 %v2243, %v2246
  %v2248 = vsel %vm1428, %v2239, %v2247
  %v2249 = vrot.slane %v2247, 4
  %v2251 = vshrl.u32 %v2107, 16
  %v2253 = vrot.slane %v2251, 5
  %v2254 = vshll.u32 %v2107, 16
  %v2256 = vrot.slane %v2254, 6
  %v2257 = vor.u32 %v2253, %v2256
  %v2258 = vsel %vm1428, %v2249, %v2257
  %v2259 = vrot.slane %v2257, 4
  %v2261 = vshrl.u32 %v2108, 16
  %v2263 = vrot.slane %v2261, 5
  %v2264 = vshll.u32 %v2108, 16
  %v2266 = vrot.slane %v2264, 6
  %v2267 = vor.u32 %v2263, %v2266
  %v2268 = vsel %vm1428, %v2259, %v2267
  %v2269 = vrot.slane %v2267, 4
  %v2271 = vshrl.u32 %v2109, 16
  %v2273 = vrot.slane %v2271, 5
  %v2274 = vshll.u32 %v2109, 16
  %v2276 = vrot.slane %v2274, 6
  %v2277 = vor.u32 %v2273, %v2276
  %v2278 = vsel %vm1428, %v2269, %v2277
  %v2279 = vrot.slane %v2277, 4
  %v2281 = vshrl.u32 %v2110, 16
  %v2283 = vrot.slane %v2281, 5
  %v2284 = vshll.u32 %v2110, 16
  %v2286 = vrot.slane %v2284, 6
  %v2287 = vor.u32 %v2283, %v2286
  %v2288 = vsel %vm1428, %v2279, %v2287
  %v2289 = vrot.slane %v2287, 4
  %vm2290 = vcmp.ne.s16.totalorder %v2118, 0
  %vm2291 = vcmp.ne.s16.totalorder %v2128, 0
  %vm2292 = vcmp.ne.s16.totalorder %v2138, 0
  %vm2293 = vcmp.ne.s16.totalorder %v2148, 0
  %vm2294 = vcmp.ne.s16.totalorder %v2158, 0
  %vm2295 = vcmp.ne.s16.totalorder %v2168, 0
  %vm2296 = vcmp.ne.s16.totalorder %v2178, 0
  %vm2297 = vcmp.ne.s16.totalorder %v2188, 0
  %vm2298 = vcmp.ne.s16.totalorder %v2198, 0
  %vm2299 = vcmp.ne.s16.totalorder %v2208, 0
  %vm2300 = vcmp.ne.s16.totalorder %v2218, 0
  %vm2301 = vcmp.ne.s16.totalorder %v2228, 0
  %vm2302 = vcmp.ne.s16.totalorder %v2238, 0
  %vm2303 = vcmp.ne.s16.totalorder %v2248, 0
  %vm2304 = vcmp.ne.s16.totalorder %v2258, 0
  %vm2305 = vcmp.ne.s16.totalorder %v2268, 0
  %vm2306 = vcmp.ne.s16.totalorder %v2278, 0
  %vm2307 = vcmp.ne.s16.totalorder %v2288, 0
  %vm2308 = vcmp.ne.s16.totalorder %v2289, 0
  %v2309 = vsel %vm2290, %v1984, 0
  %v2310 = vsel %vm2291, %v1985, 0
  %v2311 = vsel %vm2292, %v1986, 0
  %v2312 = vsel %vm2293, %v1987, 0
  %v2313 = vsel %vm2294, %v1988, 0
  %v2314 = vsel %vm2295, %v1989, 0
  %v2315 = vsel %vm2296, %v1990, 0
  %v2316 = vsel %vm2297, %v1991, 0
  %v2317 = vsel %vm2298, %v1992, 0
  %v2318 = vsel %vm2299, %v1993, 0
  %v2319 = vsel %vm2300, %v1994, 0
  %v2320 = vsel %vm2301, %v1995, 0
  %v2321 = vsel %vm2302, %v1996, 0
  %v2322 = vsel %vm2303, %v1997, 0
  %v2323 = vsel %vm2304, %v1998, 0
  %v2324 = vsel %vm2305, %v1999, 0
  %v2325 = vsel %vm2306, %v2000, 0
  %v2326 = vsel %vm2307, %v2001, 0
  %v2327 = vsel %vm2308, %v2002, 0
  %vm2328 = vsmask.f32 1280
  %vm2329 = vsmask.f32 5392
  %vm2330 = vmor %vm2328, %vm2329
  %v2332 = vshrl.u32 %v2309, 16
  %v2334 = vrot.slane %v2332, 6
  %v2335 = vshll.u32 %v2309, 16
  %v2337 = vrot.slane %v2335, 7
  %v2338 = vor.u32 %v2334, %v2337
  %v2339 = vrot.slane %v2338, 4
  %v2341 = vshrl.u32 %v2310, 16
  %v2343 = vrot.slane %v2341, 6
  %v2344 = vshll.u32 %v2310, 16
  %v2346 = vrot.slane %v2344, 7
  %v2347 = vor.u32 %v2343, %v2346
  %v2348 = vsel %vm2330, %v2339, %v2347
  %v2349 = vrot.slane %v2347, 4
  %v2351 = vshrl.u32 %v2311, 16
  %v2353 = vrot.slane %v2351, 6
  %v2354 = vshll.u32 %v2311, 16
  %v2356 = vrot.slane %v2354, 7
  %v2357 = vor.u32 %v2353, %v2356
  %v2358 = vsel %vm2330, %v2349, %v2357
  %v2359 = vrot.slane %v2357, 4
  %v2361 = vshrl.u32 %v2312, 16
  %v2363 = vrot.slane %v2361, 6
  %v2364 = vshll.u32 %v2312, 16
  %v2366 = vrot.slane %v2364, 7
  %v2367 = vor.u32 %v2363, %v2366
  %v2368 = vsel %vm2330, %v2359, %v2367
  %v2369 = vrot.slane %v2367, 4
  %v2371 = vshrl.u32 %v2313, 16
  %v2373 = vrot.slane %v2371, 6
  %v2374 = vshll.u32 %v2313, 16
  %v2376 = vrot.slane %v2374, 7
  %v2377 = vor.u32 %v2373, %v2376
  %v2378 = vsel %vm2330, %v2369, %v2377
  %v2379 = vrot.slane %v2377, 4
  %v2381 = vshrl.u32 %v2314, 16
  %v2383 = vrot.slane %v2381, 6
  %v2384 = vshll.u32 %v2314, 16
  %v2386 = vrot.slane %v2384, 7
  %v2387 = vor.u32 %v2383, %v2386
  %v2388 = vsel %vm2330, %v2379, %v2387
  %v2389 = vrot.slane %v2387, 4
  %v2391 = vshrl.u32 %v2315, 16
  %v2393 = vrot.slane %v2391, 6
  %v2394 = vshll.u32 %v2315, 16
  %v2396 = vrot.slane %v2394, 7
  %v2397 = vor.u32 %v2393, %v2396
  %v2398 = vsel %vm2330, %v2389, %v2397
  %v2399 = vrot.slane %v2397, 4
  %v2401 = vshrl.u32 %v2316, 16
  %v2403 = vrot.slane %v2401, 6
  %v2404 = vshll.u32 %v2316, 16
  %v2406 = vrot.slane %v2404, 7
  %v2407 = vor.u32 %v2403, %v2406
  %v2408 = vsel %vm2330, %v2399, %v2407
  %v2409 = vrot.slane %v2407, 4
  %v2411 = vshrl.u32 %v2317, 16
  %v2413 = vrot.slane %v2411, 6
  %v2414 = vshll.u32 %v2317, 16
  %v2416 = vrot.slane %v2414, 7
  %v2417 = vor.u32 %v2413, %v2416
  %v2418 = vsel %vm2330, %v2409, %v2417
  %v2419 = vrot.slane %v2417, 4
  %v2421 = vshrl.u32 %v2318, 16
  %v2423 = vrot.slane %v2421, 6
  %v2424 = vshll.u32 %v2318, 16
  %v2426 = vrot.slane %v2424, 7
  %v2427 = vor.u32 %v2423, %v2426
  %v2428 = vsel %vm2330, %v2419, %v2427
  %v2429 = vrot.slane %v2427, 4
  %v2431 = vshrl.u32 %v2319, 16
  %v2433 = vrot.slane %v2431, 6
  %v2434 = vshll.u32 %v2319, 16
  %v2436 = vrot.slane %v2434, 7
  %v2437 = vor.u32 %v2433, %v2436
  %v2438 = vsel %vm2330, %v2429, %v2437
  %v2439 = vrot.slane %v2437, 4
  %v2441 = vshrl.u32 %v2320, 16
  %v2443 = vrot.slane %v2441, 6
  %v2444 = vshll.u32 %v2320, 16
  %v2446 = vrot.slane %v2444, 7
  %v2447 = vor.u32 %v2443, %v2446
  %v2448 = vsel %vm2330, %v2439, %v2447
  %v2449 = vrot.slane %v2447, 4
  %v2451 = vshrl.u32 %v2321, 16
  %v2453 = vrot.slane %v2451, 6
  %v2454 = vshll.u32 %v2321, 16
  %v2456 = vrot.slane %v2454, 7
  %v2457 = vor.u32 %v2453, %v2456
  %v2458 = vsel %vm2330, %v2449, %v2457
  %v2459 = vrot.slane %v2457, 4
  %v2461 = vshrl.u32 %v2322, 16
  %v2463 = vrot.slane %v2461, 6
  %v2464 = vshll.u32 %v2322, 16
  %v2466 = vrot.slane %v2464, 7
  %v2467 = vor.u32 %v2463, %v2466
  %v2468 = vsel %vm2330, %v2459, %v2467
  %v2469 = vrot.slane %v2467, 4
  %v2471 = vshrl.u32 %v2323, 16
  %v2473 = vrot.slane %v2471, 6
  %v2474 = vshll.u32 %v2323, 16
  %v2476 = vrot.slane %v2474, 7
  %v2477 = vor.u32 %v2473, %v2476
  %v2478 = vsel %vm2330, %v2469, %v2477
  %v2479 = vrot.slane %v2477, 4
  %v2481 = vshrl.u32 %v2324, 16
  %v2483 = vrot.slane %v2481, 6
  %v2484 = vshll.u32 %v2324, 16
  %v2486 = vrot.slane %v2484, 7
  %v2487 = vor.u32 %v2483, %v2486
  %v2488 = vsel %vm2330, %v2479, %v2487
  %v2489 = vrot.slane %v2487, 4
  %v2491 = vshrl.u32 %v2325, 16
  %v2493 = vrot.slane %v2491, 6
  %v2494 = vshll.u32 %v2325, 16
  %v2496 = vrot.slane %v2494, 7
  %v2497 = vor.u32 %v2493, %v2496
  %v2498 = vsel %vm2330, %v2489, %v2497
  %v2499 = vrot.slane %v2497, 4
  %v2501 = vshrl.u32 %v2326, 16
  %v2503 = vrot.slane %v2501, 6
  %v2504 = vshll.u32 %v2326, 16
  %v2506 = vrot.slane %v2504, 7
  %v2507 = vor.u32 %v2503, %v2506
  %v2508 = vsel %vm2330, %v2499, %v2507
  %v2509 = vrot.slane %v2507, 4
  %v2511 = vshrl.u32 %v2327, 16
  %v2513 = vrot.slane %v2511, 6
  %v2514 = vshll.u32 %v2327, 16
  %v2516 = vrot.slane %v2514, 7
  %v2517 = vor.u32 %v2513, %v2516
  %v2518 = vsel %vm2330, %v2509, %v2517
  %2537 = vst [vmem:[#allocation2 + $0x14] sm:$0xf] %v2348
  %2538 = vst [vmem:[#allocation2 + $0x30] sm:$0xf] %v2358
  %2539 = vst [vmem:[#allocation2 + $0x4c] sm:$0xf] %v2368
  %2540 = vst [vmem:[#allocation2 + $0x68] sm:$0xf] %v2378
  %2541 = vst [vmem:[#allocation2 + $0x84] sm:$0xf] %v2388
  %2542 = vst [vmem:[#allocation2 + $0xa0] sm:$0xf] %v2398
  %2543 = vst [vmem:[#allocation2 + $0xbc] sm:$0xf] %v2408
  %2544 = vst [vmem:[#allocation2 + $0xd8] sm:$0xf] %v2418
  %2545 = vst [vmem:[#allocation2 + $0xf4] sm:$0xf] %v2428
  %2546 = vst [vmem:[#allocation2 + $0x110] sm:$0xf] %v2438
  %2547 = vst [vmem:[#allocation2 + $0x12c] sm:$0xf] %v2448
  %2548 = vst [vmem:[#allocation2 + $0x148] sm:$0xf] %v2458
  %2549 = vst [vmem:[#allocation2 + $0x164] sm:$0xf] %v2468
  %2550 = vst [vmem:[#allocation2 + $0x180] sm:$0xf] %v2478
  %2551 = vst [vmem:[#allocation2 + $0x19c] sm:$0xf] %v2488
  %2552 = vst [vmem:[#allocation2 + $0x1b8] sm:$0xf] %v2498
  %2553 = vst [vmem:[#allocation2 + $0x1d4] sm:$0xf] %v2508
  %2554 = vst [vmem:[#allocation2 + $0x1f0] sm:$0xf] %v2518
  %v2555 = vld [vmem:[%s0] sm:$0x8]
  %v2556 = vld [vmem:[%s0 + $0x4] sm:$0xf]
  %v2557 = vld [vmem:[%s0 + $0x8] sm:$0xf]
  %v2558 = vld [vmem:[%s0 + $0xc] sm:$0xf]
  %v2559 = vld [vmem:[%s0 + $0x10] sm:$0xf]
  %v2560 = vld [vmem:[%s0 + $0x14] sm:$0xf]
  %v2561 = vld [vmem:[%s0 + $0x18] sm:$0xf]
  %v2562 = vld [vmem:[%s0 + $0x1c] sm:$0xf]
  %v2563 = vld [vmem:[%s0 + $0x20] sm:$0xf]
  %v2564 = vld [vmem:[%s0 + $0x24] sm:$0xf]
  %v2565 = vld [vmem:[%s0 + $0x28] sm:$0xf]
  %v2566 = vld [vmem:[%s0 + $0x2c] sm:$0xf]
  %v2567 = vld [vmem:[%s0 + $0x30] sm:$0xf]
  %v2568 = vld [vmem:[%s0 + $0x34] sm:$0xf]
  %v2569 = vld [vmem:[%s0 + $0x38] sm:$0xf]
  %v2570 = vld [vmem:[%s0 + $0x3c] sm:$0xf]
  %v2571 = vld [vmem:[%s0 + $0x40] sm:$0xf]
  %v2572 = vld [vmem:[%s0 + $0x44] sm:$0xf]
  %v2573 = vld [vmem:[%s0 + $0x48] sm:$0x7]
  %v2574 = vadd.s32 %v359, 3
  %v2575 = vadd.s32 %v360, 3
  %v2576 = vadd.s32 %v361, 3
  %v2577 = vadd.s32 %v362, 3
  %v2578 = vadd.s32 %v363, 3
  %v2579 = vadd.s32 %v364, 3
  %v2580 = vadd.s32 %v365, 3
  %v2581 = vadd.s32 %v366, 3
  %v2582 = vadd.s32 %v367, 3
  %v2583 = vadd.s32 %v368, 3
  %v2584 = vadd.s32 %v369, 3
  %v2585 = vadd.s32 %v370, 3
  %v2586 = vadd.s32 %v371, 3
  %v2587 = vadd.s32 %v372, 3
  %v2588 = vadd.s32 %v373, 3
  %v2589 = vadd.s32 %v374, 3
  %v2590 = vadd.s32 %v375, 3
  %v2591 = vadd.s32 %v376, 3
  %vm2592 = vcmp.ge.s32.totalorder %v2574, 0
  %vm2593 = vcmp.ge.s32.totalorder %v2575, 0
  %vm2594 = vcmp.ge.s32.totalorder %v2576, 0
  %vm2595 = vcmp.ge.s32.totalorder %v2577, 0
  %vm2596 = vcmp.ge.s32.totalorder %v2578, 0
  %vm2597 = vcmp.ge.s32.totalorder %v2579, 0
  %vm2598 = vcmp.ge.s32.totalorder %v2580, 0
  %vm2599 = vcmp.ge.s32.totalorder %v2581, 0
  %vm2600 = vcmp.ge.s32.totalorder %v2582, 0
  %vm2601 = vcmp.ge.s32.totalorder %v2583, 0
  %vm2602 = vcmp.ge.s32.totalorder %v2584, 0
  %vm2603 = vcmp.ge.s32.totalorder %v2585, 0
  %vm2604 = vcmp.ge.s32.totalorder %v2586, 0
  %vm2605 = vcmp.ge.s32.totalorder %v2587, 0
  %vm2606 = vcmp.ge.s32.totalorder %v2588, 0
  %vm2607 = vcmp.ge.s32.totalorder %v2589, 0
  %vm2608 = vcmp.ge.s32.totalorder %v2590, 0
  %vm2609 = vcmp.ge.s32.totalorder %v2591, 0
  %vm2610 = vcmp.lt.s32.totalorder %v2574, 12
  %vm2611 = vcmp.lt.s32.totalorder %v2575, 12
  %vm2612 = vcmp.lt.s32.totalorder %v2576, 12
  %vm2613 = vcmp.lt.s32.totalorder %v2577, 12
  %vm2614 = vcmp.lt.s32.totalorder %v2578, 12
  %vm2615 = vcmp.lt.s32.totalorder %v2579, 12
  %vm2616 = vcmp.lt.s32.totalorder %v2580, 12
  %vm2617 = vcmp.lt.s32.totalorder %v2581, 12
  %vm2618 = vcmp.lt.s32.totalorder %v2582, 12
  %vm2619 = vcmp.lt.s32.totalorder %v2583, 12
  %vm2620 = vcmp.lt.s32.totalorder %v2584, 12
  %vm2621 = vcmp.lt.s32.totalorder %v2585, 12
  %vm2622 = vcmp.lt.s32.totalorder %v2586, 12
  %vm2623 = vcmp.lt.s32.totalorder %v2587, 12
  %vm2624 = vcmp.lt.s32.totalorder %v2588, 12
  %vm2625 = vcmp.lt.s32.totalorder %v2589, 12
  %vm2626 = vcmp.lt.s32.totalorder %v2590, 12
  %vm2627 = vcmp.lt.s32.totalorder %v2591, 12
  %vm2628 = vmand %vm2592, %vm2610
  %vm2629 = vmand %vm2593, %vm2611
  %vm2630 = vmand %vm2594, %vm2612
  %vm2631 = vmand %vm2595, %vm2613
  %vm2632 = vmand %vm2596, %vm2614
  %vm2633 = vmand %vm2597, %vm2615
  %vm2634 = vmand %vm2598, %vm2616
  %vm2635 = vmand %vm2599, %vm2617
  %vm2636 = vmand %vm2600, %vm2618
  %vm2637 = vmand %vm2601, %vm2619
  %vm2638 = vmand %vm2602, %vm2620
  %vm2639 = vmand %vm2603, %vm2621
  %vm2640 = vmand %vm2604, %vm2622
  %vm2641 = vmand %vm2605, %vm2623
  %vm2642 = vmand %vm2606, %vm2624
  %vm2643 = vmand %vm2607, %vm2625
  %vm2644 = vmand %vm2608, %vm2626
  %vm2645 = vmand %vm2609, %vm2627
  %vm2646 = vmpackc.low %vm2628, %vm2628
  %vm2647 = vmpackc.low %vm2629, %vm2629
  %vm2648 = vmpackc.low %vm2630, %vm2630
  %vm2649 = vmpackc.low %vm2631, %vm2631
  %vm2650 = vmpackc.low %vm2632, %vm2632
  %vm2651 = vmpackc.low %vm2633, %vm2633
  %vm2652 = vmpackc.low %vm2634, %vm2634
  %vm2653 = vmpackc.low %vm2635, %vm2635
  %vm2654 = vmpackc.low %vm2636, %vm2636
  %vm2655 = vmpackc.low %vm2637, %vm2637
  %vm2656 = vmpackc.low %vm2638, %vm2638
  %vm2657 = vmpackc.low %vm2639, %vm2639
  %vm2658 = vmpackc.low %vm2640, %vm2640
  %vm2659 = vmpackc.low %vm2641, %vm2641
  %vm2660 = vmpackc.low %vm2642, %vm2642
  %vm2661 = vmpackc.low %vm2643, %vm2643
  %vm2662 = vmpackc.low %vm2644, %vm2644
  %vm2663 = vmpackc.low %vm2645, %vm2645
  %v2664 = vsel %vm2646, 65537, 0
  %v2665 = vsel %vm2647, 65537, 0
  %v2666 = vsel %vm2648, 65537, 0
  %v2667 = vsel %vm2649, 65537, 0
  %v2668 = vsel %vm2650, 65537, 0
  %v2669 = vsel %vm2651, 65537, 0
  %v2670 = vsel %vm2652, 65537, 0
  %v2671 = vsel %vm2653, 65537, 0
  %v2672 = vsel %vm2654, 65537, 0
  %v2673 = vsel %vm2655, 65537, 0
  %v2674 = vsel %vm2656, 65537, 0
  %v2675 = vsel %vm2657, 65537, 0
  %v2676 = vsel %vm2658, 65537, 0
  %v2677 = vsel %vm2659, 65537, 0
  %v2678 = vsel %vm2660, 65537, 0
  %v2679 = vsel %vm2661, 65537, 0
  %v2680 = vsel %vm2662, 65537, 0
  %v2681 = vsel %vm2663, 65537, 0
  %v2682 = vrot.slane %v2664, 5
  %v2683 = vrot.slane %v2682, 4
  %v2684 = vrot.slane %v2665, 5
  %v2685 = vsel %vm1315, %v2683, %v2684
  %v2686 = vrot.slane %v2684, 4
  %v2687 = vrot.slane %v2666, 5
  %v2688 = vsel %vm1315, %v2686, %v2687
  %v2689 = vrot.slane %v2687, 4
  %v2690 = vrot.slane %v2667, 5
  %v2691 = vsel %vm1315, %v2689, %v2690
  %v2692 = vrot.slane %v2690, 4
  %v2693 = vrot.slane %v2668, 5
  %v2694 = vsel %vm1315, %v2692, %v2693
  %v2695 = vrot.slane %v2693, 4
  %v2696 = vrot.slane %v2669, 5
  %v2697 = vsel %vm1315, %v2695, %v2696
  %v2698 = vrot.slane %v2696, 4
  %v2699 = vrot.slane %v2670, 5
  %v2700 = vsel %vm1315, %v2698, %v2699
  %v2701 = vrot.slane %v2699, 4
  %v2702 = vrot.slane %v2671, 5
  %v2703 = vsel %vm1315, %v2701, %v2702
  %v2704 = vrot.slane %v2702, 4
  %v2705 = vrot.slane %v2672, 5
  %v2706 = vsel %vm1315, %v2704, %v2705
  %v2707 = vrot.slane %v2705, 4
  %v2708 = vrot.slane %v2673, 5
  %v2709 = vsel %vm1315, %v2707, %v2708
  %v2710 = vrot.slane %v2708, 4
  %v2711 = vrot.slane %v2674, 5
  %v2712 = vsel %vm1315, %v2710, %v2711
  %v2713 = vrot.slane %v2711, 4
  %v2714 = vrot.slane %v2675, 5
  %v2715 = vsel %vm1315, %v2713, %v2714
  %v2716 = vrot.slane %v2714, 4
  %v2717 = vrot.slane %v2676, 5
  %v2718 = vsel %vm1315, %v2716, %v2717
  %v2719 = vrot.slane %v2717, 4
  %v2720 = vrot.slane %v2677, 5
  %v2721 = vsel %vm1315, %v2719, %v2720
  %v2722 = vrot.slane %v2720, 4
  %v2723 = vrot.slane %v2678, 5
  %v2724 = vsel %vm1315, %v2722, %v2723
  %v2725 = vrot.slane %v2723, 4
  %v2726 = vrot.slane %v2679, 5
  %v2727 = vsel %vm1315, %v2725, %v2726
  %v2728 = vrot.slane %v2726, 4
  %v2729 = vrot.slane %v2680, 5
  %v2730 = vsel %vm1315, %v2728, %v2729
  %v2731 = vrot.slane %v2729, 4
  %v2732 = vrot.slane %v2681, 5
  %v2733 = vsel %vm1315, %v2731, %v2732
  %v2734 = vrot.slane %v2732, 4
  %vm2735 = vcmp.ne.s16.totalorder %v2682, 0
  %vm2736 = vcmp.ne.s16.totalorder %v2685, 0
  %vm2737 = vcmp.ne.s16.totalorder %v2688, 0
  %vm2738 = vcmp.ne.s16.totalorder %v2691, 0
  %vm2739 = vcmp.ne.s16.totalorder %v2694, 0
  %vm2740 = vcmp.ne.s16.totalorder %v2697, 0
  %vm2741 = vcmp.ne.s16.totalorder %v2700, 0
  %vm2742 = vcmp.ne.s16.totalorder %v2703, 0
  %vm2743 = vcmp.ne.s16.totalorder %v2706, 0
  %vm2744 = vcmp.ne.s16.totalorder %v2709, 0
  %vm2745 = vcmp.ne.s16.totalorder %v2712, 0
  %vm2746 = vcmp.ne.s16.totalorder %v2715, 0
  %vm2747 = vcmp.ne.s16.totalorder %v2718, 0
  %vm2748 = vcmp.ne.s16.totalorder %v2721, 0
  %vm2749 = vcmp.ne.s16.totalorder %v2724, 0
  %vm2750 = vcmp.ne.s16.totalorder %v2727, 0
  %vm2751 = vcmp.ne.s16.totalorder %v2730, 0
  %vm2752 = vcmp.ne.s16.totalorder %v2733, 0
  %vm2753 = vcmp.ne.s16.totalorder %v2734, 0
  %v2754 = vsel %vm2735, %v2555, 0
  %v2755 = vsel %vm2736, %v2556, 0
  %v2756 = vsel %vm2737, %v2557, 0
  %v2757 = vsel %vm2738, %v2558, 0
  %v2758 = vsel %vm2739, %v2559, 0
  %v2759 = vsel %vm2740, %v2560, 0
  %v2760 = vsel %vm2741, %v2561, 0
  %v2761 = vsel %vm2742, %v2562, 0
  %v2762 = vsel %vm2743, %v2563, 0
  %v2763 = vsel %vm2744, %v2564, 0
  %v2764 = vsel %vm2745, %v2565, 0
  %v2765 = vsel %vm2746, %v2566, 0
  %v2766 = vsel %vm2747, %v2567, 0
  %v2767 = vsel %vm2748, %v2568, 0
  %v2768 = vsel %vm2749, %v2569, 0
  %v2769 = vsel %vm2750, %v2570, 0
  %v2770 = vsel %vm2751, %v2571, 0
  %v2771 = vsel %vm2752, %v2572, 0
  %v2772 = vsel %vm2753, %v2573, 0
  %v2792 = vrot.slane %v2754, 7
  %v2793 = vrot.slane %v2792, 4
  %v2794 = vrot.slane %v2755, 7
  %v2795 = vsel %vm1202, %v2793, %v2794
  %v2796 = vrot.slane %v2794, 4
  %v2797 = vrot.slane %v2756, 7
  %v2798 = vsel %vm1202, %v2796, %v2797
  %v2799 = vrot.slane %v2797, 4
  %v2800 = vrot.slane %v2757, 7
  %v2801 = vsel %vm1202, %v2799, %v2800
  %v2802 = vrot.slane %v2800, 4
  %v2803 = vrot.slane %v2758, 7
  %v2804 = vsel %vm1202, %v2802, %v2803
  %v2805 = vrot.slane %v2803, 4
  %v2806 = vrot.slane %v2759, 7
  %v2807 = vsel %vm1202, %v2805, %v2806
  %v2808 = vrot.slane %v2806, 4
  %v2809 = vrot.slane %v2760, 7
  %v2810 = vsel %vm1202, %v2808, %v2809
  %v2811 = vrot.slane %v2809, 4
  %v2812 = vrot.slane %v2761, 7
  %v2813 = vsel %vm1202, %v2811, %v2812
  %v2814 = vrot.slane %v2812, 4
  %v2815 = vrot.slane %v2762, 7
  %v2816 = vsel %vm1202, %v2814, %v2815
  %v2817 = vrot.slane %v2815, 4
  %v2818 = vrot.slane %v2763, 7
  %v2819 = vsel %vm1202, %v2817, %v2818
  %v2820 = vrot.slane %v2818, 4
  %v2821 = vrot.slane %v2764, 7
  %v2822 = vsel %vm1202, %v2820, %v2821
  %v2823 = vrot.slane %v2821, 4
  %v2824 = vrot.slane %v2765, 7
  %v2825 = vsel %vm1202, %v2823, %v2824
  %v2826 = vrot.slane %v2824, 4
  %v2827 = vrot.slane %v2766, 7
  %v2828 = vsel %vm1202, %v2826, %v2827
  %v2829 = vrot.slane %v2827, 4
  %v2830 = vrot.slane %v2767, 7
  %v2831 = vsel %vm1202, %v2829, %v2830
  %v2832 = vrot.slane %v2830, 4
  %v2833 = vrot.slane %v2768, 7
  %v2834 = vsel %vm1202, %v2832, %v2833
  %v2835 = vrot.slane %v2833, 4
  %v2836 = vrot.slane %v2769, 7
  %v2837 = vsel %vm1202, %v2835, %v2836
  %v2838 = vrot.slane %v2836, 4
  %v2839 = vrot.slane %v2770, 7
  %v2840 = vsel %vm1202, %v2838, %v2839
  %v2841 = vrot.slane %v2839, 4
  %v2842 = vrot.slane %v2771, 7
  %v2843 = vsel %vm1202, %v2841, %v2842
  %v2844 = vrot.slane %v2842, 4
  %v2845 = vrot.slane %v2772, 7
  %v2846 = vsel %vm1202, %v2844, %v2845
  %2865 = vst [vmem:[#allocation2 + $0x18] sm:$0xf] %v2795
  %2866 = vst [vmem:[#allocation2 + $0x34] sm:$0xf] %v2798
  %2867 = vst [vmem:[#allocation2 + $0x50] sm:$0xf] %v2801
  %2868 = vst [vmem:[#allocation2 + $0x6c] sm:$0xf] %v2804
  %2869 = vst [vmem:[#allocation2 + $0x88] sm:$0xf] %v2807
  %2870 = vst [vmem:[#allocation2 + $0xa4] sm:$0xf] %v2810
  %2871 = vst [vmem:[#allocation2 + $0xc0] sm:$0xf] %v2813
  %2872 = vst [vmem:[#allocation2 + $0xdc] sm:$0xf] %v2816
  %2873 = vst [vmem:[#allocation2 + $0xf8] sm:$0xf] %v2819
  %2874 = vst [vmem:[#allocation2 + $0x114] sm:$0xf] %v2822
  %2875 = vst [vmem:[#allocation2 + $0x130] sm:$0xf] %v2825
  %2876 = vst [vmem:[#allocation2 + $0x14c] sm:$0xf] %v2828
  %2877 = vst [vmem:[#allocation2 + $0x168] sm:$0xf] %v2831
  %2878 = vst [vmem:[#allocation2 + $0x184] sm:$0xf] %v2834
  %2879 = vst [vmem:[#allocation2 + $0x1a0] sm:$0xf] %v2837
  %2880 = vst [vmem:[#allocation2 + $0x1bc] sm:$0xf] %v2840
  %2881 = vst [vmem:[#allocation2 + $0x1d8] sm:$0xf] %v2843
  %2882 = vst [vmem:[#allocation2 + $0x1f4] sm:$0xf] %v2846
  %v2883 = vld [vmem:[#allocation2] sm:$0xff]
  %v2884 = vld [vmem:[#allocation2 + $0x8] sm:$0xff]
  %v2885 = vld [vmem:[#allocation2 + $0x10] sm:$0xff]
  %v2886 = vld [vmem:[#allocation2 + $0x18] sm:$0xf]
  %v2887 = vld [vmem:[#allocation2 + $0x1c] sm:$0xff]
  %v2888 = vld [vmem:[#allocation2 + $0x24] sm:$0xff]
  %v2889 = vld [vmem:[#allocation2 + $0x2c] sm:$0xff]
  %v2890 = vld [vmem:[#allocation2 + $0x34] sm:$0xf]
  %v2891 = vld [vmem:[#allocation2 + $0x38] sm:$0xff]
  %v2892 = vld [vmem:[#allocation2 + $0x40] sm:$0xff]
  %v2893 = vld [vmem:[#allocation2 + $0x48] sm:$0xff]
  %v2894 = vld [vmem:[#allocation2 + $0x50] sm:$0xf]
  %v2895 = vld [vmem:[#allocation2 + $0x54] sm:$0xff]
  %v2896 = vld [vmem:[#allocation2 + $0x5c] sm:$0xff]
  %v2897 = vld [vmem:[#allocation2 + $0x64] sm:$0xff]
  %v2898 = vld [vmem:[#allocation2 + $0x6c] sm:$0xf]
  %v2899 = vld [vmem:[#allocation2 + $0x70] sm:$0xff]
  %v2900 = vld [vmem:[#allocation2 + $0x78] sm:$0xff]
  %v2901 = vld [vmem:[#allocation2 + $0x80] sm:$0xff]
  %v2902 = vld [vmem:[#allocation2 + $0x88] sm:$0xf]
  %v2903 = vld [vmem:[#allocation2 + $0x8c] sm:$0xff]
  %v2904 = vld [vmem:[#allocation2 + $0x94] sm:$0xff]
  %v2905 = vld [vmem:[#allocation2 + $0x9c] sm:$0xff]
  %v2906 = vld [vmem:[#allocation2 + $0xa4] sm:$0xf]
  %v2907 = vld [vmem:[#allocation2 + $0xa8] sm:$0xff]
  %v2908 = vld [vmem:[#allocation2 + $0xb0] sm:$0xff]
  %v2909 = vld [vmem:[#allocation2 + $0xb8] sm:$0xff]
  %v2910 = vld [vmem:[#allocation2 + $0xc0] sm:$0xf]
  %v2911 = vld [vmem:[#allocation2 + $0xc4] sm:$0xff]
  %v2912 = vld [vmem:[#allocation2 + $0xcc] sm:$0xff]
  %v2913 = vld [vmem:[#allocation2 + $0xd4] sm:$0xff]
  %v2914 = vld [vmem:[#allocation2 + $0xdc] sm:$0xf]
  %v2915 = vld [vmem:[#allocation2 + $0xe0] sm:$0xff]
  %v2916 = vld [vmem:[#allocation2 + $0xe8] sm:$0xff]
  %v2917 = vld [vmem:[#allocation2 + $0xf0] sm:$0xff]
  %v2918 = vld [vmem:[#allocation2 + $0xf8] sm:$0xf]
  %v2919 = vld [vmem:[#allocation2 + $0xfc] sm:$0xff]
  %v2920 = vld [vmem:[#allocation2 + $0x104] sm:$0xff]
  %v2921 = vld [vmem:[#allocation2 + $0x10c] sm:$0xff]
  %v2922 = vld [vmem:[#allocation2 + $0x114] sm:$0xf]
  %v2923 = vld [vmem:[#allocation2 + $0x118] sm:$0xff]
  %v2924 = vld [vmem:[#allocation2 + $0x120] sm:$0xff]
  %v2925 = vld [vmem:[#allocation2 + $0x128] sm:$0xff]
  %v2926 = vld [vmem:[#allocation2 + $0x130] sm:$0xf]
  %v2927 = vld [vmem:[#allocation2 + $0x134] sm:$0xff]
  %v2928 = vld [vmem:[#allocation2 + $0x13c] sm:$0xff]
  %v2929 = vld [vmem:[#allocation2 + $0x144] sm:$0xff]
  %v2930 = vld [vmem:[#allocation2 + $0x14c] sm:$0xf]
  %v2931 = vld [vmem:[#allocation2 + $0x150] sm:$0xff]
  %v2932 = vld [vmem:[#allocation2 + $0x158] sm:$0xff]
  %v2933 = vld [vmem:[#allocation2 + $0x160] sm:$0xff]
  %v2934 = vld [vmem:[#allocation2 + $0x168] sm:$0xf]
  %v2935 = vld [vmem:[#allocation2 + $0x16c] sm:$0xff]
  %v2936 = vld [vmem:[#allocation2 + $0x174] sm:$0xff]
  %v2937 = vld [vmem:[#allocation2 + $0x17c] sm:$0xff]
  %v2938 = vld [vmem:[#allocation2 + $0x184] sm:$0xf]
  %v2939 = vld [vmem:[#allocation2 + $0x188] sm:$0xff]
  %v2940 = vld [vmem:[#allocation2 + $0x190] sm:$0xff]
  %v2941 = vld [vmem:[#allocation2 + $0x198] sm:$0xff]
  %v2942 = vld [vmem:[#allocation2 + $0x1a0] sm:$0xf]
  %v2943 = vld [vmem:[#allocation2 + $0x1a4] sm:$0xff]
  %v2944 = vld [vmem:[#allocation2 + $0x1ac] sm:$0xff]
  %v2945 = vld [vmem:[#allocation2 + $0x1b4] sm:$0xff]
  %v2946 = vld [vmem:[#allocation2 + $0x1bc] sm:$0xf]
  %v2947 = vld [vmem:[#allocation2 + $0x1c0] sm:$0xff]
  %v2948 = vld [vmem:[#allocation2 + $0x1c8] sm:$0xff]
  %v2949 = vld [vmem:[#allocation2 + $0x1d0] sm:$0xff]
  %v2950 = vld [vmem:[#allocation2 + $0x1d8] sm:$0xf]
  %v2951 = vld [vmem:[#allocation2 + $0x1dc] sm:$0xff]
  %v2952 = vld [vmem:[#allocation2 + $0x1e4] sm:$0xff]
  %v2953 = vld [vmem:[#allocation2 + $0x1ec] sm:$0xff]
  %v2954 = vld [vmem:[#allocation2 + $0x1f4] sm:$0xf]
  %v2955 = vld [vmem:[%s1] sm:$0xf]
  %v2956 = vld [vmem:[%s1 + $0x4] sm:$0xf]
  %v2957 = vld [vmem:[%s1 + $0x8] sm:$0xf]
  %v2958 = vld [vmem:[%s1 + $0xc] sm:$0xf]
  %v2959 = vld [vmem:[%s1 + $0x10] sm:$0xf]
  %v2960 = vld [vmem:[%s1 + $0x14] sm:$0xf]
  %v2961 = vld [vmem:[%s1 + $0x18] sm:$0xf]
  %v2962 = vld [vmem:[%s1 + $0x1c] sm:$0xf]
  %v2963 = vld [vmem:[%s1 + $0x20] sm:$0xf]
  %v2964 = vld [vmem:[%s1 + $0x24] sm:$0xf]
  %v2965 = vld [vmem:[%s1 + $0x28] sm:$0xf]
  %v2966 = vld [vmem:[%s1 + $0x2c] sm:$0xf]
  %v2967 = vld [vmem:[%s1 + $0x30] sm:$0xf]
  %v2968 = vld [vmem:[%s1 + $0x34] sm:$0xf]
  %v2969 = vld [vmem:[%s1 + $0x38] sm:$0xf]
  %v2970 = vld [vmem:[%s1 + $0x3c] sm:$0xf]
  %v2971 = vld [vmem:[%s1 + $0x40] sm:$0xf]
  %v2972 = vld [vmem:[%s1 + $0x44] sm:$0xf]
  %v2973 = vld [vmem:[%s1 + $0x48] sm:$0xf]
  %v2974 = vld [vmem:[%s1 + $0x4c] sm:$0xf]
  %v2975 = vld [vmem:[%s1 + $0x50] sm:$0xf]
  %v2976 = vld [vmem:[%s1 + $0x54] sm:$0xf]
  %v2977 = vld [vmem:[%s1 + $0x58] sm:$0xf]
  %v2978 = vld [vmem:[%s1 + $0x5c] sm:$0xf]
  %v2979 = vld [vmem:[%s1 + $0x60] sm:$0xf]
  %v2980 = vld [vmem:[%s1 + $0x64] sm:$0xf]
  %v2981 = vld [vmem:[%s1 + $0x68] sm:$0xf]
  %v2982 = vld [vmem:[%s1 + $0x6c] sm:$0xf]
  %v2983 = vld [vmem:[%s1 + $0x70] sm:$0xf]
  %v2984 = vld [vmem:[%s1 + $0x74] sm:$0xf]
  %v2985 = vld [vmem:[%s1 + $0x78] sm:$0xf]
  %v2986 = vld [vmem:[%s1 + $0x7c] sm:$0xf]
  %v2987 = vld [vmem:[%s1 + $0x80] sm:$0xf]
  %v2988 = vld [vmem:[%s1 + $0x84] sm:$0xf]
  %v2989 = vld [vmem:[%s1 + $0x88] sm:$0xf]
  %v2990 = vld [vmem:[%s1 + $0x8c] sm:$0xf]
  %v2991 = vld [vmem:[%s1 + $0x90] sm:$0xf]
  %v2992 = vld [vmem:[%s1 + $0x94] sm:$0xf]
  %v2993 = vld [vmem:[%s1 + $0x98] sm:$0xf]
  %v2994 = vld [vmem:[%s1 + $0x9c] sm:$0xf]
  %v2995 = vld [vmem:[%s1 + $0xa0] sm:$0xf]
  %v2996 = vld [vmem:[%s1 + $0xa4] sm:$0xf]
  %v2997 = vld [vmem:[%s1 + $0xa8] sm:$0xf]
  %v2998 = vld [vmem:[%s1 + $0xac] sm:$0xf]
  %v2999 = vld [vmem:[%s1 + $0xb0] sm:$0xf]
  %v3000 = vld [vmem:[%s1 + $0xb4] sm:$0xf]
  %v3001 = vld [vmem:[%s1 + $0xb8] sm:$0xf]
  %v3002 = vld [vmem:[%s1 + $0xbc] sm:$0xf]
  %v3003 = vld [vmem:[%s1 + $0xc0] sm:$0xf]
  %v3004 = vld [vmem:[%s1 + $0xc4] sm:$0xf]
  %v3005 = vld [vmem:[%s1 + $0xc8] sm:$0xf]
  %v3006 = vld [vmem:[%s1 + $0xcc] sm:$0xf]
  %v3007 = vld [vmem:[%s1 + $0xd0] sm:$0xf]
  %v3008 = vld [vmem:[%s1 + $0xd4] sm:$0xf]
  %v3009 = vld [vmem:[%s1 + $0xd8] sm:$0xf]
  %v3010 = vld [vmem:[%s1 + $0xdc] sm:$0xf]
  %v3011 = vld [vmem:[%s1 + $0xe0] sm:$0xf]
  %v3012 = vld [vmem:[%s1 + $0xe4] sm:$0xf]
  %v3013 = vld [vmem:[%s1 + $0xe8] sm:$0xf]
  %v3014 = vld [vmem:[%s1 + $0xec] sm:$0xf]
  %v3015 = vld [vmem:[%s1 + $0xf0] sm:$0xf]
  %v3016 = vld [vmem:[%s1 + $0xf4] sm:$0xf]
  %v3017 = vld [vmem:[%s1 + $0xf8] sm:$0xf]
  %v3018 = vld [vmem:[%s1 + $0xfc] sm:$0xf]
  %v3019 = vld [vmem:[%s1 + $0x100] sm:$0xf]
  %v3020 = vld [vmem:[%s1 + $0x104] sm:$0xf]
  %v3021 = vld [vmem:[%s1 + $0x108] sm:$0xf]
  %v3022 = vld [vmem:[%s1 + $0x10c] sm:$0xf]
  %v3023 = vld [vmem:[%s1 + $0x110] sm:$0xf]
  %v3024 = vld [vmem:[%s1 + $0x114] sm:$0xf]
  %v3025 = vld [vmem:[%s1 + $0x118] sm:$0xf]
  %v3026 = vld [vmem:[%s1 + $0x11c] sm:$0xf]
  %v3027 = vld [vmem:[%s1 + $0x120] sm:$0xf]
  %v3028 = vld [vmem:[%s1 + $0x124] sm:$0xf]
  %v3029 = vld [vmem:[%s1 + $0x128] sm:$0xf]
  %v3030 = vld [vmem:[%s1 + $0x12c] sm:$0xf]
  %v3031 = vld [vmem:[%s1 + $0x130] sm:$0xf]
  %v3032 = vld [vmem:[%s1 + $0x134] sm:$0xf]
  %v3033 = vld [vmem:[%s1 + $0x138] sm:$0xf]
  %v3034 = vld [vmem:[%s1 + $0x13c] sm:$0xf]
  %v3035 = vld [vmem:[%s1 + $0x140] sm:$0xf]
  %v3036 = vld [vmem:[%s1 + $0x144] sm:$0xf]
  %v3037 = vld [vmem:[%s1 + $0x148] sm:$0xf]
  %v3038 = vld [vmem:[%s1 + $0x14c] sm:$0xf]
  %v3039 = vld [vmem:[%s1 + $0x150] sm:$0xf]
  %v3040 = vld [vmem:[%s1 + $0x154] sm:$0xf]
  %v3041 = vld [vmem:[%s1 + $0x158] sm:$0xf]
  %v3042 = vld [vmem:[%s1 + $0x15c] sm:$0xf]
  %v3043 = vld [vmem:[%s1 + $0x160] sm:$0xf]
  %v3044 = vld [vmem:[%s1 + $0x164] sm:$0xf]
  %v3045 = vld [vmem:[%s1 + $0x168] sm:$0xf]
  %v3046 = vld [vmem:[%s1 + $0x16c] sm:$0xf]
  %v3047 = vld [vmem:[%s1 + $0x170] sm:$0xf]
  %v3048 = vld [vmem:[%s1 + $0x174] sm:$0xf]
  %v3049 = vld [vmem:[%s1 + $0x178] sm:$0xf]
  %v3050 = vld [vmem:[%s1 + $0x17c] sm:$0xf]
  %v3051 = vld [vmem:[%s1 + $0x180] sm:$0xf]
  %v3052 = vld [vmem:[%s1 + $0x184] sm:$0xf]
  %v3053 = vld [vmem:[%s1 + $0x188] sm:$0xf]
  %v3054 = vld [vmem:[%s1 + $0x18c] sm:$0xf]
  %v3055 = vld [vmem:[%s1 + $0x190] sm:$0xf]
  %v3056 = vld [vmem:[%s1 + $0x194] sm:$0xf]
  %v3057 = vld [vmem:[%s1 + $0x198] sm:$0xf]
  %v3058 = vld [vmem:[%s1 + $0x19c] sm:$0xf]
  %v3059 = vld [vmem:[%s1 + $0x1a0] sm:$0xf]
  %v3060 = vld [vmem:[%s1 + $0x1a4] sm:$0xf]
  %v3061 = vld [vmem:[%s1 + $0x1a8] sm:$0xf]
  %v3062 = vld [vmem:[%s1 + $0x1ac] sm:$0xf]
  %v3063 = vld [vmem:[%s1 + $0x1b0] sm:$0xf]
  %v3064 = vld [vmem:[%s1 + $0x1b4] sm:$0xf]
  %v3065 = vld [vmem:[%s1 + $0x1b8] sm:$0xf]
  %v3066 = vld [vmem:[%s1 + $0x1bc] sm:$0xf]
  %v3139 = vunpack.c.l.b16 %v2883
  %v3140 = vunpack.c.h.b16 %v2883
  %v3141 = vunpack.c.l.b16 %v2884
  %v3142 = vunpack.c.h.b16 %v2884
  %v3143 = vunpack.c.l.b16 %v2885
  %v3144 = vunpack.c.h.b16 %v2885
  %v3145 = vunpack.c.l.b16 %v2886
  %v3146 = vunpack.c.l.b16 %v2887
  %v3147 = vunpack.c.h.b16 %v2887
  %v3148 = vunpack.c.l.b16 %v2888
  %v3149 = vunpack.c.h.b16 %v2888
  %v3150 = vunpack.c.l.b16 %v2889
  %v3151 = vunpack.c.h.b16 %v2889
  %v3152 = vunpack.c.l.b16 %v2890
  %v3153 = vunpack.c.l.b16 %v2891
  %v3154 = vunpack.c.h.b16 %v2891
  %v3155 = vunpack.c.l.b16 %v2892
  %v3156 = vunpack.c.h.b16 %v2892
  %v3157 = vunpack.c.l.b16 %v2893
  %v3158 = vunpack.c.h.b16 %v2893
  %v3159 = vunpack.c.l.b16 %v2894
  %v3160 = vunpack.c.l.b16 %v2895
  %v3161 = vunpack.c.h.b16 %v2895
  %v3162 = vunpack.c.l.b16 %v2896
  %v3163 = vunpack.c.h.b16 %v2896
  %v3164 = vunpack.c.l.b16 %v2897
  %v3165 = vunpack.c.h.b16 %v2897
  %v3166 = vunpack.c.l.b16 %v2898
  %v3167 = vunpack.c.l.b16 %v2899
  %v3168 = vunpack.c.h.b16 %v2899
  %v3169 = vunpack.c.l.b16 %v2900
  %v3170 = vunpack.c.h.b16 %v2900
  %v3171 = vunpack.c.l.b16 %v2901
  %v3172 = vunpack.c.h.b16 %v2901
  %v3173 = vunpack.c.l.b16 %v2902
  %v3174 = vunpack.c.l.b16 %v2903
  %v3175 = vunpack.c.h.b16 %v2903
  %v3176 = vunpack.c.l.b16 %v2904
  %v3177 = vunpack.c.h.b16 %v2904
  %v3178 = vunpack.c.l.b16 %v2905
  %v3179 = vunpack.c.h.b16 %v2905
  %v3180 = vunpack.c.l.b16 %v2906
  %v3181 = vunpack.c.l.b16 %v2907
  %v3182 = vunpack.c.h.b16 %v2907
  %v3183 = vunpack.c.l.b16 %v2908
  %v3184 = vunpack.c.h.b16 %v2908
  %v3185 = vunpack.c.l.b16 %v2909
  %v3186 = vunpack.c.h.b16 %v2909
  %v3187 = vunpack.c.l.b16 %v2910
  %v3188 = vunpack.c.l.b16 %v2911
  %v3189 = vunpack.c.h.b16 %v2911
  %v3190 = vunpack.c.l.b16 %v2912
  %v3191 = vunpack.c.h.b16 %v2912
  %v3192 = vunpack.c.l.b16 %v2913
  %v3193 = vunpack.c.h.b16 %v2913
  %v3194 = vunpack.c.l.b16 %v2914
  %v3195 = vunpack.c.l.b16 %v2915
  %v3196 = vunpack.c.h.b16 %v2915
  %v3197 = vunpack.c.l.b16 %v2916
  %v3198 = vunpack.c.h.b16 %v2916
  %v3199 = vunpack.c.l.b16 %v2917
  %v3200 = vunpack.c.h.b16 %v2917
  %v3201 = vunpack.c.l.b16 %v2918
  %v3202 = vunpack.c.l.b16 %v2919
  %v3203 = vunpack.c.h.b16 %v2919
  %v3204 = vunpack.c.l.b16 %v2920
  %v3205 = vunpack.c.h.b16 %v2920
  %v3206 = vunpack.c.l.b16 %v2921
  %v3207 = vunpack.c.h.b16 %v2921
  %v3208 = vunpack.c.l.b16 %v2922
  %v3209 = vunpack.c.l.b16 %v2923
  %v3210 = vunpack.c.h.b16 %v2923
  %v3211 = vunpack.c.l.b16 %v2924
  %v3212 = vunpack.c.h.b16 %v2924
  %v3213 = vunpack.c.l.b16 %v2925
  %v3214 = vunpack.c.h.b16 %v2925
  %v3215 = vunpack.c.l.b16 %v2926
  %v3216 = vunpack.c.l.b16 %v2927
  %v3217 = vunpack.c.h.b16 %v2927
  %v3218 = vunpack.c.l.b16 %v2928
  %v3219 = vunpack.c.h.b16 %v2928
  %v3220 = vunpack.c.l.b16 %v2929
  %v3221 = vunpack.c.h.b16 %v2929
  %v3222 = vunpack.c.l.b16 %v2930
  %v3223 = vunpack.c.l.b16 %v2931
  %v3224 = vunpack.c.h.b16 %v2931
  %v3225 = vunpack.c.l.b16 %v2932
  %v3226 = vunpack.c.h.b16 %v2932
  %v3227 = vunpack.c.l.b16 %v2933
  %v3228 = vunpack.c.h.b16 %v2933
  %v3229 = vunpack.c.l.b16 %v2934
  %v3230 = vunpack.c.l.b16 %v2935
  %v3231 = vunpack.c.h.b16 %v2935
  %v3232 = vunpack.c.l.b16 %v2936
  %v3233 = vunpack.c.h.b16 %v2936
  %v3234 = vunpack.c.l.b16 %v2937
  %v3235 = vunpack.c.h.b16 %v2937
  %v3236 = vunpack.c.l.b16 %v2938
  %v3237 = vunpack.c.l.b16 %v2939
  %v3238 = vunpack.c.h.b16 %v2939
  %v3239 = vunpack.c.l.b16 %v2940
  %v3240 = vunpack.c.h.b16 %v2940
  %v3241 = vunpack.c.l.b16 %v2941
  %v3242 = vunpack.c.h.b16 %v2941
  %v3243 = vunpack.c.l.b16 %v2942
  %v3244 = vunpack.c.l.b16 %v2943
  %v3245 = vunpack.c.h.b16 %v2943
  %v3246 = vunpack.c.l.b16 %v2944
  %v3247 = vunpack.c.h.b16 %v2944
  %v3248 = vunpack.c.l.b16 %v2945
  %v3249 = vunpack.c.h.b16 %v2945
  %v3250 = vunpack.c.l.b16 %v2946
  %v3251 = vunpack.c.l.b16 %v2947
  %v3252 = vunpack.c.h.b16 %v2947
  %v3253 = vunpack.c.l.b16 %v2948
  %v3254 = vunpack.c.h.b16 %v2948
  %v3255 = vunpack.c.l.b16 %v2949
  %v3256 = vunpack.c.h.b16 %v2949
  %v3257 = vunpack.c.l.b16 %v2950
  %v3258 = vunpack.c.l.b16 %v2951
  %v3259 = vunpack.c.h.b16 %v2951
  %v3260 = vunpack.c.l.b16 %v2952
  %v3261 = vunpack.c.h.b16 %v2952
  %v3262 = vunpack.c.l.b16 %v2953
  %v3263 = vunpack.c.h.b16 %v2953
  %v3264 = vunpack.c.l.b16 %v2954
  %v3265 = vpack.c.b16 %v3146, %v3139
  %v3266 = vpack.c.b16 %v3147, %v3140
  %v3267 = vpack.c.b16 %v3148, %v3141
  %v3268 = vpack.c.b16 %v3149, %v3142
  %v3269 = vpack.c.b16 %v3150, %v3143
  %v3270 = vpack.c.b16 %v3151, %v3144
  %v3271 = vpack.c.b16 %v3152, %v3145
  %v3272 = vpack.c.b16 %v3160, %v3153
  %v3273 = vpack.c.b16 %v3161, %v3154
  %v3274 = vpack.c.b16 %v3162, %v3155
  %v3275 = vpack.c.b16 %v3163, %v3156
  %v3276 = vpack.c.b16 %v3164, %v3157
  %v3277 = vpack.c.b16 %v3165, %v3158
  %v3278 = vpack.c.b16 %v3166, %v3159
  %v3279 = vpack.c.b16 %v3174, %v3167
  %v3280 = vpack.c.b16 %v3175, %v3168
  %v3281 = vpack.c.b16 %v3176, %v3169
  %v3282 = vpack.c.b16 %v3177, %v3170
  %v3283 = vpack.c.b16 %v3178, %v3171
  %v3284 = vpack.c.b16 %v3179, %v3172
  %v3285 = vpack.c.b16 %v3180, %v3173
  %v3286 = vpack.c.b16 %v3188, %v3181
  %v3287 = vpack.c.b16 %v3189, %v3182
  %v3288 = vpack.c.b16 %v3190, %v3183
  %v3289 = vpack.c.b16 %v3191, %v3184
  %v3290 = vpack.c.b16 %v3192, %v3185
  %v3291 = vpack.c.b16 %v3193, %v3186
  %v3292 = vpack.c.b16 %v3194, %v3187
  %v3293 = vpack.c.b16 %v3202, %v3195
  %v3294 = vpack.c.b16 %v3203, %v3196
  %v3295 = vpack.c.b16 %v3204, %v3197
  %v3296 = vpack.c.b16 %v3205, %v3198
  %v3297 = vpack.c.b16 %v3206, %v3199
  %v3298 = vpack.c.b16 %v3207, %v3200
  %v3299 = vpack.c.b16 %v3208, %v3201
  %v3300 = vpack.c.b16 %v3216, %v3209
  %v3301 = vpack.c.b16 %v3217, %v3210
  %v3302 = vpack.c.b16 %v3218, %v3211
  %v3303 = vpack.c.b16 %v3219, %v3212
  %v3304 = vpack.c.b16 %v3220, %v3213
  %v3305 = vpack.c.b16 %v3221, %v3214
  %v3306 = vpack.c.b16 %v3222, %v3215
  %v3307 = vpack.c.b16 %v3230, %v3223
  %v3308 = vpack.c.b16 %v3231, %v3224
  %v3309 = vpack.c.b16 %v3232, %v3225
  %v3310 = vpack.c.b16 %v3233, %v3226
  %v3311 = vpack.c.b16 %v3234, %v3227
  %v3312 = vpack.c.b16 %v3235, %v3228
  %v3313 = vpack.c.b16 %v3236, %v3229
  %v3314 = vpack.c.b16 %v3244, %v3237
  %v3315 = vpack.c.b16 %v3245, %v3238
  %v3316 = vpack.c.b16 %v3246, %v3239
  %v3317 = vpack.c.b16 %v3247, %v3240
  %v3318 = vpack.c.b16 %v3248, %v3241
  %v3319 = vpack.c.b16 %v3249, %v3242
  %v3320 = vpack.c.b16 %v3250, %v3243
  %v3321 = vpack.c.b16 %v3258, %v3251
  %v3322 = vpack.c.b16 %v3259, %v3252
  %v3323 = vpack.c.b16 %v3260, %v3253
  %v3324 = vpack.c.b16 %v3261, %v3254
  %v3325 = vpack.c.b16 %v3262, %v3255
  %v3326 = vpack.c.b16 %v3263, %v3256
  %v3327 = vpack.c.b16 %v3264, %v3257
  %v3503 = vunpack.c.l.b16 %v2955
  %v3504 = vunpack.c.l.b16 %v2956
  %v3505 = vunpack.c.l.b16 %v2957
  %v3506 = vunpack.c.l.b16 %v2958
  %v3507 = vunpack.c.l.b16 %v2959
  %v3508 = vunpack.c.l.b16 %v2960
  %v3509 = vunpack.c.l.b16 %v2961
  %v3510 = vunpack.c.l.b16 %v2962
  %v3511 = vunpack.c.l.b16 %v2963
  %v3512 = vunpack.c.l.b16 %v2964
  %v3513 = vunpack.c.l.b16 %v2965
  %v3514 = vunpack.c.l.b16 %v2966
  %v3515 = vunpack.c.l.b16 %v2967
  %v3516 = vunpack.c.l.b16 %v2968
  %v3517 = vunpack.c.l.b16 %v2969
  %v3518 = vunpack.c.l.b16 %v2970
  %v3519 = vunpack.c.l.b16 %v2971
  %v3520 = vunpack.c.l.b16 %v2972
  %v3521 = vunpack.c.l.b16 %v2973
  %v3522 = vunpack.c.l.b16 %v2974
  %v3523 = vunpack.c.l.b16 %v2975
  %v3524 = vunpack.c.l.b16 %v2976
  %v3525 = vunpack.c.l.b16 %v2977
  %v3526 = vunpack.c.l.b16 %v2978
  %v3527 = vunpack.c.l.b16 %v2979
  %v3528 = vunpack.c.l.b16 %v2980
  %v3529 = vunpack.c.l.b16 %v2981
  %v3530 = vunpack.c.l.b16 %v2982
  %v3531 = vunpack.c.l.b16 %v2983
  %v3532 = vunpack.c.l.b16 %v2984
  %v3533 = vunpack.c.l.b16 %v2985
  %v3534 = vunpack.c.l.b16 %v2986
  %v3535 = vunpack.c.l.b16 %v2987
  %v3536 = vunpack.c.l.b16 %v2988
  %v3537 = vunpack.c.l.b16 %v2989
  %v3538 = vunpack.c.l.b16 %v2990
  %v3539 = vunpack.c.l.b16 %v2991
  %v3540 = vunpack.c.l.b16 %v2992
  %v3541 = vunpack.c.l.b16 %v2993
  %v3542 = vunpack.c.l.b16 %v2994
  %v3543 = vunpack.c.l.b16 %v2995
  %v3544 = vunpack.c.l.b16 %v2996
  %v3545 = vunpack.c.l.b16 %v2997
  %v3546 = vunpack.c.l.b16 %v2998
  %v3547 = vunpack.c.l.b16 %v2999
  %v3548 = vunpack.c.l.b16 %v3000
  %v3549 = vunpack.c.l.b16 %v3001
  %v3550 = vunpack.c.l.b16 %v3002
  %v3551 = vunpack.c.l.b16 %v3003
  %v3552 = vunpack.c.l.b16 %v3004
  %v3553 = vunpack.c.l.b16 %v3005
  %v3554 = vunpack.c.l.b16 %v3006
  %v3555 = vunpack.c.l.b16 %v3007
  %v3556 = vunpack.c.l.b16 %v3008
  %v3557 = vunpack.c.l.b16 %v3009
  %v3558 = vunpack.c.l.b16 %v3010
  %v3559 = vunpack.c.l.b16 %v3011
  %v3560 = vunpack.c.l.b16 %v3012
  %v3561 = vunpack.c.l.b16 %v3013
  %v3562 = vunpack.c.l.b16 %v3014
  %v3563 = vunpack.c.l.b16 %v3015
  %v3564 = vunpack.c.l.b16 %v3016
  %v3565 = vunpack.c.l.b16 %v3017
  %v3566 = vunpack.c.l.b16 %v3018
  %v3567 = vunpack.c.l.b16 %v3019
  %v3568 = vunpack.c.l.b16 %v3020
  %v3569 = vunpack.c.l.b16 %v3021
  %v3570 = vunpack.c.l.b16 %v3022
  %v3571 = vunpack.c.l.b16 %v3023
  %v3572 = vunpack.c.l.b16 %v3024
  %v3573 = vunpack.c.l.b16 %v3025
  %v3574 = vunpack.c.l.b16 %v3026
  %v3575 = vunpack.c.l.b16 %v3027
  %v3576 = vunpack.c.l.b16 %v3028
  %v3577 = vunpack.c.l.b16 %v3029
  %v3578 = vunpack.c.l.b16 %v3030
  %v3579 = vunpack.c.l.b16 %v3031
  %v3580 = vunpack.c.l.b16 %v3032
  %v3581 = vunpack.c.l.b16 %v3033
  %v3582 = vunpack.c.l.b16 %v3034
  %v3583 = vunpack.c.l.b16 %v3035
  %v3584 = vunpack.c.l.b16 %v3036
  %v3585 = vunpack.c.l.b16 %v3037
  %v3586 = vunpack.c.l.b16 %v3038
  %v3587 = vunpack.c.l.b16 %v3039
  %v3588 = vunpack.c.l.b16 %v3040
  %v3589 = vunpack.c.l.b16 %v3041
  %v3590 = vunpack.c.l.b16 %v3042
  %v3591 = vunpack.c.l.b16 %v3043
  %v3592 = vunpack.c.l.b16 %v3044
  %v3593 = vunpack.c.l.b16 %v3045
  %v3594 = vunpack.c.l.b16 %v3046
  %v3595 = vunpack.c.l.b16 %v3047
  %v3596 = vunpack.c.l.b16 %v3048
  %v3597 = vunpack.c.l.b16 %v3049
  %v3598 = vunpack.c.l.b16 %v3050
  %v3599 = vunpack.c.l.b16 %v3051
  %v3600 = vunpack.c.l.b16 %v3052
  %v3601 = vunpack.c.l.b16 %v3053
  %v3602 = vunpack.c.l.b16 %v3054
  %v3603 = vunpack.c.l.b16 %v3055
  %v3604 = vunpack.c.l.b16 %v3056
  %v3605 = vunpack.c.l.b16 %v3057
  %v3606 = vunpack.c.l.b16 %v3058
  %v3607 = vunpack.c.l.b16 %v3059
  %v3608 = vunpack.c.l.b16 %v3060
  %v3609 = vunpack.c.l.b16 %v3061
  %v3610 = vunpack.c.l.b16 %v3062
  %v3611 = vunpack.c.l.b16 %v3063
  %v3612 = vunpack.c.l.b16 %v3064
  %v3613 = vunpack.c.l.b16 %v3065
  %v3614 = vunpack.c.l.b16 %v3066
  %v3615 = vpack.c.b16 %v3504, %v3503
  %v3616 = vpack.c.b16 %v3506, %v3505
  %v3617 = vpack.c.b16 %v3508, %v3507
  %v3618 = vpack.c.b16 %v3510, %v3509
  %v3619 = vpack.c.b16 %v3512, %v3511
  %v3620 = vpack.c.b16 %v3514, %v3513
  %v3621 = vpack.c.b16 %v3516, %v3515
  %v3622 = vpack.c.b16 %v3518, %v3517
  %v3623 = vpack.c.b16 %v3520, %v3519
  %v3624 = vpack.c.b16 %v3522, %v3521
  %v3625 = vpack.c.b16 %v3524, %v3523
  %v3626 = vpack.c.b16 %v3526, %v3525
  %v3627 = vpack.c.b16 %v3528, %v3527
  %v3628 = vpack.c.b16 %v3530, %v3529
  %v3629 = vpack.c.b16 %v3532, %v3531
  %v3630 = vpack.c.b16 %v3534, %v3533
  %v3631 = vpack.c.b16 %v3536, %v3535
  %v3632 = vpack.c.b16 %v3538, %v3537
  %v3633 = vpack.c.b16 %v3540, %v3539
  %v3634 = vpack.c.b16 %v3542, %v3541
  %v3635 = vpack.c.b16 %v3544, %v3543
  %v3636 = vpack.c.b16 %v3546, %v3545
  %v3637 = vpack.c.b16 %v3548, %v3547
  %v3638 = vpack.c.b16 %v3550, %v3549
  %v3639 = vpack.c.b16 %v3552, %v3551
  %v3640 = vpack.c.b16 %v3554, %v3553
  %v3641 = vpack.c.b16 %v3556, %v3555
  %v3642 = vpack.c.b16 %v3558, %v3557
  %v3643 = vpack.c.b16 %v3560, %v3559
  %v3644 = vpack.c.b16 %v3562, %v3561
  %v3645 = vpack.c.b16 %v3564, %v3563
  %v3646 = vpack.c.b16 %v3566, %v3565
  %v3647 = vpack.c.b16 %v3568, %v3567
  %v3648 = vpack.c.b16 %v3570, %v3569
  %v3649 = vpack.c.b16 %v3572, %v3571
  %v3650 = vpack.c.b16 %v3574, %v3573
  %v3651 = vpack.c.b16 %v3576, %v3575
  %v3652 = vpack.c.b16 %v3578, %v3577
  %v3653 = vpack.c.b16 %v3580, %v3579
  %v3654 = vpack.c.b16 %v3582, %v3581
  %v3655 = vpack.c.b16 %v3584, %v3583
  %v3656 = vpack.c.b16 %v3586, %v3585
  %v3657 = vpack.c.b16 %v3588, %v3587
  %v3658 = vpack.c.b16 %v3590, %v3589
  %v3659 = vpack.c.b16 %v3592, %v3591
  %v3660 = vpack.c.b16 %v3594, %v3593
  %v3661 = vpack.c.b16 %v3596, %v3595
  %v3662 = vpack.c.b16 %v3598, %v3597
  %v3663 = vpack.c.b16 %v3600, %v3599
  %v3664 = vpack.c.b16 %v3602, %v3601
  %v3665 = vpack.c.b16 %v3604, %v3603
  %v3666 = vpack.c.b16 %v3606, %v3605
  %v3667 = vpack.c.b16 %v3608, %v3607
  %v3668 = vpack.c.b16 %v3610, %v3609
  %v3669 = vpack.c.b16 %v3612, %v3611
  %v3670 = vpack.c.b16 %v3614, %v3613
  %3727 = vmatprep.subr.bf16.mxu0 0
  %3728 = vmatpush1.bf16.msra.mxu0 %v3622
  %3729 = vmatprep.subr.bf16.mxu0 0
  %3730 = vmatpush1.bf16.msra.mxu0 %v3621
  %3731 = vmatprep.subr.bf16.mxu0 0
  %3732 = vmatpush1.bf16.msra.mxu0 %v3620
  %3733 = vmatprep.subr.bf16.mxu0 0
  %3734 = vmatpush1.bf16.msra.mxu0 %v3619
  %3735 = vmatprep.subr.bf16.mxu0 0
  %3736 = vmatpush1.bf16.msra.mxu0 %v3618
  %3737 = vmatprep.subr.bf16.mxu0 0
  %3738 = vmatpush1.bf16.msra.mxu0 %v3617
  %3739 = vmatprep.subr.bf16.mxu0 0
  %3740 = vmatpush1.bf16.msra.mxu0 %v3616
  %3741 = vmatprep.subr.bf16.mxu0 0
  %3742 = vmatpush1.bf16.msra.mxu0 %v3615
  %3743 = vmatprep.subr.bf16.mxu0 0
  %3744 = vmatpush2.bf16.msra.mxu0 %v3630
  %3745 = vmatprep.subr.bf16.mxu0 0
  %3746 = vmatpush2.bf16.msra.mxu0 %v3629
  %3747 = vmatprep.subr.bf16.mxu0 0
  %3748 = vmatpush2.bf16.msra.mxu0 %v3628
  %3749 = vmatprep.subr.bf16.mxu0 0
  %3750 = vmatpush2.bf16.msra.mxu0 %v3627
  %3751 = vmatprep.subr.bf16.mxu0 0
  %3752 = vmatpush2.bf16.msra.mxu0 %v3626
  %3753 = vmatprep.subr.bf16.mxu0 0
  %3754 = vmatpush2.bf16.msra.mxu0 %v3625
  %3755 = vmatprep.subr.bf16.mxu0 0
  %3756 = vmatpush2.bf16.msra.mxu0 %v3624
  %3757 = vmatprep.subr.bf16.mxu0 0
  %3758 = vmatpush2.bf16.msra.mxu0 %v3623
  %3759 = vmatprep.mubr.bf16.mxu0 %v3266
  %3760 = vmatmul.mubr.bf16.gmra.mxu0 %v3265
  %v3761 = vpop.f32.mrf.mxu0
  %v3762 = vadd.f32 0.0, %v3761
  %v3763 = vpop.f32.mrf.mxu0
  %v3764 = vpop.f32.mrf.mxu0
  %v3765 = vadd.f32 0.0, %v3764
  %v3766 = vpop.f32.mrf.mxu0
  %3767 = vmatprep.mubr.bf16.mxu0 %v3273
  %3768 = vmatmul.mubr.bf16.gmra.mxu0 %v3272
  %v3769 = vpop.f32.mrf.mxu0
  %v3770 = vadd.f32 0.0, %v3769
  %v3771 = vpop.f32.mrf.mxu0
  %v3772 = vpop.f32.mrf.mxu0
  %v3773 = vadd.f32 0.0, %v3772
  %v3774 = vpop.f32.mrf.mxu0
  %3775 = vmatprep.mubr.bf16.mxu0 %v3280
  %3776 = vmatmul.mubr.bf16.gmra.mxu0 %v3279
  %v3777 = vpop.f32.mrf.mxu0
  %v3778 = vadd.f32 0.0, %v3777
  %v3779 = vpop.f32.mrf.mxu0
  %v3780 = vpop.f32.mrf.mxu0
  %v3781 = vadd.f32 0.0, %v3780
  %v3782 = vpop.f32.mrf.mxu0
  %3783 = vmatprep.mubr.bf16.mxu0 %v3287
  %3784 = vmatmul.mubr.bf16.gmra.mxu0 %v3286
  %v3785 = vpop.f32.mrf.mxu0
  %v3786 = vadd.f32 0.0, %v3785
  %v3787 = vpop.f32.mrf.mxu0
  %v3788 = vpop.f32.mrf.mxu0
  %v3789 = vadd.f32 0.0, %v3788
  %v3790 = vpop.f32.mrf.mxu0
  %3791 = vmatprep.mubr.bf16.mxu0 %v3294
  %3792 = vmatmul.mubr.bf16.gmra.mxu0 %v3293
  %v3793 = vpop.f32.mrf.mxu0
  %v3794 = vadd.f32 0.0, %v3793
  %v3795 = vpop.f32.mrf.mxu0
  %v3796 = vpop.f32.mrf.mxu0
  %v3797 = vadd.f32 0.0, %v3796
  %v3798 = vpop.f32.mrf.mxu0
  %3799 = vmatprep.mubr.bf16.mxu0 %v3301
  %3800 = vmatmul.mubr.bf16.gmra.mxu0 %v3300
  %v3801 = vpop.f32.mrf.mxu0
  %v3802 = vadd.f32 0.0, %v3801
  %v3803 = vpop.f32.mrf.mxu0
  %v3804 = vpop.f32.mrf.mxu0
  %v3805 = vadd.f32 0.0, %v3804
  %v3806 = vpop.f32.mrf.mxu0
  %3807 = vmatprep.mubr.bf16.mxu0 %v3308
  %3808 = vmatmul.mubr.bf16.gmra.mxu0 %v3307
  %v3809 = vpop.f32.mrf.mxu0
  %v3810 = vadd.f32 0.0, %v3809
  %v3811 = vpop.f32.mrf.mxu0
  %v3812 = vpop.f32.mrf.mxu0
  %v3813 = vadd.f32 0.0, %v3812
  %v3814 = vpop.f32.mrf.mxu0
  %3815 = vmatprep.mubr.bf16.mxu0 %v3315
  %3816 = vmatmul.mubr.bf16.gmra.mxu0 %v3314
  %v3817 = vpop.f32.mrf.mxu0
  %v3818 = vadd.f32 0.0, %v3817
  %v3819 = vpop.f32.mrf.mxu0
  %v3820 = vpop.f32.mrf.mxu0
  %v3821 = vadd.f32 0.0, %v3820
  %v3822 = vpop.f32.mrf.mxu0
  %3823 = vmatprep.mubr.bf16.mxu0 %v3322
  %3824 = vmatmul.mubr.bf16.gmra.mxu0 %v3321
  %v3825 = vpop.f32.mrf.mxu0
  %v3826 = vadd.f32 0.0, %v3825
  %v3827 = vpop.f32.mrf.mxu0
  %v3828 = vpop.f32.mrf.mxu0
  %v3829 = vadd.f32 0.0, %v3828
  %v3830 = vpop.f32.mrf.mxu0
  %3831 = vdwg.mxu0
  %3832 = vmatprep.subr.bf16.mxu0 0
  %3833 = vmatpush1.bf16.msra.mxu0 %v3638
  %3834 = vmatprep.subr.bf16.mxu0 0
  %3835 = vmatpush1.bf16.msra.mxu0 %v3637
  %3836 = vmatprep.subr.bf16.mxu0 0
  %3837 = vmatpush1.bf16.msra.mxu0 %v3636
  %3838 = vmatprep.subr.bf16.mxu0 0
  %3839 = vmatpush1.bf16.msra.mxu0 %v3635
  %3840 = vmatprep.subr.bf16.mxu0 0
  %3841 = vmatpush1.bf16.msra.mxu0 %v3634
  %3842 = vmatprep.subr.bf16.mxu0 0
  %3843 = vmatpush1.bf16.msra.mxu0 %v3633
  %3844 = vmatprep.subr.bf16.mxu0 0
  %3845 = vmatpush1.bf16.msra.mxu0 %v3632
  %3846 = vmatprep.subr.bf16.mxu0 0
  %3847 = vmatpush1.bf16.msra.mxu0 %v3631
  %3848 = vmatprep.subr.bf16.mxu0 0
  %3849 = vmatpush2.bf16.msra.mxu0 %v3646
  %3850 = vmatprep.subr.bf16.mxu0 0
  %3851 = vmatpush2.bf16.msra.mxu0 %v3645
  %3852 = vmatprep.subr.bf16.mxu0 0
  %3853 = vmatpush2.bf16.msra.mxu0 %v3644
  %3854 = vmatprep.subr.bf16.mxu0 0
  %3855 = vmatpush2.bf16.msra.mxu0 %v3643
  %3856 = vmatprep.subr.bf16.mxu0 0
  %3857 = vmatpush2.bf16.msra.mxu0 %v3642
  %3858 = vmatprep.subr.bf16.mxu0 0
  %3859 = vmatpush2.bf16.msra.mxu0 %v3641
  %3860 = vmatprep.subr.bf16.mxu0 0
  %3861 = vmatpush2.bf16.msra.mxu0 %v3640
  %3862 = vmatprep.subr.bf16.mxu0 0
  %3863 = vmatpush2.bf16.msra.mxu0 %v3639
  %3864 = vmatprep.mubr.bf16.mxu0 %v3268
  %3865 = vmatmul.mubr.bf16.gmra.mxu0 %v3267
  %v3866 = vpop.f32.mrf.mxu0
  %v3867 = vadd.f32 %v3762, %v3866
  %v3868 = vpop.f32.mrf.mxu0
  %v3869 = vpop.f32.mrf.mxu0
  %v3870 = vadd.f32 %v3765, %v3869
  %v3871 = vpop.f32.mrf.mxu0
  %3872 = vmatprep.mubr.bf16.mxu0 %v3275
  %3873 = vmatmul.mubr.bf16.gmra.mxu0 %v3274
  %v3874 = vpop.f32.mrf.mxu0
  %v3875 = vadd.f32 %v3770, %v3874
  %v3876 = vpop.f32.mrf.mxu0
  %v3877 = vpop.f32.mrf.mxu0
  %v3878 = vadd.f32 %v3773, %v3877
  %v3879 = vpop.f32.mrf.mxu0
  %3880 = vmatprep.mubr.bf16.mxu0 %v3282
  %3881 = vmatmul.mubr.bf16.gmra.mxu0 %v3281
  %v3882 = vpop.f32.mrf.mxu0
  %v3883 = vadd.f32 %v3778, %v3882
  %v3884 = vpop.f32.mrf.mxu0
  %v3885 = vpop.f32.mrf.mxu0
  %v3886 = vadd.f32 %v3781, %v3885
  %v3887 = vpop.f32.mrf.mxu0
  %3888 = vmatprep.mubr.bf16.mxu0 %v3289
  %3889 = vmatmul.mubr.bf16.gmra.mxu0 %v3288
  %v3890 = vpop.f32.mrf.mxu0
  %v3891 = vadd.f32 %v3786, %v3890
  %v3892 = vpop.f32.mrf.mxu0
  %v3893 = vpop.f32.mrf.mxu0
  %v3894 = vadd.f32 %v3789, %v3893
  %v3895 = vpop.f32.mrf.mxu0
  %3896 = vmatprep.mubr.bf16.mxu0 %v3296
  %3897 = vmatmul.mubr.bf16.gmra.mxu0 %v3295
  %v3898 = vpop.f32.mrf.mxu0
  %v3899 = vadd.f32 %v3794, %v3898
  %v3900 = vpop.f32.mrf.mxu0
  %v3901 = vpop.f32.mrf.mxu0
  %v3902 = vadd.f32 %v3797, %v3901
  %v3903 = vpop.f32.mrf.mxu0
  %3904 = vmatprep.mubr.bf16.mxu0 %v3303
  %3905 = vmatmul.mubr.bf16.gmra.mxu0 %v3302
  %v3906 = vpop.f32.mrf.mxu0
  %v3907 = vadd.f32 %v3802, %v3906
  %v3908 = vpop.f32.mrf.mxu0
  %v3909 = vpop.f32.mrf.mxu0
  %v3910 = vadd.f32 %v3805, %v3909
  %v3911 = vpop.f32.mrf.mxu0
  %3912 = vmatprep.mubr.bf16.mxu0 %v3310
  %3913 = vmatmul.mubr.bf16.gmra.mxu0 %v3309
  %v3914 = vpop.f32.mrf.mxu0
  %v3915 = vadd.f32 %v3810, %v3914
  %v3916 = vpop.f32.mrf.mxu0
  %v3917 = vpop.f32.mrf.mxu0
  %v3918 = vadd.f32 %v3813, %v3917
  %v3919 = vpop.f32.mrf.mxu0
  %3920 = vmatprep.mubr.bf16.mxu0 %v3317
  %3921 = vmatmul.mubr.bf16.gmra.mxu0 %v3316
  %v3922 = vpop.f32.mrf.mxu0
  %v3923 = vadd.f32 %v3818, %v3922
  %v3924 = vpop.f32.mrf.mxu0
  %v3925 = vpop.f32.mrf.mxu0
  %v3926 = vadd.f32 %v3821, %v3925
  %v3927 = vpop.f32.mrf.mxu0
  %3928 = vmatprep.mubr.bf16.mxu0 %v3324
  %3929 = vmatmul.mubr.bf16.gmra.mxu0 %v3323
  %v3930 = vpop.f32.mrf.mxu0
  %v3931 = vadd.f32 %v3826, %v3930
  %v3932 = vpop.f32.mrf.mxu0
  %v3933 = vpop.f32.mrf.mxu0
  %v3934 = vadd.f32 %v3829, %v3933
  %v3935 = vpop.f32.mrf.mxu0
  %3936 = vdwg.mxu0
  %3937 = vmatprep.subr.bf16.mxu0 0
  %3938 = vmatpush1.bf16.msra.mxu0 %v3654
  %3939 = vmatprep.subr.bf16.mxu0 0
  %3940 = vmatpush1.bf16.msra.mxu0 %v3653
  %3941 = vmatprep.subr.bf16.mxu0 0
  %3942 = vmatpush1.bf16.msra.mxu0 %v3652
  %3943 = vmatprep.subr.bf16.mxu0 0
  %3944 = vmatpush1.bf16.msra.mxu0 %v3651
  %3945 = vmatprep.subr.bf16.mxu0 0
  %3946 = vmatpush1.bf16.msra.mxu0 %v3650
  %3947 = vmatprep.subr.bf16.mxu0 0
  %3948 = vmatpush1.bf16.msra.mxu0 %v3649
  %3949 = vmatprep.subr.bf16.mxu0 0
  %3950 = vmatpush1.bf16.msra.mxu0 %v3648
  %3951 = vmatprep.subr.bf16.mxu0 0
  %3952 = vmatpush1.bf16.msra.mxu0 %v3647
  %3953 = vmatprep.subr.bf16.mxu0 0
  %3954 = vmatpush2.bf16.msra.mxu0 %v3662
  %3955 = vmatprep.subr.bf16.mxu0 0
  %3956 = vmatpush2.bf16.msra.mxu0 %v3661
  %3957 = vmatprep.subr.bf16.mxu0 0
  %3958 = vmatpush2.bf16.msra.mxu0 %v3660
  %3959 = vmatprep.subr.bf16.mxu0 0
  %3960 = vmatpush2.bf16.msra.mxu0 %v3659
  %3961 = vmatprep.subr.bf16.mxu0 0
  %3962 = vmatpush2.bf16.msra.mxu0 %v3658
  %3963 = vmatprep.subr.bf16.mxu0 0
  %3964 = vmatpush2.bf16.msra.mxu0 %v3657
  %3965 = vmatprep.subr.bf16.mxu0 0
  %3966 = vmatpush2.bf16.msra.mxu0 %v3656
  %3967 = vmatprep.subr.bf16.mxu0 0
  %3968 = vmatpush2.bf16.msra.mxu0 %v3655
  %3969 = vmatprep.mubr.bf16.mxu0 %v3270
  %3970 = vmatmul.mubr.bf16.gmra.mxu0 %v3269
  %v3971 = vpop.f32.mrf.mxu0
  %v3972 = vadd.f32 %v3867, %v3971
  %v3973 = vpop.f32.mrf.mxu0
  %v3974 = vpop.f32.mrf.mxu0
  %v3975 = vadd.f32 %v3870, %v3974
  %v3976 = vpop.f32.mrf.mxu0
  %3977 = vmatprep.mubr.bf16.mxu0 %v3277
  %3978 = vmatmul.mubr.bf16.gmra.mxu0 %v3276
  %v3979 = vpop.f32.mrf.mxu0
  %v3980 = vadd.f32 %v3875, %v3979
  %v3981 = vpop.f32.mrf.mxu0
  %v3982 = vpop.f32.mrf.mxu0
  %v3983 = vadd.f32 %v3878, %v3982
  %v3984 = vpop.f32.mrf.mxu0
  %3985 = vmatprep.mubr.bf16.mxu0 %v3284
  %3986 = vmatmul.mubr.bf16.gmra.mxu0 %v3283
  %v3987 = vpop.f32.mrf.mxu0
  %v3988 = vadd.f32 %v3883, %v3987
  %v3989 = vpop.f32.mrf.mxu0
  %v3990 = vpop.f32.mrf.mxu0
  %v3991 = vadd.f32 %v3886, %v3990
  %v3992 = vpop.f32.mrf.mxu0
  %3993 = vmatprep.mubr.bf16.mxu0 %v3291
  %3994 = vmatmul.mubr.bf16.gmra.mxu0 %v3290
  %v3995 = vpop.f32.mrf.mxu0
  %v3996 = vadd.f32 %v3891, %v3995
  %v3997 = vpop.f32.mrf.mxu0
  %v3998 = vpop.f32.mrf.mxu0
  %v3999 = vadd.f32 %v3894, %v3998
  %v4000 = vpop.f32.mrf.mxu0
  %4001 = vmatprep.mubr.bf16.mxu0 %v3298
  %4002 = vmatmul.mubr.bf16.gmra.mxu0 %v3297
  %v4003 = vpop.f32.mrf.mxu0
  %v4004 = vadd.f32 %v3899, %v4003
  %v4005 = vpop.f32.mrf.mxu0
  %v4006 = vpop.f32.mrf.mxu0
  %v4007 = vadd.f32 %v3902, %v4006
  %v4008 = vpop.f32.mrf.mxu0
  %4009 = vmatprep.mubr.bf16.mxu0 %v3305
  %4010 = vmatmul.mubr.bf16.gmra.mxu0 %v3304
  %v4011 = vpop.f32.mrf.mxu0
  %v4012 = vadd.f32 %v3907, %v4011
  %v4013 = vpop.f32.mrf.mxu0
  %v4014 = vpop.f32.mrf.mxu0
  %v4015 = vadd.f32 %v3910, %v4014
  %v4016 = vpop.f32.mrf.mxu0
  %4017 = vmatprep.mubr.bf16.mxu0 %v3312
  %4018 = vmatmul.mubr.bf16.gmra.mxu0 %v3311
  %v4019 = vpop.f32.mrf.mxu0
  %v4020 = vadd.f32 %v3915, %v4019
  %v4021 = vpop.f32.mrf.mxu0
  %v4022 = vpop.f32.mrf.mxu0
  %v4023 = vadd.f32 %v3918, %v4022
  %v4024 = vpop.f32.mrf.mxu0
  %4025 = vmatprep.mubr.bf16.mxu0 %v3319
  %4026 = vmatmul.mubr.bf16.gmra.mxu0 %v3318
  %v4027 = vpop.f32.mrf.mxu0
  %v4028 = vadd.f32 %v3923, %v4027
  %v4029 = vpop.f32.mrf.mxu0
  %v4030 = vpop.f32.mrf.mxu0
  %v4031 = vadd.f32 %v3926, %v4030
  %v4032 = vpop.f32.mrf.mxu0
  %4033 = vmatprep.mubr.bf16.mxu0 %v3326
  %4034 = vmatmul.mubr.bf16.gmra.mxu0 %v3325
  %v4035 = vpop.f32.mrf.mxu0
  %v4036 = vadd.f32 %v3931, %v4035
  %v4037 = vpop.f32.mrf.mxu0
  %v4038 = vpop.f32.mrf.mxu0
  %v4039 = vadd.f32 %v3934, %v4038
  %v4040 = vpop.f32.mrf.mxu0
  %4041 = vdwg.mxu0
  %4042 = vmatprep.subr.bf16.mxu0 0
  %4043 = vmatpush1.bf16.msra.mxu0 %v3670
  %4044 = vmatprep.subr.bf16.mxu0 0
  %4045 = vmatpush1.bf16.msra.mxu0 %v3669
  %4046 = vmatprep.subr.bf16.mxu0 0
  %4047 = vmatpush1.bf16.msra.mxu0 %v3668
  %4048 = vmatprep.subr.bf16.mxu0 0
  %4049 = vmatpush1.bf16.msra.mxu0 %v3667
  %4050 = vmatprep.subr.bf16.mxu0 0
  %4051 = vmatpush1.bf16.msra.mxu0 %v3666
  %4052 = vmatprep.subr.bf16.mxu0 0
  %4053 = vmatpush1.bf16.msra.mxu0 %v3665
  %4054 = vmatprep.subr.bf16.mxu0 0
  %4055 = vmatpush1.bf16.msra.mxu0 %v3664
  %4056 = vmatprep.subr.bf16.mxu0 0
  %4057 = vmatpush1.bf16.msra.mxu0 %v3663
  %4058 = vmatprep.subr.bf16.mxu0 0
  %4059 = vmatpush2.bf16.msra.mxu0 0
  %4060 = vmatprep.subr.bf16.mxu0 0
  %4061 = vmatpush2.bf16.msra.mxu0 0
  %4062 = vmatprep.subr.bf16.mxu0 0
  %4063 = vmatpush2.bf16.msra.mxu0 0
  %4064 = vmatprep.subr.bf16.mxu0 0
  %4065 = vmatpush2.bf16.msra.mxu0 0
  %4066 = vmatprep.subr.bf16.mxu0 0
  %4067 = vmatpush2.bf16.msra.mxu0 0
  %4068 = vmatprep.subr.bf16.mxu0 0
  %4069 = vmatpush2.bf16.msra.mxu0 0
  %4070 = vmatprep.subr.bf16.mxu0 0
  %4071 = vmatpush2.bf16.msra.mxu0 0
  %4072 = vmatprep.subr.bf16.mxu0 0
  %4073 = vmatpush2.bf16.msra.mxu0 0
  %4074 = vmatprep.mubr.bf16.mxu0 0
  %4075 = vmatmul.mubr.bf16.gmra.mxu0 %v3271
  %v4076 = vpop.f32.mrf.mxu0
  %v4077 = vadd.f32 %v3972, %v4076
  %v4078 = vpop.f32.mrf.mxu0
  %v4079 = vpop.f32.mrf.mxu0
  %v4080 = vadd.f32 %v3975, %v4079
  %v4081 = vpop.f32.mrf.mxu0
  %4082 = vmatprep.mubr.bf16.mxu0 0
  %4083 = vmatmul.mubr.bf16.gmra.mxu0 %v3278
  %v4084 = vpop.f32.mrf.mxu0
  %v4085 = vadd.f32 %v3980, %v4084
  %v4086 = vpop.f32.mrf.mxu0
  %v4087 = vpop.f32.mrf.mxu0
  %v4088 = vadd.f32 %v3983, %v4087
  %v4089 = vpop.f32.mrf.mxu0
  %4090 = vmatprep.mubr.bf16.mxu0 0
  %4091 = vmatmul.mubr.bf16.gmra.mxu0 %v3285
  %v4092 = vpop.f32.mrf.mxu0
  %v4093 = vadd.f32 %v3988, %v4092
  %v4094 = vpop.f32.mrf.mxu0
  %v4095 = vpop.f32.mrf.mxu0
  %v4096 = vadd.f32 %v3991, %v4095
  %v4097 = vpop.f32.mrf.mxu0
  %4098 = vmatprep.mubr.bf16.mxu0 0
  %4099 = vmatmul.mubr.bf16.gmra.mxu0 %v3292
  %v4100 = vpop.f32.mrf.mxu0
  %v4101 = vadd.f32 %v3996, %v4100
  %v4102 = vpop.f32.mrf.mxu0
  %v4103 = vpop.f32.mrf.mxu0
  %v4104 = vadd.f32 %v3999, %v4103
  %v4105 = vpop.f32.mrf.mxu0
  %4106 = vmatprep.mubr.bf16.mxu0 0
  %4107 = vmatmul.mubr.bf16.gmra.mxu0 %v3299
  %v4108 = vpop.f32.mrf.mxu0
  %v4109 = vadd.f32 %v4004, %v4108
  %v4110 = vpop.f32.mrf.mxu0
  %v4111 = vpop.f32.mrf.mxu0
  %v4112 = vadd.f32 %v4007, %v4111
  %v4113 = vpop.f32.mrf.mxu0
  %4114 = vmatprep.mubr.bf16.mxu0 0
  %4115 = vmatmul.mubr.bf16.gmra.mxu0 %v3306
  %v4116 = vpop.f32.mrf.mxu0
  %v4117 = vadd.f32 %v4012, %v4116
  %v4118 = vpop.f32.mrf.mxu0
  %v4119 = vpop.f32.mrf.mxu0
  %v4120 = vadd.f32 %v4015, %v4119
  %v4121 = vpop.f32.mrf.mxu0
  %4122 = vmatprep.mubr.bf16.mxu0 0
  %4123 = vmatmul.mubr.bf16.gmra.mxu0 %v3313
  %v4124 = vpop.f32.mrf.mxu0
  %v4125 = vadd.f32 %v4020, %v4124
  %v4126 = vpop.f32.mrf.mxu0
  %v4127 = vpop.f32.mrf.mxu0
  %v4128 = vadd.f32 %v4023, %v4127
  %v4129 = vpop.f32.mrf.mxu0
  %4130 = vmatprep.mubr.bf16.mxu0 0
  %4131 = vmatmul.mubr.bf16.gmra.mxu0 %v3320
  %v4132 = vpop.f32.mrf.mxu0
  %v4133 = vadd.f32 %v4028, %v4132
  %v4134 = vpop.f32.mrf.mxu0
  %v4135 = vpop.f32.mrf.mxu0
  %v4136 = vadd.f32 %v4031, %v4135
  %v4137 = vpop.f32.mrf.mxu0
  %4138 = vmatprep.mubr.bf16.mxu0 0
  %4139 = vmatmul.mubr.bf16.gmra.mxu0 %v3327
  %v4140 = vpop.f32.mrf.mxu0
  %v4141 = vadd.f32 %v4036, %v4140
  %v4142 = vpop.f32.mrf.mxu0
  %v4143 = vpop.f32.mrf.mxu0
  %v4144 = vadd.f32 %v4039, %v4143
  %v4145 = vpop.f32.mrf.mxu0
  %4146 = vdwg.mxu0
  %v4147 = vadd.f32 %v4077, %v4080
  %v4148 = vadd.f32 %v4147, %v4085
  %v4149 = vadd.f32 %v4148, %v4088
  %v4150 = vadd.f32 %v4149, %v4093
  %v4151 = vadd.f32 %v4150, %v4096
  %v4152 = vadd.f32 %v4151, %v4101
  %v4153 = vadd.f32 %v4152, %v4104
  %v4154 = vadd.f32 %v4153, %v4109
  %v4155 = vadd.f32 %v4154, %v4112
  %v4156 = vadd.f32 %v4155, %v4117
  %v4157 = vadd.f32 %v4156, %v4120
  %v4158 = vadd.f32 %v4157, %v4125
  %v4159 = vadd.f32 %v4158, %v4128
  %v4160 = vadd.f32 %v4159, %v4133
  %v4161 = vadd.f32 %v4160, %v4136
  %v4162 = vadd.f32 %v4161, %v4141
  %v4163 = vadd.f32 %v4162, %v4144
  %v4164 = vrot.slane %v4163, 4
  %v4165 = vadd.f32 %v4163, %v4164
  %v4166 = vrot.slane %v4165, 2
  %v4167 = vadd.f32 %v4165, %v4166
  %v4168 = vrot.slane %v4167, 1
  %v4169 = vadd.f32 %v4167, %v4168
  %v4170 = vmul.f32 %v4077, %v4077
  %v4171 = vmul.f32 %v4080, %v4080
  %v4172 = vmul.f32 %v4085, %v4085
  %v4173 = vmul.f32 %v4088, %v4088
  %v4174 = vmul.f32 %v4093, %v4093
  %v4175 = vmul.f32 %v4096, %v4096
  %v4176 = vmul.f32 %v4101, %v4101
  %v4177 = vmul.f32 %v4104, %v4104
  %v4178 = vmul.f32 %v4109, %v4109
  %v4179 = vmul.f32 %v4112, %v4112
  %v4180 = vmul.f32 %v4117, %v4117
  %v4181 = vmul.f32 %v4120, %v4120
  %v4182 = vmul.f32 %v4125, %v4125
  %v4183 = vmul.f32 %v4128, %v4128
  %v4184 = vmul.f32 %v4133, %v4133
  %v4185 = vmul.f32 %v4136, %v4136
  %v4186 = vmul.f32 %v4141, %v4141
  %v4187 = vmul.f32 %v4144, %v4144
  %v4188 = vadd.f32 %v4170, %v4171
  %v4189 = vadd.f32 %v4188, %v4172
  %v4190 = vadd.f32 %v4189, %v4173
  %v4191 = vadd.f32 %v4190, %v4174
  %v4192 = vadd.f32 %v4191, %v4175
  %v4193 = vadd.f32 %v4192, %v4176
  %v4194 = vadd.f32 %v4193, %v4177
  %v4195 = vadd.f32 %v4194, %v4178
  %v4196 = vadd.f32 %v4195, %v4179
  %v4197 = vadd.f32 %v4196, %v4180
  %v4198 = vadd.f32 %v4197, %v4181
  %v4199 = vadd.f32 %v4198, %v4182
  %v4200 = vadd.f32 %v4199, %v4183
  %v4201 = vadd.f32 %v4200, %v4184
  %v4202 = vadd.f32 %v4201, %v4185
  %v4203 = vadd.f32 %v4202, %v4186
  %v4204 = vadd.f32 %v4203, %v4187
  %v4205 = vrot.slane %v4204, 4
  %v4206 = vadd.f32 %v4204, %v4205
  %v4207 = vrot.slane %v4206, 2
  %v4208 = vadd.f32 %v4206, %v4207
  %v4209 = vrot.slane %v4208, 1
  %v4210 = vadd.f32 %v4208, %v4209
  %v4211 = vmul.f32 %v4169, 0.0069444445
  %v4212 = vmul.f32 %v4210, 0.0069444445
  %v4213 = vmul.f32 %v4211, %v4211
  %v4214 = vsub.f32 %v4212, %v4213
  %v4215 = vmax.f32 %v4214, 0.0
  %v4216 = vld [vmem:[%s2] sm:$0x1]
  %v4217 = vadd.f32 %v4215, 0.001
  %v4218 = vrsqrt.pop %v4217
  %v4219 = vmul.f32 %v4216, %v4218
  %v4220 = vld [vmem:[%s3] sm:$0x1]
  %v4221 = vmul.f32 %v4211, %v4219
  %v4222 = vsub.f32 %v4220, %v4221
  %v4224 = vlaneseq
  %v4225 = vshrl.u32 %v4224, 7
  %v4226 = vsub.s32 0, %v4225
  %v4227 = vrot.slane %v4219, %v4226
  %v4229 = vmul.f32 %v4077, %v4227
  %v4230 = vmul.f32 %v4080, %v4227
  %v4231 = vmul.f32 %v4085, %v4227
  %v4232 = vmul.f32 %v4088, %v4227
  %v4233 = vmul.f32 %v4093, %v4227
  %v4234 = vmul.f32 %v4096, %v4227
  %v4235 = vmul.f32 %v4101, %v4227
  %v4236 = vmul.f32 %v4104, %v4227
  %v4237 = vmul.f32 %v4109, %v4227
  %v4238 = vmul.f32 %v4112, %v4227
  %v4239 = vmul.f32 %v4117, %v4227
  %v4240 = vmul.f32 %v4120, %v4227
  %v4241 = vmul.f32 %v4125, %v4227
  %v4242 = vmul.f32 %v4128, %v4227
  %v4243 = vmul.f32 %v4133, %v4227
  %v4244 = vmul.f32 %v4136, %v4227
  %v4245 = vmul.f32 %v4141, %v4227
  %v4246 = vmul.f32 %v4144, %v4227
  %v4248 = vlaneseq
  %v4249 = vshrl.u32 %v4248, 7
  %v4250 = vsub.s32 0, %v4249
  %v4251 = vrot.slane %v4222, %v4250
  %v4253 = vadd.f32 %v4229, %v4251
  %v4254 = vadd.f32 %v4230, %v4251
  %v4255 = vadd.f32 %v4231, %v4251
  %v4256 = vadd.f32 %v4232, %v4251
  %v4257 = vadd.f32 %v4233, %v4251
  %v4258 = vadd.f32 %v4234, %v4251
  %v4259 = vadd.f32 %v4235, %v4251
  %v4260 = vadd.f32 %v4236, %v4251
  %v4261 = vadd.f32 %v4237, %v4251
  %v4262 = vadd.f32 %v4238, %v4251
  %v4263 = vadd.f32 %v4239, %v4251
  %v4264 = vadd.f32 %v4240, %v4251
  %v4265 = vadd.f32 %v4241, %v4251
  %v4266 = vadd.f32 %v4242, %v4251
  %v4267 = vadd.f32 %v4243, %v4251
  %v4268 = vadd.f32 %v4244, %v4251
  %v4269 = vadd.f32 %v4245, %v4251
  %v4270 = vadd.f32 %v4246, %v4251
  %v4271 = vmax.f32 %v4253, 0.0
  %v4272 = vmax.f32 %v4254, 0.0
  %v4273 = vmax.f32 %v4255, 0.0
  %v4274 = vmax.f32 %v4256, 0.0
  %v4275 = vmax.f32 %v4257, 0.0
  %v4276 = vmax.f32 %v4258, 0.0
  %v4277 = vmax.f32 %v4259, 0.0
  %v4278 = vmax.f32 %v4260, 0.0
  %v4279 = vmax.f32 %v4261, 0.0
  %v4280 = vmax.f32 %v4262, 0.0
  %v4281 = vmax.f32 %v4263, 0.0
  %v4282 = vmax.f32 %v4264, 0.0
  %v4283 = vmax.f32 %v4265, 0.0
  %v4284 = vmax.f32 %v4266, 0.0
  %v4285 = vmax.f32 %v4267, 0.0
  %v4286 = vmax.f32 %v4268, 0.0
  %v4287 = vmax.f32 %v4269, 0.0
  %v4288 = vmax.f32 %v4270, 0.0
  %v4289 = vpack.c.bf16 %v4272, %v4271
  %v4290 = vpack.c.bf16 %v4274, %v4273
  %v4291 = vpack.c.bf16 %v4276, %v4275
  %v4292 = vpack.c.bf16 %v4278, %v4277
  %v4293 = vpack.c.bf16 %v4280, %v4279
  %v4294 = vpack.c.bf16 %v4282, %v4281
  %v4295 = vpack.c.bf16 %v4284, %v4283
  %v4296 = vpack.c.bf16 %v4286, %v4285
  %v4297 = vpack.c.bf16 %v4288, %v4287
  %4298 = vst [vmem:[#allocation4] sm:$0xf] 0
  %4299 = vst [vmem:[#allocation4 + $0x4] sm:$0xf] 0
  %4300 = vst [vmem:[#allocation4 + $0x8] sm:$0xf] 0
  %4301 = vst [vmem:[#allocation4 + $0xc] sm:$0xf] 0
  %4302 = vst [vmem:[#allocation4 + $0x10] sm:$0x3] 0
  %4303 = vst [vmem:[#allocation4 + $0x58] sm:$0xc] 0
  %4304 = vst [vmem:[#allocation4 + $0x5c] sm:$0xf] 0
  %4305 = vst [vmem:[#allocation4 + $0x60] sm:$0xf] 0
  %4306 = vst [vmem:[#allocation4 + $0x64] sm:$0xf] 0
  %4307 = vst [vmem:[#allocation4 + $0x68] sm:$0xf] 0
  %v4317 = vunpack.c.l.b16 %v4289
  %v4318 = vunpack.c.h.b16 %v4289
  %v4319 = vunpack.c.l.b16 %v4290
  %v4320 = vunpack.c.h.b16 %v4290
  %v4321 = vunpack.c.l.b16 %v4291
  %v4322 = vunpack.c.h.b16 %v4291
  %v4323 = vunpack.c.l.b16 %v4292
  %v4324 = vunpack.c.h.b16 %v4292
  %v4325 = vunpack.c.l.b16 %v4293
  %v4326 = vunpack.c.h.b16 %v4293
  %v4327 = vunpack.c.l.b16 %v4294
  %v4328 = vunpack.c.h.b16 %v4294
  %v4329 = vunpack.c.l.b16 %v4295
  %v4330 = vunpack.c.h.b16 %v4295
  %v4331 = vunpack.c.l.b16 %v4296
  %v4332 = vunpack.c.h.b16 %v4296
  %v4333 = vunpack.c.l.b16 %v4297
  %v4334 = vunpack.c.h.b16 %v4297
  %v4335 = vpack.c.b16 %v4317, %v4317
  %v4336 = vpack.c.b16 %v4318, %v4318
  %v4337 = vpack.c.b16 %v4319, %v4319
  %v4338 = vpack.c.b16 %v4320, %v4320
  %v4339 = vpack.c.b16 %v4321, %v4321
  %v4340 = vpack.c.b16 %v4322, %v4322
  %v4341 = vpack.c.b16 %v4323, %v4323
  %v4342 = vpack.c.b16 %v4324, %v4324
  %v4343 = vpack.c.b16 %v4325, %v4325
  %v4344 = vpack.c.b16 %v4326, %v4326
  %v4345 = vpack.c.b16 %v4327, %v4327
  %v4346 = vpack.c.b16 %v4328, %v4328
  %v4347 = vpack.c.b16 %v4329, %v4329
  %v4348 = vpack.c.b16 %v4330, %v4330
  %v4349 = vpack.c.b16 %v4331, %v4331
  %v4350 = vpack.c.b16 %v4332, %v4332
  %v4351 = vpack.c.b16 %v4333, %v4333
  %v4352 = vpack.c.b16 %v4334, %v4334
  %v4353 = vrot.slane %v4335, 6
  %v4354 = vrot.slane %v4353, 4
  %v4355 = vrot.slane %v4336, 6
  %v4356 = vsel %vm1782, %v4354, %v4355
  %v4357 = vrot.slane %v4355, 4
  %v4358 = vrot.slane %v4337, 6
  %v4359 = vsel %vm1782, %v4357, %v4358
  %v4360 = vrot.slane %v4358, 4
  %v4361 = vrot.slane %v4338, 6
  %v4362 = vsel %vm1782, %v4360, %v4361
  %v4363 = vrot.slane %v4361, 4
  %v4364 = vrot.slane %v4339, 6
  %v4365 = vsel %vm1782, %v4363, %v4364
  %v4366 = vrot.slane %v4364, 4
  %v4367 = vrot.slane %v4340, 6
  %v4368 = vsel %vm1782, %v4366, %v4367
  %v4369 = vrot.slane %v4367, 4
  %v4370 = vrot.slane %v4341, 6
  %v4371 = vsel %vm1782, %v4369, %v4370
  %v4372 = vrot.slane %v4370, 4
  %v4373 = vrot.slane %v4342, 6
  %v4374 = vsel %vm1782, %v4372, %v4373
  %v4375 = vrot.slane %v4373, 4
  %v4376 = vrot.slane %v4343, 6
  %v4377 = vsel %vm1782, %v4375, %v4376
  %v4378 = vrot.slane %v4376, 4
  %v4379 = vrot.slane %v4344, 6
  %v4380 = vsel %vm1782, %v4378, %v4379
  %v4381 = vrot.slane %v4379, 4
  %v4382 = vrot.slane %v4345, 6
  %v4383 = vsel %vm1782, %v4381, %v4382
  %v4384 = vrot.slane %v4382, 4
  %v4385 = vrot.slane %v4346, 6
  %v4386 = vsel %vm1782, %v4384, %v4385
  %v4387 = vrot.slane %v4385, 4
  %v4388 = vrot.slane %v4347, 6
  %v4389 = vsel %vm1782, %v4387, %v4388
  %v4390 = vrot.slane %v4388, 4
  %v4391 = vrot.slane %v4348, 6
  %v4392 = vsel %vm1782, %v4390, %v4391
  %v4393 = vrot.slane %v4391, 4
  %v4394 = vrot.slane %v4349, 6
  %v4395 = vsel %vm1782, %v4393, %v4394
  %v4396 = vrot.slane %v4394, 4
  %v4397 = vrot.slane %v4350, 6
  %v4398 = vsel %vm1782, %v4396, %v4397
  %v4399 = vrot.slane %v4397, 4
  %v4400 = vrot.slane %v4351, 6
  %v4401 = vsel %vm1782, %v4399, %v4400
  %v4402 = vrot.slane %v4400, 4
  %v4403 = vrot.slane %v4352, 6
  %v4404 = vsel %vm1782, %v4402, %v4403
  %v4405 = vrot.slane %v4403, 4
  %4425 = vst [vmem:[#allocation4 + $0x10] sm:$0xc] %v4353
  %4426 = vst [vmem:[#allocation4 + $0x14] sm:$0xf] %v4356
  %4427 = vst [vmem:[#allocation4 + $0x18] sm:$0xf] %v4359
  %4428 = vst [vmem:[#allocation4 + $0x1c] sm:$0xf] %v4362
  %4429 = vst [vmem:[#allocation4 + $0x20] sm:$0xf] %v4365
  %4430 = vst [vmem:[#allocation4 + $0x24] sm:$0xf] %v4368
  %4431 = vst [vmem:[#allocation4 + $0x28] sm:$0xf] %v4371
  %4432 = vst [vmem:[#allocation4 + $0x2c] sm:$0xf] %v4374
  %4433 = vst [vmem:[#allocation4 + $0x30] sm:$0xf] %v4377
  %4434 = vst [vmem:[#allocation4 + $0x34] sm:$0xf] %v4380
  %4435 = vst [vmem:[#allocation4 + $0x38] sm:$0xf] %v4383
  %4436 = vst [vmem:[#allocation4 + $0x3c] sm:$0xf] %v4386
  %4437 = vst [vmem:[#allocation4 + $0x40] sm:$0xf] %v4389
  %4438 = vst [vmem:[#allocation4 + $0x44] sm:$0xf] %v4392
  %4439 = vst [vmem:[#allocation4 + $0x48] sm:$0xf] %v4395
  %4440 = vst [vmem:[#allocation4 + $0x4c] sm:$0xf] %v4398
  %4441 = vst [vmem:[#allocation4 + $0x50] sm:$0xf] %v4401
  %4442 = vst [vmem:[#allocation4 + $0x54] sm:$0xf] %v4404
  %4443 = vst [vmem:[#allocation4 + $0x58] sm:$0x3] %v4405
  %v4444 = vld [vmem:[#allocation4] sm:$0xf]
  %v4445 = vld [vmem:[#allocation4 + $0x4] sm:$0xf]
  %v4446 = vld [vmem:[#allocation4 + $0x8] sm:$0xf]
  %v4447 = vld [vmem:[#allocation4 + $0xc] sm:$0xf]
  %v4448 = vld [vmem:[#allocation4 + $0x10] sm:$0xf]
  %v4449 = vld [vmem:[#allocation4 + $0x14] sm:$0xf]
  %v4450 = vld [vmem:[#allocation4 + $0x18] sm:$0xf]
  %v4451 = vld [vmem:[#allocation4 + $0x1c] sm:$0xf]
  %v4452 = vld [vmem:[#allocation4 + $0x20] sm:$0xf]
  %v4453 = vld [vmem:[#allocation4 + $0x24] sm:$0xf]
  %v4454 = vld [vmem:[#allocation4 + $0x28] sm:$0xf]
  %v4455 = vld [vmem:[#allocation4 + $0x2c] sm:$0xf]
  %v4456 = vld [vmem:[#allocation4 + $0x30] sm:$0xf]
  %v4457 = vld [vmem:[#allocation4 + $0x34] sm:$0xf]
  %v4458 = vld [vmem:[#allocation4 + $0x38] sm:$0xf]
  %v4459 = vld [vmem:[#allocation4 + $0x3c] sm:$0xf]
  %v4460 = vld [vmem:[#allocation4 + $0x40] sm:$0xf]
  %v4461 = vld [vmem:[#allocation4 + $0x44] sm:$0xf]
  %4462 = vst [vmem:[#allocation3] sm:$0xf] %v4444
  %4463 = vst [vmem:[#allocation3 + $0x1c] sm:$0xf] %v4445
  %4464 = vst [vmem:[#allocation3 + $0x38] sm:$0xf] %v4446
  %4465 = vst [vmem:[#allocation3 + $0x54] sm:$0xf] %v4447
  %4466 = vst [vmem:[#allocation3 + $0x70] sm:$0xf] %v4448
  %4467 = vst [vmem:[#allocation3 + $0x8c] sm:$0xf] %v4449
  %4468 = vst [vmem:[#allocation3 + $0xa8] sm:$0xf] %v4450
  %4469 = vst [vmem:[#allocation3 + $0xc4] sm:$0xf] %v4451
  %4470 = vst [vmem:[#allocation3 + $0xe0] sm:$0xf] %v4452
  %4471 = vst [vmem:[#allocation3 + $0xfc] sm:$0xf] %v4453
  %4472 = vst [vmem:[#allocation3 + $0x118] sm:$0xf] %v4454
  %4473 = vst [vmem:[#allocation3 + $0x134] sm:$0xf] %v4455
  %4474 = vst [vmem:[#allocation3 + $0x150] sm:$0xf] %v4456
  %4475 = vst [vmem:[#allocation3 + $0x16c] sm:$0xf] %v4457
  %4476 = vst [vmem:[#allocation3 + $0x188] sm:$0xf] %v4458
  %4477 = vst [vmem:[#allocation3 + $0x1a4] sm:$0xf] %v4459
  %4478 = vst [vmem:[#allocation3 + $0x1c0] sm:$0xf] %v4460
  %4479 = vst [vmem:[#allocation3 + $0x1dc] sm:$0xf] %v4461
  %v4480 = vld [vmem:[#allocation4 + $0x4] sm:$0xc]
  %v4481 = vld [vmem:[#allocation4 + $0x8] sm:$0xf]
  %v4482 = vld [vmem:[#allocation4 + $0xc] sm:$0xf]
  %v4483 = vld [vmem:[#allocation4 + $0x10] sm:$0xf]
  %v4484 = vld [vmem:[#allocation4 + $0x14] sm:$0xf]
  %v4485 = vld [vmem:[#allocation4 + $0x18] sm:$0xf]
  %v4486 = vld [vmem:[#allocation4 + $0x1c] sm:$0xf]
  %v4487 = vld [vmem:[#allocation4 + $0x20] sm:$0xf]
  %v4488 = vld [vmem:[#allocation4 + $0x24] sm:$0xf]
  %v4489 = vld [vmem:[#allocation4 + $0x28] sm:$0xf]
  %v4490 = vld [vmem:[#allocation4 + $0x2c] sm:$0xf]
  %v4491 = vld [vmem:[#allocation4 + $0x30] sm:$0xf]
  %v4492 = vld [vmem:[#allocation4 + $0x34] sm:$0xf]
  %v4493 = vld [vmem:[#allocation4 + $0x38] sm:$0xf]
  %v4494 = vld [vmem:[#allocation4 + $0x3c] sm:$0xf]
  %v4495 = vld [vmem:[#allocation4 + $0x40] sm:$0xf]
  %v4496 = vld [vmem:[#allocation4 + $0x44] sm:$0xf]
  %v4497 = vld [vmem:[#allocation4 + $0x48] sm:$0xf]
  %v4498 = vld [vmem:[#allocation4 + $0x4c] sm:$0x3]
  %v4518 = vrot.slane %v4480, 6
  %v4519 = vrot.slane %v4518, 4
  %v4520 = vrot.slane %v4481, 6
  %v4521 = vsel %vm1782, %v4519, %v4520
  %v4522 = vrot.slane %v4520, 4
  %v4523 = vrot.slane %v4482, 6
  %v4524 = vsel %vm1782, %v4522, %v4523
  %v4525 = vrot.slane %v4523, 4
  %v4526 = vrot.slane %v4483, 6
  %v4527 = vsel %vm1782, %v4525, %v4526
  %v4528 = vrot.slane %v4526, 4
  %v4529 = vrot.slane %v4484, 6
  %v4530 = vsel %vm1782, %v4528, %v4529
  %v4531 = vrot.slane %v4529, 4
  %v4532 = vrot.slane %v4485, 6
  %v4533 = vsel %vm1782, %v4531, %v4532
  %v4534 = vrot.slane %v4532, 4
  %v4535 = vrot.slane %v4486, 6
  %v4536 = vsel %vm1782, %v4534, %v4535
  %v4537 = vrot.slane %v4535, 4
  %v4538 = vrot.slane %v4487, 6
  %v4539 = vsel %vm1782, %v4537, %v4538
  %v4540 = vrot.slane %v4538, 4
  %v4541 = vrot.slane %v4488, 6
  %v4542 = vsel %vm1782, %v4540, %v4541
  %v4543 = vrot.slane %v4541, 4
  %v4544 = vrot.slane %v4489, 6
  %v4545 = vsel %vm1782, %v4543, %v4544
  %v4546 = vrot.slane %v4544, 4
  %v4547 = vrot.slane %v4490, 6
  %v4548 = vsel %vm1782, %v4546, %v4547
  %v4549 = vrot.slane %v4547, 4
  %v4550 = vrot.slane %v4491, 6
  %v4551 = vsel %vm1782, %v4549, %v4550
  %v4552 = vrot.slane %v4550, 4
  %v4553 = vrot.slane %v4492, 6
  %v4554 = vsel %vm1782, %v4552, %v4553
  %v4555 = vrot.slane %v4553, 4
  %v4556 = vrot.slane %v4493, 6
  %v4557 = vsel %vm1782, %v4555, %v4556
  %v4558 = vrot.slane %v4556, 4
  %v4559 = vrot.slane %v4494, 6
  %v4560 = vsel %vm1782, %v4558, %v4559
  %v4561 = vrot.slane %v4559, 4
  %v4562 = vrot.slane %v4495, 6
  %v4563 = vsel %vm1782, %v4561, %v4562
  %v4564 = vrot.slane %v4562, 4
  %v4565 = vrot.slane %v4496, 6
  %v4566 = vsel %vm1782, %v4564, %v4565
  %v4567 = vrot.slane %v4565, 4
  %v4568 = vrot.slane %v4497, 6
  %v4569 = vsel %vm1782, %v4567, %v4568
  %v4570 = vrot.slane %v4568, 4
  %v4571 = vrot.slane %v4498, 6
  %v4572 = vsel %vm1782, %v4570, %v4571
  %4591 = vst [vmem:[#allocation3 + $0x4] sm:$0xf] %v4521
  %4592 = vst [vmem:[#allocation3 + $0x20] sm:$0xf] %v4524
  %4593 = vst [vmem:[#allocation3 + $0x3c] sm:$0xf] %v4527
  %4594 = vst [vmem:[#allocation3 + $0x58] sm:$0xf] %v4530
  %4595 = vst [vmem:[#allocation3 + $0x74] sm:$0xf] %v4533
  %4596 = vst [vmem:[#allocation3 + $0x90] sm:$0xf] %v4536
  %4597 = vst [vmem:[#allocation3 + $0xac] sm:$0xf] %v4539
  %4598 = vst [vmem:[#allocation3 + $0xc8] sm:$0xf] %v4542
  %4599 = vst [vmem:[#allocation3 + $0xe4] sm:$0xf] %v4545
  %4600 = vst [vmem:[#allocation3 + $0x100] sm:$0xf] %v4548
  %4601 = vst [vmem:[#allocation3 + $0x11c] sm:$0xf] %v4551
  %4602 = vst [vmem:[#allocation3 + $0x138] sm:$0xf] %v4554
  %4603 = vst [vmem:[#allocation3 + $0x154] sm:$0xf] %v4557
  %4604 = vst [vmem:[#allocation3 + $0x170] sm:$0xf] %v4560
  %4605 = vst [vmem:[#allocation3 + $0x18c] sm:$0xf] %v4563
  %4606 = vst [vmem:[#allocation3 + $0x1a8] sm:$0xf] %v4566
  %4607 = vst [vmem:[#allocation3 + $0x1c4] sm:$0xf] %v4569
  %4608 = vst [vmem:[#allocation3 + $0x1e0] sm:$0xf] %v4572
  %v4609 = vld [vmem:[#allocation4 + $0xc] sm:$0xf]
  %v4610 = vld [vmem:[#allocation4 + $0x10] sm:$0xf]
  %v4611 = vld [vmem:[#allocation4 + $0x14] sm:$0xf]
  %v4612 = vld [vmem:[#allocation4 + $0x18] sm:$0xf]
  %v4613 = vld [vmem:[#allocation4 + $0x1c] sm:$0xf]
  %v4614 = vld [vmem:[#allocation4 + $0x20] sm:$0xf]
  %v4615 = vld [vmem:[#allocation4 + $0x24] sm:$0xf]
  %v4616 = vld [vmem:[#allocation4 + $0x28] sm:$0xf]
  %v4617 = vld [vmem:[#allocation4 + $0x2c] sm:$0xf]
  %v4618 = vld [vmem:[#allocation4 + $0x30] sm:$0xf]
  %v4619 = vld [vmem:[#allocation4 + $0x34] sm:$0xf]
  %v4620 = vld [vmem:[#allocation4 + $0x38] sm:$0xf]
  %v4621 = vld [vmem:[#allocation4 + $0x3c] sm:$0xf]
  %v4622 = vld [vmem:[#allocation4 + $0x40] sm:$0xf]
  %v4623 = vld [vmem:[#allocation4 + $0x44] sm:$0xf]
  %v4624 = vld [vmem:[#allocation4 + $0x48] sm:$0xf]
  %v4625 = vld [vmem:[#allocation4 + $0x4c] sm:$0xf]
  %v4626 = vld [vmem:[#allocation4 + $0x50] sm:$0xf]
  %4627 = vst [vmem:[#allocation3 + $0x8] sm:$0xf] %v4609
  %4628 = vst [vmem:[#allocation3 + $0x24] sm:$0xf] %v4610
  %4629 = vst [vmem:[#allocation3 + $0x40] sm:$0xf] %v4611
  %4630 = vst [vmem:[#allocation3 + $0x5c] sm:$0xf] %v4612
  %4631 = vst [vmem:[#allocation3 + $0x78] sm:$0xf] %v4613
  %4632 = vst [vmem:[#allocation3 + $0x94] sm:$0xf] %v4614
  %4633 = vst [vmem:[#allocation3 + $0xb0] sm:$0xf] %v4615
  %4634 = vst [vmem:[#allocation3 + $0xcc] sm:$0xf] %v4616
  %4635 = vst [vmem:[#allocation3 + $0xe8] sm:$0xf] %v4617
  %4636 = vst [vmem:[#allocation3 + $0x104] sm:$0xf] %v4618
  %4637 = vst [vmem:[#allocation3 + $0x120] sm:$0xf] %v4619
  %4638 = vst [vmem:[#allocation3 + $0x13c] sm:$0xf] %v4620
  %4639 = vst [vmem:[#allocation3 + $0x158] sm:$0xf] %v4621
  %4640 = vst [vmem:[#allocation3 + $0x174] sm:$0xf] %v4622
  %4641 = vst [vmem:[#allocation3 + $0x190] sm:$0xf] %v4623
  %4642 = vst [vmem:[#allocation3 + $0x1ac] sm:$0xf] %v4624
  %4643 = vst [vmem:[#allocation3 + $0x1c8] sm:$0xf] %v4625
  %4644 = vst [vmem:[#allocation3 + $0x1e4] sm:$0xf] %v4626
  %v4645 = vld [vmem:[#allocation4 + $0x10] sm:$0xc]
  %v4646 = vld [vmem:[#allocation4 + $0x14] sm:$0xf]
  %v4647 = vld [vmem:[#allocation4 + $0x18] sm:$0xf]
  %v4648 = vld [vmem:[#allocation4 + $0x1c] sm:$0xf]
  %v4649 = vld [vmem:[#allocation4 + $0x20] sm:$0xf]
  %v4650 = vld [vmem:[#allocation4 + $0x24] sm:$0xf]
  %v4651 = vld [vmem:[#allocation4 + $0x28] sm:$0xf]
  %v4652 = vld [vmem:[#allocation4 + $0x2c] sm:$0xf]
  %v4653 = vld [vmem:[#allocation4 + $0x30] sm:$0xf]
  %v4654 = vld [vmem:[#allocation4 + $0x34] sm:$0xf]
  %v4655 = vld [vmem:[#allocation4 + $0x38] sm:$0xf]
  %v4656 = vld [vmem:[#allocation4 + $0x3c] sm:$0xf]
  %v4657 = vld [vmem:[#allocation4 + $0x40] sm:$0xf]
  %v4658 = vld [vmem:[#allocation4 + $0x44] sm:$0xf]
  %v4659 = vld [vmem:[#allocation4 + $0x48] sm:$0xf]
  %v4660 = vld [vmem:[#allocation4 + $0x4c] sm:$0xf]
  %v4661 = vld [vmem:[#allocation4 + $0x50] sm:$0xf]
  %v4662 = vld [vmem:[#allocation4 + $0x54] sm:$0xf]
  %v4663 = vld [vmem:[#allocation4 + $0x58] sm:$0x3]
  %v4683 = vrot.slane %v4645, 6
  %v4684 = vrot.slane %v4683, 4
  %v4685 = vrot.slane %v4646, 6
  %v4686 = vsel %vm1782, %v4684, %v4685
  %v4687 = vrot.slane %v4685, 4
  %v4688 = vrot.slane %v4647, 6
  %v4689 = vsel %vm1782, %v4687, %v4688
  %v4690 = vrot.slane %v4688, 4
  %v4691 = vrot.slane %v4648, 6
  %v4692 = vsel %vm1782, %v4690, %v4691
  %v4693 = vrot.slane %v4691, 4
  %v4694 = vrot.slane %v4649, 6
  %v4695 = vsel %vm1782, %v4693, %v4694
  %v4696 = vrot.slane %v4694, 4
  %v4697 = vrot.slane %v4650, 6
  %v4698 = vsel %vm1782, %v4696, %v4697
  %v4699 = vrot.slane %v4697, 4
  %v4700 = vrot.slane %v4651, 6
  %v4701 = vsel %vm1782, %v4699, %v4700
  %v4702 = vrot.slane %v4700, 4
  %v4703 = vrot.slane %v4652, 6
  %v4704 = vsel %vm1782, %v4702, %v4703
  %v4705 = vrot.slane %v4703, 4
  %v4706 = vrot.slane %v4653, 6
  %v4707 = vsel %vm1782, %v4705, %v4706
  %v4708 = vrot.slane %v4706, 4
  %v4709 = vrot.slane %v4654, 6
  %v4710 = vsel %vm1782, %v4708, %v4709
  %v4711 = vrot.slane %v4709, 4
  %v4712 = vrot.slane %v4655, 6
  %v4713 = vsel %vm1782, %v4711, %v4712
  %v4714 = vrot.slane %v4712, 4
  %v4715 = vrot.slane %v4656, 6
  %v4716 = vsel %vm1782, %v4714, %v4715
  %v4717 = vrot.slane %v4715, 4
  %v4718 = vrot.slane %v4657, 6
  %v4719 = vsel %vm1782, %v4717, %v4718
  %v4720 = vrot.slane %v4718, 4
  %v4721 = vrot.slane %v4658, 6
  %v4722 = vsel %vm1782, %v4720, %v4721
  %v4723 = vrot.slane %v4721, 4
  %v4724 = vrot.slane %v4659, 6
  %v4725 = vsel %vm1782, %v4723, %v4724
  %v4726 = vrot.slane %v4724, 4
  %v4727 = vrot.slane %v4660, 6
  %v4728 = vsel %vm1782, %v4726, %v4727
  %v4729 = vrot.slane %v4727, 4
  %v4730 = vrot.slane %v4661, 6
  %v4731 = vsel %vm1782, %v4729, %v4730
  %v4732 = vrot.slane %v4730, 4
  %v4733 = vrot.slane %v4662, 6
  %v4734 = vsel %vm1782, %v4732, %v4733
  %v4735 = vrot.slane %v4733, 4
  %v4736 = vrot.slane %v4663, 6
  %v4737 = vsel %vm1782, %v4735, %v4736
  %4756 = vst [vmem:[#allocation3 + $0xc] sm:$0xf] %v4686
  %4757 = vst [vmem:[#allocation3 + $0x28] sm:$0xf] %v4689
  %4758 = vst [vmem:[#allocation3 + $0x44] sm:$0xf] %v4692
  %4759 = vst [vmem:[#allocation3 + $0x60] sm:$0xf] %v4695
  %4760 = vst [vmem:[#allocation3 + $0x7c] sm:$0xf] %v4698
  %4761 = vst [vmem:[#allocation3 + $0x98] sm:$0xf] %v4701
  %4762 = vst [vmem:[#allocation3 + $0xb4] sm:$0xf] %v4704
  %4763 = vst [vmem:[#allocation3 + $0xd0] sm:$0xf] %v4707
  %4764 = vst [vmem:[#allocation3 + $0xec] sm:$0xf] %v4710
  %4765 = vst [vmem:[#allocation3 + $0x108] sm:$0xf] %v4713
  %4766 = vst [vmem:[#allocation3 + $0x124] sm:$0xf] %v4716
  %4767 = vst [vmem:[#allocation3 + $0x140] sm:$0xf] %v4719
  %4768 = vst [vmem:[#allocation3 + $0x15c] sm:$0xf] %v4722
  %4769 = vst [vmem:[#allocation3 + $0x178] sm:$0xf] %v4725
  %4770 = vst [vmem:[#allocation3 + $0x194] sm:$0xf] %v4728
  %4771 = vst [vmem:[#allocation3 + $0x1b0] sm:$0xf] %v4731
  %4772 = vst [vmem:[#allocation3 + $0x1cc] sm:$0xf] %v4734
  %4773 = vst [vmem:[#allocation3 + $0x1e8] sm:$0xf] %v4737
  %v4774 = vld [vmem:[#allocation4 + $0x18] sm:$0xf]
  %v4775 = vld [vmem:[#allocation4 + $0x1c] sm:$0xf]
  %v4776 = vld [vmem:[#allocation4 + $0x20] sm:$0xf]
  %v4777 = vld [vmem:[#allocation4 + $0x24] sm:$0xf]
  %v4778 = vld [vmem:[#allocation4 + $0x28] sm:$0xf]
  %v4779 = vld [vmem:[#allocation4 + $0x2c] sm:$0xf]
  %v4780 = vld [vmem:[#allocation4 + $0x30] sm:$0xf]
  %v4781 = vld [vmem:[#allocation4 + $0x34] sm:$0xf]
  %v4782 = vld [vmem:[#allocation4 + $0x38] sm:$0xf]
  %v4783 = vld [vmem:[#allocation4 + $0x3c] sm:$0xf]
  %v4784 = vld [vmem:[#allocation4 + $0x40] sm:$0xf]
  %v4785 = vld [vmem:[#allocation4 + $0x44] sm:$0xf]
  %v4786 = vld [vmem:[#allocation4 + $0x48] sm:$0xf]
  %v4787 = vld [vmem:[#allocation4 + $0x4c] sm:$0xf]
  %v4788 = vld [vmem:[#allocation4 + $0x50] sm:$0xf]
  %v4789 = vld [vmem:[#allocation4 + $0x54] sm:$0xf]
  %v4790 = vld [vmem:[#allocation4 + $0x58] sm:$0xf]
  %v4791 = vld [vmem:[#allocation4 + $0x5c] sm:$0xf]
  %4792 = vst [vmem:[#allocation3 + $0x10] sm:$0xf] %v4774
  %4793 = vst [vmem:[#allocation3 + $0x2c] sm:$0xf] %v4775
  %4794 = vst [vmem:[#allocation3 + $0x48] sm:$0xf] %v4776
  %4795 = vst [vmem:[#allocation3 + $0x64] sm:$0xf] %v4777
  %4796 = vst [vmem:[#allocation3 + $0x80] sm:$0xf] %v4778
  %4797 = vst [vmem:[#allocation3 + $0x9c] sm:$0xf] %v4779
  %4798 = vst [vmem:[#allocation3 + $0xb8] sm:$0xf] %v4780
  %4799 = vst [vmem:[#allocation3 + $0xd4] sm:$0xf] %v4781
  %4800 = vst [vmem:[#allocation3 + $0xf0] sm:$0xf] %v4782
  %4801 = vst [vmem:[#allocation3 + $0x10c] sm:$0xf] %v4783
  %4802 = vst [vmem:[#allocation3 + $0x128] sm:$0xf] %v4784
  %4803 = vst [vmem:[#allocation3 + $0x144] sm:$0xf] %v4785
  %4804 = vst [vmem:[#allocation3 + $0x160] sm:$0xf] %v4786
  %4805 = vst [vmem:[#allocation3 + $0x17c] sm:$0xf] %v4787
  %4806 = vst [vmem:[#allocation3 + $0x198] sm:$0xf] %v4788
  %4807 = vst [vmem:[#allocation3 + $0x1b4] sm:$0xf] %v4789
  %4808 = vst [vmem:[#allocation3 + $0x1d0] sm:$0xf] %v4790
  %4809 = vst [vmem:[#allocation3 + $0x1ec] sm:$0xf] %v4791
  %v4810 = vld [vmem:[#allocation4 + $0x1c] sm:$0xc]
  %v4811 = vld [vmem:[#allocation4 + $0x20] sm:$0xf]
  %v4812 = vld [vmem:[#allocation4 + $0x24] sm:$0xf]
  %v4813 = vld [vmem:[#allocation4 + $0x28] sm:$0xf]
  %v4814 = vld [vmem:[#allocation4 + $0x2c] sm:$0xf]
  %v4815 = vld [vmem:[#allocation4 + $0x30] sm:$0xf]
  %v4816 = vld [vmem:[#allocation4 + $0x34] sm:$0xf]
  %v4817 = vld [vmem:[#allocation4 + $0x38] sm:$0xf]
  %v4818 = vld [vmem:[#allocation4 + $0x3c] sm:$0xf]
  %v4819 = vld [vmem:[#allocation4 + $0x40] sm:$0xf]
  %v4820 = vld [vmem:[#allocation4 + $0x44] sm:$0xf]
  %v4821 = vld [vmem:[#allocation4 + $0x48] sm:$0xf]
  %v4822 = vld [vmem:[#allocation4 + $0x4c] sm:$0xf]
  %v4823 = vld [vmem:[#allocation4 + $0x50] sm:$0xf]
  %v4824 = vld [vmem:[#allocation4 + $0x54] sm:$0xf]
  %v4825 = vld [vmem:[#allocation4 + $0x58] sm:$0xf]
  %v4826 = vld [vmem:[#allocation4 + $0x5c] sm:$0xf]
  %v4827 = vld [vmem:[#allocation4 + $0x60] sm:$0xf]
  %v4828 = vld [vmem:[#allocation4 + $0x64] sm:$0x3]
  %v4848 = vrot.slane %v4810, 6
  %v4849 = vrot.slane %v4848, 4
  %v4850 = vrot.slane %v4811, 6
  %v4851 = vsel %vm1782, %v4849, %v4850
  %v4852 = vrot.slane %v4850, 4
  %v4853 = vrot.slane %v4812, 6
  %v4854 = vsel %vm1782, %v4852, %v4853
  %v4855 = vrot.slane %v4853, 4
  %v4856 = vrot.slane %v4813, 6
  %v4857 = vsel %vm1782, %v4855, %v4856
  %v4858 = vrot.slane %v4856, 4
  %v4859 = vrot.slane %v4814, 6
  %v4860 = vsel %vm1782, %v4858, %v4859
  %v4861 = vrot.slane %v4859, 4
  %v4862 = vrot.slane %v4815, 6
  %v4863 = vsel %vm1782, %v4861, %v4862
  %v4864 = vrot.slane %v4862, 4
  %v4865 = vrot.slane %v4816, 6
  %v4866 = vsel %vm1782, %v4864, %v4865
  %v4867 = vrot.slane %v4865, 4
  %v4868 = vrot.slane %v4817, 6
  %v4869 = vsel %vm1782, %v4867, %v4868
  %v4870 = vrot.slane %v4868, 4
  %v4871 = vrot.slane %v4818, 6
  %v4872 = vsel %vm1782, %v4870, %v4871
  %v4873 = vrot.slane %v4871, 4
  %v4874 = vrot.slane %v4819, 6
  %v4875 = vsel %vm1782, %v4873, %v4874
  %v4876 = vrot.slane %v4874, 4
  %v4877 = vrot.slane %v4820, 6
  %v4878 = vsel %vm1782, %v4876, %v4877
  %v4879 = vrot.slane %v4877, 4
  %v4880 = vrot.slane %v4821, 6
  %v4881 = vsel %vm1782, %v4879, %v4880
  %v4882 = vrot.slane %v4880, 4
  %v4883 = vrot.slane %v4822, 6
  %v4884 = vsel %vm1782, %v4882, %v4883
  %v4885 = vrot.slane %v4883, 4
  %v4886 = vrot.slane %v4823, 6
  %v4887 = vsel %vm1782, %v4885, %v4886
  %v4888 = vrot.slane %v4886, 4
  %v4889 = vrot.slane %v4824, 6
  %v4890 = vsel %vm1782, %v4888, %v4889
  %v4891 = vrot.slane %v4889, 4
  %v4892 = vrot.slane %v4825, 6
  %v4893 = vsel %vm1782, %v4891, %v4892
  %v4894 = vrot.slane %v4892, 4
  %v4895 = vrot.slane %v4826, 6
  %v4896 = vsel %vm1782, %v4894, %v4895
  %v4897 = vrot.slane %v4895, 4
  %v4898 = vrot.slane %v4827, 6
  %v4899 = vsel %vm1782, %v4897, %v4898
  %v4900 = vrot.slane %v4898, 4
  %v4901 = vrot.slane %v4828, 6
  %v4902 = vsel %vm1782, %v4900, %v4901
  %4921 = vst [vmem:[#allocation3 + $0x14] sm:$0xf] %v4851
  %4922 = vst [vmem:[#allocation3 + $0x30] sm:$0xf] %v4854
  %4923 = vst [vmem:[#allocation3 + $0x4c] sm:$0xf] %v4857
  %4924 = vst [vmem:[#allocation3 + $0x68] sm:$0xf] %v4860
  %4925 = vst [vmem:[#allocation3 + $0x84] sm:$0xf] %v4863
  %4926 = vst [vmem:[#allocation3 + $0xa0] sm:$0xf] %v4866
  %4927 = vst [vmem:[#allocation3 + $0xbc] sm:$0xf] %v4869
  %4928 = vst [vmem:[#allocation3 + $0xd8] sm:$0xf] %v4872
  %4929 = vst [vmem:[#allocation3 + $0xf4] sm:$0xf] %v4875
  %4930 = vst [vmem:[#allocation3 + $0x110] sm:$0xf] %v4878
  %4931 = vst [vmem:[#allocation3 + $0x12c] sm:$0xf] %v4881
  %4932 = vst [vmem:[#allocation3 + $0x148] sm:$0xf] %v4884
  %4933 = vst [vmem:[#allocation3 + $0x164] sm:$0xf] %v4887
  %4934 = vst [vmem:[#allocation3 + $0x180] sm:$0xf] %v4890
  %4935 = vst [vmem:[#allocation3 + $0x19c] sm:$0xf] %v4893
  %4936 = vst [vmem:[#allocation3 + $0x1b8] sm:$0xf] %v4896
  %4937 = vst [vmem:[#allocation3 + $0x1d4] sm:$0xf] %v4899
  %4938 = vst [vmem:[#allocation3 + $0x1f0] sm:$0xf] %v4902
  %v4939 = vld [vmem:[#allocation4 + $0x24] sm:$0xf]
  %v4940 = vld [vmem:[#allocation4 + $0x28] sm:$0xf]
  %v4941 = vld [vmem:[#allocation4 + $0x2c] sm:$0xf]
  %v4942 = vld [vmem:[#allocation4 + $0x30] sm:$0xf]
  %v4943 = vld [vmem:[#allocation4 + $0x34] sm:$0xf]
  %v4944 = vld [vmem:[#allocation4 + $0x38] sm:$0xf]
  %v4945 = vld [vmem:[#allocation4 + $0x3c] sm:$0xf]
  %v4946 = vld [vmem:[#allocation4 + $0x40] sm:$0xf]
  %v4947 = vld [vmem:[#allocation4 + $0x44] sm:$0xf]
  %v4948 = vld [vmem:[#allocation4 + $0x48] sm:$0xf]
  %v4949 = vld [vmem:[#allocation4 + $0x4c] sm:$0xf]
  %v4950 = vld [vmem:[#allocation4 + $0x50] sm:$0xf]
  %v4951 = vld [vmem:[#allocation4 + $0x54] sm:$0xf]
  %v4952 = vld [vmem:[#allocation4 + $0x58] sm:$0xf]
  %v4953 = vld [vmem:[#allocation4 + $0x5c] sm:$0xf]
  %v4954 = vld [vmem:[#allocation4 + $0x60] sm:$0xf]
  %v4955 = vld [vmem:[#allocation4 + $0x64] sm:$0xf]
  %v4956 = vld [vmem:[#allocation4 + $0x68] sm:$0xf]
  %4957 = vst [vmem:[#allocation3 + $0x18] sm:$0xf] %v4939
  %4958 = vst [vmem:[#allocation3 + $0x34] sm:$0xf] %v4940
  %4959 = vst [vmem:[#allocation3 + $0x50] sm:$0xf] %v4941
  %4960 = vst [vmem:[#allocation3 + $0x6c] sm:$0xf] %v4942
  %4961 = vst [vmem:[#allocation3 + $0x88] sm:$0xf] %v4943
  %4962 = vst [vmem:[#allocation3 + $0xa4] sm:$0xf] %v4944
  %4963 = vst [vmem:[#allocation3 + $0xc0] sm:$0xf] %v4945
  %4964 = vst [vmem:[#allocation3 + $0xdc] sm:$0xf] %v4946
  %4965 = vst [vmem:[#allocation3 + $0xf8] sm:$0xf] %v4947
  %4966 = vst [vmem:[#allocation3 + $0x114] sm:$0xf] %v4948
  %4967 = vst [vmem:[#allocation3 + $0x130] sm:$0xf] %v4949
  %4968 = vst [vmem:[#allocation3 + $0x14c] sm:$0xf] %v4950
  %4969 = vst [vmem:[#allocation3 + $0x168] sm:$0xf] %v4951
  %4970 = vst [vmem:[#allocation3 + $0x184] sm:$0xf] %v4952
  %4971 = vst [vmem:[#allocation3 + $0x1a0] sm:$0xf] %v4953
  %4972 = vst [vmem:[#allocation3 + $0x1bc] sm:$0xf] %v4954
  %4973 = vst [vmem:[#allocation3 + $0x1d8] sm:$0xf] %v4955
  %4974 = vst [vmem:[#allocation3 + $0x1f4] sm:$0xf] %v4956
  %s4975 = smul.u32 4, 112
  %s4976 = smul.u32 %s4975, 2
  %s4977 = sshll.u32 %s4976, 4
  %4978 = dma.done [#allocation6], %s4977
  %v4979 = vld [vmem:[#allocation3] sm:$0xff]
  %v4980 = vld [vmem:[#allocation3 + $0x8] sm:$0xff]
  %v4981 = vld [vmem:[#allocation3 + $0x10] sm:$0xff]
  %v4982 = vld [vmem:[#allocation3 + $0x18] sm:$0xf]
  %v4983 = vld [vmem:[#allocation3 + $0x1c] sm:$0xff]
  %v4984 = vld [vmem:[#allocation3 + $0x24] sm:$0xff]
  %v4985 = vld [vmem:[#allocation3 + $0x2c] sm:$0xff]
  %v4986 = vld [vmem:[#allocation3 + $0x34] sm:$0xf]
  %v4987 = vld [vmem:[#allocation3 + $0x38] sm:$0xff]
  %v4988 = vld [vmem:[#allocation3 + $0x40] sm:$0xff]
  %v4989 = vld [vmem:[#allocation3 + $0x48] sm:$0xff]
  %v4990 = vld [vmem:[#allocation3 + $0x50] sm:$0xf]
  %v4991 = vld [vmem:[#allocation3 + $0x54] sm:$0xff]
  %v4992 = vld [vmem:[#allocation3 + $0x5c] sm:$0xff]
  %v4993 = vld [vmem:[#allocation3 + $0x64] sm:$0xff]
  %v4994 = vld [vmem:[#allocation3 + $0x6c] sm:$0xf]
  %v4995 = vld [vmem:[#allocation3 + $0x70] sm:$0xff]
  %v4996 = vld [vmem:[#allocation3 + $0x78] sm:$0xff]
  %v4997 = vld [vmem:[#allocation3 + $0x80] sm:$0xff]
  %v4998 = vld [vmem:[#allocation3 + $0x88] sm:$0xf]
  %v4999 = vld [vmem:[#allocation3 + $0x8c] sm:$0xff]
  %v5000 = vld [vmem:[#allocation3 + $0x94] sm:$0xff]
  %v5001 = vld [vmem:[#allocation3 + $0x9c] sm:$0xff]
  %v5002 = vld [vmem:[#allocation3 + $0xa4] sm:$0xf]
  %v5003 = vld [vmem:[#allocation3 + $0xa8] sm:$0xff]
  %v5004 = vld [vmem:[#allocation3 + $0xb0] sm:$0xff]
  %v5005 = vld [vmem:[#allocation3 + $0xb8] sm:$0xff]
  %v5006 = vld [vmem:[#allocation3 + $0xc0] sm:$0xf]
  %v5007 = vld [vmem:[#allocation3 + $0xc4] sm:$0xff]
  %v5008 = vld [vmem:[#allocation3 + $0xcc] sm:$0xff]
  %v5009 = vld [vmem:[#allocation3 + $0xd4] sm:$0xff]
  %v5010 = vld [vmem:[#allocation3 + $0xdc] sm:$0xf]
  %v5011 = vld [vmem:[#allocation3 + $0xe0] sm:$0xff]
  %v5012 = vld [vmem:[#allocation3 + $0xe8] sm:$0xff]
  %v5013 = vld [vmem:[#allocation3 + $0xf0] sm:$0xff]
  %v5014 = vld [vmem:[#allocation3 + $0xf8] sm:$0xf]
  %v5015 = vld [vmem:[#allocation3 + $0xfc] sm:$0xff]
  %v5016 = vld [vmem:[#allocation3 + $0x104] sm:$0xff]
  %v5017 = vld [vmem:[#allocation3 + $0x10c] sm:$0xff]
  %v5018 = vld [vmem:[#allocation3 + $0x114] sm:$0xf]
  %v5019 = vld [vmem:[#allocation3 + $0x118] sm:$0xff]
  %v5020 = vld [vmem:[#allocation3 + $0x120] sm:$0xff]
  %v5021 = vld [vmem:[#allocation3 + $0x128] sm:$0xff]
  %v5022 = vld [vmem:[#allocation3 + $0x130] sm:$0xf]
  %v5023 = vld [vmem:[#allocation3 + $0x134] sm:$0xff]
  %v5024 = vld [vmem:[#allocation3 + $0x13c] sm:$0xff]
  %v5025 = vld [vmem:[#allocation3 + $0x144] sm:$0xff]
  %v5026 = vld [vmem:[#allocation3 + $0x14c] sm:$0xf]
  %v5027 = vld [vmem:[#allocation3 + $0x150] sm:$0xff]
  %v5028 = vld [vmem:[#allocation3 + $0x158] sm:$0xff]
  %v5029 = vld [vmem:[#allocation3 + $0x160] sm:$0xff]
  %v5030 = vld [vmem:[#allocation3 + $0x168] sm:$0xf]
  %v5031 = vld [vmem:[#allocation3 + $0x16c] sm:$0xff]
  %v5032 = vld [vmem:[#allocation3 + $0x174] sm:$0xff]
  %v5033 = vld [vmem:[#allocation3 + $0x17c] sm:$0xff]
  %v5034 = vld [vmem:[#allocation3 + $0x184] sm:$0xf]
  %v5035 = vld [vmem:[#allocation3 + $0x188] sm:$0xff]
  %v5036 = vld [vmem:[#allocation3 + $0x190] sm:$0xff]
  %v5037 = vld [vmem:[#allocation3 + $0x198] sm:$0xff]
  %v5038 = vld [vmem:[#allocation3 + $0x1a0] sm:$0xf]
  %v5039 = vld [vmem:[#allocation3 + $0x1a4] sm:$0xff]
  %v5040 = vld [vmem:[#allocation3 + $0x1ac] sm:$0xff]
  %v5041 = vld [vmem:[#allocation3 + $0x1b4] sm:$0xff]
  %v5042 = vld [vmem:[#allocation3 + $0x1bc] sm:$0xf]
  %v5043 = vld [vmem:[#allocation3 + $0x1c0] sm:$0xff]
  %v5044 = vld [vmem:[#allocation3 + $0x1c8] sm:$0xff]
  %v5045 = vld [vmem:[#allocation3 + $0x1d0] sm:$0xff]
  %v5046 = vld [vmem:[#allocation3 + $0x1d8] sm:$0xf]
  %v5047 = vld [vmem:[#allocation3 + $0x1dc] sm:$0xff]
  %v5048 = vld [vmem:[#allocation3 + $0x1e4] sm:$0xff]
  %v5049 = vld [vmem:[#allocation3 + $0x1ec] sm:$0xff]
  %v5050 = vld [vmem:[#allocation3 + $0x1f4] sm:$0xf]
  %v5051 = vld [vmem:[#allocation5] sm:$0xff]
  %v5052 = vld [vmem:[#allocation5 + $0x8] sm:$0xff]
  %v5053 = vld [vmem:[#allocation5 + $0x10] sm:$0xff]
  %v5054 = vld [vmem:[#allocation5 + $0x18] sm:$0xff]
  %v5055 = vld [vmem:[#allocation5 + $0x20] sm:$0xff]
  %v5056 = vld [vmem:[#allocation5 + $0x28] sm:$0xff]
  %v5057 = vld [vmem:[#allocation5 + $0x30] sm:$0xff]
  %v5058 = vld [vmem:[#allocation5 + $0x38] sm:$0xff]
  %v5059 = vld [vmem:[#allocation5 + $0x40] sm:$0xff]
  %v5060 = vld [vmem:[#allocation5 + $0x48] sm:$0xff]
  %v5061 = vld [vmem:[#allocation5 + $0x50] sm:$0xff]
  %v5062 = vld [vmem:[#allocation5 + $0x58] sm:$0xff]
  %v5063 = vld [vmem:[#allocation5 + $0x60] sm:$0xff]
  %v5064 = vld [vmem:[#allocation5 + $0x68] sm:$0xff]
  %v5065 = vld [vmem:[#allocation5 + $0x70] sm:$0xff]
  %v5066 = vld [vmem:[#allocation5 + $0x78] sm:$0xff]
  %v5067 = vld [vmem:[#allocation5 + $0x80] sm:$0xff]
  %v5068 = vld [vmem:[#allocation5 + $0x88] sm:$0xff]
  %v5069 = vld [vmem:[#allocation5 + $0x90] sm:$0xff]
  %v5070 = vld [vmem:[#allocation5 + $0x98] sm:$0xff]
  %v5071 = vld [vmem:[#allocation5 + $0xa0] sm:$0xff]
  %v5072 = vld [vmem:[#allocation5 + $0xa8] sm:$0xff]
  %v5073 = vld [vmem:[#allocation5 + $0xb0] sm:$0xff]
  %v5074 = vld [vmem:[#allocation5 + $0xb8] sm:$0xff]
  %v5075 = vld [vmem:[#allocation5 + $0xc0] sm:$0xff]
  %v5076 = vld [vmem:[#allocation5 + $0xc8] sm:$0xff]
  %v5077 = vld [vmem:[#allocation5 + $0xd0] sm:$0xff]
  %v5078 = vld [vmem:[#allocation5 + $0xd8] sm:$0xff]
  %v5079 = vld [vmem:[#allocation5 + $0xe0] sm:$0xff]
  %v5080 = vld [vmem:[#allocation5 + $0xe8] sm:$0xff]
  %v5081 = vld [vmem:[#allocation5 + $0xf0] sm:$0xff]
  %v5082 = vld [vmem:[#allocation5 + $0xf8] sm:$0xff]
  %v5083 = vld [vmem:[#allocation5 + $0x100] sm:$0xff]
  %v5084 = vld [vmem:[#allocation5 + $0x108] sm:$0xff]
  %v5085 = vld [vmem:[#allocation5 + $0x110] sm:$0xff]
  %v5086 = vld [vmem:[#allocation5 + $0x118] sm:$0xff]
  %v5087 = vld [vmem:[#allocation5 + $0x120] sm:$0xff]
  %v5088 = vld [vmem:[#allocation5 + $0x128] sm:$0xff]
  %v5089 = vld [vmem:[#allocation5 + $0x130] sm:$0xff]
  %v5090 = vld [vmem:[#allocation5 + $0x138] sm:$0xff]
  %v5091 = vld [vmem:[#allocation5 + $0x140] sm:$0xff]
  %v5092 = vld [vmem:[#allocation5 + $0x148] sm:$0xff]
  %v5093 = vld [vmem:[#allocation5 + $0x150] sm:$0xff]
  %v5094 = vld [vmem:[#allocation5 + $0x158] sm:$0xff]
  %v5095 = vld [vmem:[#allocation5 + $0x160] sm:$0xff]
  %v5096 = vld [vmem:[#allocation5 + $0x168] sm:$0xff]
  %v5097 = vld [vmem:[#allocation5 + $0x170] sm:$0xff]
  %v5098 = vld [vmem:[#allocation5 + $0x178] sm:$0xff]
  %v5099 = vld [vmem:[#allocation5 + $0x180] sm:$0xff]
  %v5100 = vld [vmem:[#allocation5 + $0x188] sm:$0xff]
  %v5101 = vld [vmem:[#allocation5 + $0x190] sm:$0xff]
  %v5102 = vld [vmem:[#allocation5 + $0x198] sm:$0xff]
  %v5103 = vld [vmem:[#allocation5 + $0x1a0] sm:$0xff]
  %v5104 = vld [vmem:[#allocation5 + $0x1a8] sm:$0xff]
  %v5105 = vld [vmem:[#allocation5 + $0x1b0] sm:$0xff]
  %v5106 = vld [vmem:[#allocation5 + $0x1b8] sm:$0xff]
  %v5107 = vld [vmem:[#allocation5 + $0x1c0] sm:$0xff]
  %v5108 = vld [vmem:[#allocation5 + $0x1c8] sm:$0xff]
  %v5109 = vld [vmem:[#allocation5 + $0x1d0] sm:$0xff]
  %v5110 = vld [vmem:[#allocation5 + $0x1d8] sm:$0xff]
  %v5111 = vld [vmem:[#allocation5 + $0x1e0] sm:$0xff]
  %v5112 = vld [vmem:[#allocation5 + $0x1e8] sm:$0xff]
  %v5113 = vld [vmem:[#allocation5 + $0x1f0] sm:$0xff]
  %v5114 = vld [vmem:[#allocation5 + $0x1f8] sm:$0xff]
  %v5115 = vld [vmem:[#allocation5 + $0x200] sm:$0xff]
  %v5116 = vld [vmem:[#allocation5 + $0x208] sm:$0xff]
  %v5117 = vld [vmem:[#allocation5 + $0x210] sm:$0xff]
  %v5118 = vld [vmem:[#allocation5 + $0x218] sm:$0xff]
  %v5119 = vld [vmem:[#allocation5 + $0x220] sm:$0xff]
  %v5120 = vld [vmem:[#allocation5 + $0x228] sm:$0xff]
  %v5121 = vld [vmem:[#allocation5 + $0x230] sm:$0xff]
  %v5122 = vld [vmem:[#allocation5 + $0x238] sm:$0xff]
  %v5123 = vld [vmem:[#allocation5 + $0x240] sm:$0xff]
  %v5124 = vld [vmem:[#allocation5 + $0x248] sm:$0xff]
  %v5125 = vld [vmem:[#allocation5 + $0x250] sm:$0xff]
  %v5126 = vld [vmem:[#allocation5 + $0x258] sm:$0xff]
  %v5127 = vld [vmem:[#allocation5 + $0x260] sm:$0xff]
  %v5128 = vld [vmem:[#allocation5 + $0x268] sm:$0xff]
  %v5129 = vld [vmem:[#allocation5 + $0x270] sm:$0xff]
  %v5130 = vld [vmem:[#allocation5 + $0x278] sm:$0xff]
  %v5131 = vld [vmem:[#allocation5 + $0x280] sm:$0xff]
  %v5132 = vld [vmem:[#allocation5 + $0x288] sm:$0xff]
  %v5133 = vld [vmem:[#allocation5 + $0x290] sm:$0xff]
  %v5134 = vld [vmem:[#allocation5 + $0x298] sm:$0xff]
  %v5135 = vld [vmem:[#allocation5 + $0x2a0] sm:$0xff]
  %v5136 = vld [vmem:[#allocation5 + $0x2a8] sm:$0xff]
  %v5137 = vld [vmem:[#allocation5 + $0x2b0] sm:$0xff]
  %v5138 = vld [vmem:[#allocation5 + $0x2b8] sm:$0xff]
  %v5139 = vld [vmem:[#allocation5 + $0x2c0] sm:$0xff]
  %v5140 = vld [vmem:[#allocation5 + $0x2c8] sm:$0xff]
  %v5141 = vld [vmem:[#allocation5 + $0x2d0] sm:$0xff]
  %v5142 = vld [vmem:[#allocation5 + $0x2d8] sm:$0xff]
  %v5143 = vld [vmem:[#allocation5 + $0x2e0] sm:$0xff]
  %v5144 = vld [vmem:[#allocation5 + $0x2e8] sm:$0xff]
  %v5145 = vld [vmem:[#allocation5 + $0x2f0] sm:$0xff]
  %v5146 = vld [vmem:[#allocation5 + $0x2f8] sm:$0xff]
  %v5147 = vld [vmem:[#allocation5 + $0x300] sm:$0xff]
  %v5148 = vld [vmem:[#allocation5 + $0x308] sm:$0xff]
  %v5149 = vld [vmem:[#allocation5 + $0x310] sm:$0xff]
  %v5150 = vld [vmem:[#allocation5 + $0x318] sm:$0xff]
  %v5151 = vld [vmem:[#allocation5 + $0x320] sm:$0xff]
  %v5152 = vld [vmem:[#allocation5 + $0x328] sm:$0xff]
  %v5153 = vld [vmem:[#allocation5 + $0x330] sm:$0xff]
  %v5154 = vld [vmem:[#allocation5 + $0x338] sm:$0xff]
  %v5155 = vld [vmem:[#allocation5 + $0x340] sm:$0xff]
  %v5156 = vld [vmem:[#allocation5 + $0x348] sm:$0xff]
  %v5157 = vld [vmem:[#allocation5 + $0x350] sm:$0xff]
  %v5158 = vld [vmem:[#allocation5 + $0x358] sm:$0xff]
  %v5159 = vld [vmem:[#allocation5 + $0x360] sm:$0xff]
  %v5160 = vld [vmem:[#allocation5 + $0x368] sm:$0xff]
  %v5161 = vld [vmem:[#allocation5 + $0x370] sm:$0xff]
  %v5162 = vld [vmem:[#allocation5 + $0x378] sm:$0xff]
  %v5235 = vunpack.c.l.b16 %v4979
  %v5236 = vunpack.c.h.b16 %v4979
  %v5237 = vunpack.c.l.b16 %v4980
  %v5238 = vunpack.c.h.b16 %v4980
  %v5239 = vunpack.c.l.b16 %v4981
  %v5240 = vunpack.c.h.b16 %v4981
  %v5241 = vunpack.c.l.b16 %v4982
  %v5242 = vunpack.c.l.b16 %v4983
  %v5243 = vunpack.c.h.b16 %v4983
  %v5244 = vunpack.c.l.b16 %v4984
  %v5245 = vunpack.c.h.b16 %v4984
  %v5246 = vunpack.c.l.b16 %v4985
  %v5247 = vunpack.c.h.b16 %v4985
  %v5248 = vunpack.c.l.b16 %v4986
  %v5249 = vunpack.c.l.b16 %v4987
  %v5250 = vunpack.c.h.b16 %v4987
  %v5251 = vunpack.c.l.b16 %v4988
  %v5252 = vunpack.c.h.b16 %v4988
  %v5253 = vunpack.c.l.b16 %v4989
  %v5254 = vunpack.c.h.b16 %v4989
  %v5255 = vunpack.c.l.b16 %v4990
  %v5256 = vunpack.c.l.b16 %v4991
  %v5257 = vunpack.c.h.b16 %v4991
  %v5258 = vunpack.c.l.b16 %v4992
  %v5259 = vunpack.c.h.b16 %v4992
  %v5260 = vunpack.c.l.b16 %v4993
  %v5261 = vunpack.c.h.b16 %v4993
  %v5262 = vunpack.c.l.b16 %v4994
  %v5263 = vunpack.c.l.b16 %v4995
  %v5264 = vunpack.c.h.b16 %v4995
  %v5265 = vunpack.c.l.b16 %v4996
  %v5266 = vunpack.c.h.b16 %v4996
  %v5267 = vunpack.c.l.b16 %v4997
  %v5268 = vunpack.c.h.b16 %v4997
  %v5269 = vunpack.c.l.b16 %v4998
  %v5270 = vunpack.c.l.b16 %v4999
  %v5271 = vunpack.c.h.b16 %v4999
  %v5272 = vunpack.c.l.b16 %v5000
  %v5273 = vunpack.c.h.b16 %v5000
  %v5274 = vunpack.c.l.b16 %v5001
  %v5275 = vunpack.c.h.b16 %v5001
  %v5276 = vunpack.c.l.b16 %v5002
  %v5277 = vunpack.c.l.b16 %v5003
  %v5278 = vunpack.c.h.b16 %v5003
  %v5279 = vunpack.c.l.b16 %v5004
  %v5280 = vunpack.c.h.b16 %v5004
  %v5281 = vunpack.c.l.b16 %v5005
  %v5282 = vunpack.c.h.b16 %v5005
  %v5283 = vunpack.c.l.b16 %v5006
  %v5284 = vunpack.c.l.b16 %v5007
  %v5285 = vunpack.c.h.b16 %v5007
  %v5286 = vunpack.c.l.b16 %v5008
  %v5287 = vunpack.c.h.b16 %v5008
  %v5288 = vunpack.c.l.b16 %v5009
  %v5289 = vunpack.c.h.b16 %v5009
  %v5290 = vunpack.c.l.b16 %v5010
  %v5291 = vunpack.c.l.b16 %v5011
  %v5292 = vunpack.c.h.b16 %v5011
  %v5293 = vunpack.c.l.b16 %v5012
  %v5294 = vunpack.c.h.b16 %v5012
  %v5295 = vunpack.c.l.b16 %v5013
  %v5296 = vunpack.c.h.b16 %v5013
  %v5297 = vunpack.c.l.b16 %v5014
  %v5298 = vunpack.c.l.b16 %v5015
  %v5299 = vunpack.c.h.b16 %v5015
  %v5300 = vunpack.c.l.b16 %v5016
  %v5301 = vunpack.c.h.b16 %v5016
  %v5302 = vunpack.c.l.b16 %v5017
  %v5303 = vunpack.c.h.b16 %v5017
  %v5304 = vunpack.c.l.b16 %v5018
  %v5305 = vunpack.c.l.b16 %v5019
  %v5306 = vunpack.c.h.b16 %v5019
  %v5307 = vunpack.c.l.b16 %v5020
  %v5308 = vunpack.c.h.b16 %v5020
  %v5309 = vunpack.c.l.b16 %v5021
  %v5310 = vunpack.c.h.b16 %v5021
  %v5311 = vunpack.c.l.b16 %v5022
  %v5312 = vunpack.c.l.b16 %v5023
  %v5313 = vunpack.c.h.b16 %v5023
  %v5314 = vunpack.c.l.b16 %v5024
  %v5315 = vunpack.c.h.b16 %v5024
  %v5316 = vunpack.c.l.b16 %v5025
  %v5317 = vunpack.c.h.b16 %v5025
  %v5318 = vunpack.c.l.b16 %v5026
  %v5319 = vunpack.c.l.b16 %v5027
  %v5320 = vunpack.c.h.b16 %v5027
  %v5321 = vunpack.c.l.b16 %v5028
  %v5322 = vunpack.c.h.b16 %v5028
  %v5323 = vunpack.c.l.b16 %v5029
  %v5324 = vunpack.c.h.b16 %v5029
  %v5325 = vunpack.c.l.b16 %v5030
  %v5326 = vunpack.c.l.b16 %v5031
  %v5327 = vunpack.c.h.b16 %v5031
  %v5328 = vunpack.c.l.b16 %v5032
  %v5329 = vunpack.c.h.b16 %v5032
  %v5330 = vunpack.c.l.b16 %v5033
  %v5331 = vunpack.c.h.b16 %v5033
  %v5332 = vunpack.c.l.b16 %v5034
  %v5333 = vunpack.c.l.b16 %v5035
  %v5334 = vunpack.c.h.b16 %v5035
  %v5335 = vunpack.c.l.b16 %v5036
  %v5336 = vunpack.c.h.b16 %v5036
  %v5337 = vunpack.c.l.b16 %v5037
  %v5338 = vunpack.c.h.b16 %v5037
  %v5339 = vunpack.c.l.b16 %v5038
  %v5340 = vunpack.c.l.b16 %v5039
  %v5341 = vunpack.c.h.b16 %v5039
  %v5342 = vunpack.c.l.b16 %v5040
  %v5343 = vunpack.c.h.b16 %v5040
  %v5344 = vunpack.c.l.b16 %v5041
  %v5345 = vunpack.c.h.b16 %v5041
  %v5346 = vunpack.c.l.b16 %v5042
  %v5347 = vunpack.c.l.b16 %v5043
  %v5348 = vunpack.c.h.b16 %v5043
  %v5349 = vunpack.c.l.b16 %v5044
  %v5350 = vunpack.c.h.b16 %v5044
  %v5351 = vunpack.c.l.b16 %v5045
  %v5352 = vunpack.c.h.b16 %v5045
  %v5353 = vunpack.c.l.b16 %v5046
  %v5354 = vunpack.c.l.b16 %v5047
  %v5355 = vunpack.c.h.b16 %v5047
  %v5356 = vunpack.c.l.b16 %v5048
  %v5357 = vunpack.c.h.b16 %v5048
  %v5358 = vunpack.c.l.b16 %v5049
  %v5359 = vunpack.c.h.b16 %v5049
  %v5360 = vunpack.c.l.b16 %v5050
  %v5361 = vpack.c.b16 %v5242, %v5235
  %v5362 = vpack.c.b16 %v5243, %v5236
  %v5363 = vpack.c.b16 %v5244, %v5237
  %v5364 = vpack.c.b16 %v5245, %v5238
  %v5365 = vpack.c.b16 %v5246, %v5239
  %v5366 = vpack.c.b16 %v5247, %v5240
  %v5367 = vpack.c.b16 %v5248, %v5241
  %v5368 = vpack.c.b16 %v5256, %v5249
  %v5369 = vpack.c.b16 %v5257, %v5250
  %v5370 = vpack.c.b16 %v5258, %v5251
  %v5371 = vpack.c.b16 %v5259, %v5252
  %v5372 = vpack.c.b16 %v5260, %v5253
  %v5373 = vpack.c.b16 %v5261, %v5254
  %v5374 = vpack.c.b16 %v5262, %v5255
  %v5375 = vpack.c.b16 %v5270, %v5263
  %v5376 = vpack.c.b16 %v5271, %v5264
  %v5377 = vpack.c.b16 %v5272, %v5265
  %v5378 = vpack.c.b16 %v5273, %v5266
  %v5379 = vpack.c.b16 %v5274, %v5267
  %v5380 = vpack.c.b16 %v5275, %v5268
  %v5381 = vpack.c.b16 %v5276, %v5269
  %v5382 = vpack.c.b16 %v5284, %v5277
  %v5383 = vpack.c.b16 %v5285, %v5278
  %v5384 = vpack.c.b16 %v5286, %v5279
  %v5385 = vpack.c.b16 %v5287, %v5280
  %v5386 = vpack.c.b16 %v5288, %v5281
  %v5387 = vpack.c.b16 %v5289, %v5282
  %v5388 = vpack.c.b16 %v5290, %v5283
  %v5389 = vpack.c.b16 %v5298, %v5291
  %v5390 = vpack.c.b16 %v5299, %v5292
  %v5391 = vpack.c.b16 %v5300, %v5293
  %v5392 = vpack.c.b16 %v5301, %v5294
  %v5393 = vpack.c.b16 %v5302, %v5295
  %v5394 = vpack.c.b16 %v5303, %v5296
  %v5395 = vpack.c.b16 %v5304, %v5297
  %v5396 = vpack.c.b16 %v5312, %v5305
  %v5397 = vpack.c.b16 %v5313, %v5306
  %v5398 = vpack.c.b16 %v5314, %v5307
  %v5399 = vpack.c.b16 %v5315, %v5308
  %v5400 = vpack.c.b16 %v5316, %v5309
  %v5401 = vpack.c.b16 %v5317, %v5310
  %v5402 = vpack.c.b16 %v5318, %v5311
  %v5403 = vpack.c.b16 %v5326, %v5319
  %v5404 = vpack.c.b16 %v5327, %v5320
  %v5405 = vpack.c.b16 %v5328, %v5321
  %v5406 = vpack.c.b16 %v5329, %v5322
  %v5407 = vpack.c.b16 %v5330, %v5323
  %v5408 = vpack.c.b16 %v5331, %v5324
  %v5409 = vpack.c.b16 %v5332, %v5325
  %v5410 = vpack.c.b16 %v5340, %v5333
  %v5411 = vpack.c.b16 %v5341, %v5334
  %v5412 = vpack.c.b16 %v5342, %v5335
  %v5413 = vpack.c.b16 %v5343, %v5336
  %v5414 = vpack.c.b16 %v5344, %v5337
  %v5415 = vpack.c.b16 %v5345, %v5338
  %v5416 = vpack.c.b16 %v5346, %v5339
  %v5417 = vpack.c.b16 %v5354, %v5347
  %v5418 = vpack.c.b16 %v5355, %v5348
  %v5419 = vpack.c.b16 %v5356, %v5349
  %v5420 = vpack.c.b16 %v5357, %v5350
  %v5421 = vpack.c.b16 %v5358, %v5351
  %v5422 = vpack.c.b16 %v5359, %v5352
  %v5423 = vpack.c.b16 %v5360, %v5353
  %v5599 = vunpack.c.l.b16 %v5051
  %v5600 = vunpack.c.h.b16 %v5051
  %v5601 = vunpack.c.l.b16 %v5052
  %v5602 = vunpack.c.h.b16 %v5052
  %v5603 = vunpack.c.l.b16 %v5053
  %v5604 = vunpack.c.h.b16 %v5053
  %v5605 = vunpack.c.l.b16 %v5054
  %v5606 = vunpack.c.h.b16 %v5054
  %v5607 = vunpack.c.l.b16 %v5055
  %v5608 = vunpack.c.h.b16 %v5055
  %v5609 = vunpack.c.l.b16 %v5056
  %v5610 = vunpack.c.h.b16 %v5056
  %v5611 = vunpack.c.l.b16 %v5057
  %v5612 = vunpack.c.h.b16 %v5057
  %v5613 = vunpack.c.l.b16 %v5058
  %v5614 = vunpack.c.h.b16 %v5058
  %v5615 = vunpack.c.l.b16 %v5059
  %v5616 = vunpack.c.h.b16 %v5059
  %v5617 = vunpack.c.l.b16 %v5060
  %v5618 = vunpack.c.h.b16 %v5060
  %v5619 = vunpack.c.l.b16 %v5061
  %v5620 = vunpack.c.h.b16 %v5061
  %v5621 = vunpack.c.l.b16 %v5062
  %v5622 = vunpack.c.h.b16 %v5062
  %v5623 = vunpack.c.l.b16 %v5063
  %v5624 = vunpack.c.h.b16 %v5063
  %v5625 = vunpack.c.l.b16 %v5064
  %v5626 = vunpack.c.h.b16 %v5064
  %v5627 = vunpack.c.l.b16 %v5065
  %v5628 = vunpack.c.h.b16 %v5065
  %v5629 = vunpack.c.l.b16 %v5066
  %v5630 = vunpack.c.h.b16 %v5066
  %v5631 = vunpack.c.l.b16 %v5067
  %v5632 = vunpack.c.h.b16 %v5067
  %v5633 = vunpack.c.l.b16 %v5068
  %v5634 = vunpack.c.h.b16 %v5068
  %v5635 = vunpack.c.l.b16 %v5069
  %v5636 = vunpack.c.h.b16 %v5069
  %v5637 = vunpack.c.l.b16 %v5070
  %v5638 = vunpack.c.h.b16 %v5070
  %v5639 = vunpack.c.l.b16 %v5071
  %v5640 = vunpack.c.h.b16 %v5071
  %v5641 = vunpack.c.l.b16 %v5072
  %v5642 = vunpack.c.h.b16 %v5072
  %v5643 = vunpack.c.l.b16 %v5073
  %v5644 = vunpack.c.h.b16 %v5073
  %v5645 = vunpack.c.l.b16 %v5074
  %v5646 = vunpack.c.h.b16 %v5074
  %v5647 = vunpack.c.l.b16 %v5075
  %v5648 = vunpack.c.h.b16 %v5075
  %v5649 = vunpack.c.l.b16 %v5076
  %v5650 = vunpack.c.h.b16 %v5076
  %v5651 = vunpack.c.l.b16 %v5077
  %v5652 = vunpack.c.h.b16 %v5077
  %v5653 = vunpack.c.l.b16 %v5078
  %v5654 = vunpack.c.h.b16 %v5078
  %v5655 = vunpack.c.l.b16 %v5079
  %v5656 = vunpack.c.h.b16 %v5079
  %v5657 = vunpack.c.l.b16 %v5080
  %v5658 = vunpack.c.h.b16 %v5080
  %v5659 = vunpack.c.l.b16 %v5081
  %v5660 = vunpack.c.h.b16 %v5081
  %v5661 = vunpack.c.l.b16 %v5082
  %v5662 = vunpack.c.h.b16 %v5082
  %v5663 = vunpack.c.l.b16 %v5083
  %v5664 = vunpack.c.h.b16 %v5083
  %v5665 = vunpack.c.l.b16 %v5084
  %v5666 = vunpack.c.h.b16 %v5084
  %v5667 = vunpack.c.l.b16 %v5085
  %v5668 = vunpack.c.h.b16 %v5085
  %v5669 = vunpack.c.l.b16 %v5086
  %v5670 = vunpack.c.h.b16 %v5086
  %v5671 = vunpack.c.l.b16 %v5087
  %v5672 = vunpack.c.h.b16 %v5087
  %v5673 = vunpack.c.l.b16 %v5088
  %v5674 = vunpack.c.h.b16 %v5088
  %v5675 = vunpack.c.l.b16 %v5089
  %v5676 = vunpack.c.h.b16 %v5089
  %v5677 = vunpack.c.l.b16 %v5090
  %v5678 = vunpack.c.h.b16 %v5090
  %v5679 = vunpack.c.l.b16 %v5091
  %v5680 = vunpack.c.h.b16 %v5091
  %v5681 = vunpack.c.l.b16 %v5092
  %v5682 = vunpack.c.h.b16 %v5092
  %v5683 = vunpack.c.l.b16 %v5093
  %v5684 = vunpack.c.h.b16 %v5093
  %v5685 = vunpack.c.l.b16 %v5094
  %v5686 = vunpack.c.h.b16 %v5094
  %v5687 = vunpack.c.l.b16 %v5095
  %v5688 = vunpack.c.h.b16 %v5095
  %v5689 = vunpack.c.l.b16 %v5096
  %v5690 = vunpack.c.h.b16 %v5096
  %v5691 = vunpack.c.l.b16 %v5097
  %v5692 = vunpack.c.h.b16 %v5097
  %v5693 = vunpack.c.l.b16 %v5098
  %v5694 = vunpack.c.h.b16 %v5098
  %v5695 = vunpack.c.l.b16 %v5099
  %v5696 = vunpack.c.h.b16 %v5099
  %v5697 = vunpack.c.l.b16 %v5100
  %v5698 = vunpack.c.h.b16 %v5100
  %v5699 = vunpack.c.l.b16 %v5101
  %v5700 = vunpack.c.h.b16 %v5101
  %v5701 = vunpack.c.l.b16 %v5102
  %v5702 = vunpack.c.h.b16 %v5102
  %v5703 = vunpack.c.l.b16 %v5103
  %v5704 = vunpack.c.h.b16 %v5103
  %v5705 = vunpack.c.l.b16 %v5104
  %v5706 = vunpack.c.h.b16 %v5104
  %v5707 = vunpack.c.l.b16 %v5105
  %v5708 = vunpack.c.h.b16 %v5105
  %v5709 = vunpack.c.l.b16 %v5106
  %v5710 = vunpack.c.h.b16 %v5106
  %v5711 = vunpack.c.l.b16 %v5107
  %v5712 = vunpack.c.h.b16 %v5107
  %v5713 = vunpack.c.l.b16 %v5108
  %v5714 = vunpack.c.h.b16 %v5108
  %v5715 = vunpack.c.l.b16 %v5109
  %v5716 = vunpack.c.h.b16 %v5109
  %v5717 = vunpack.c.l.b16 %v5110
  %v5718 = vunpack.c.h.b16 %v5110
  %v5719 = vunpack.c.l.b16 %v5111
  %v5720 = vunpack.c.h.b16 %v5111
  %v5721 = vunpack.c.l.b16 %v5112
  %v5722 = vunpack.c.h.b16 %v5112
  %v5723 = vunpack.c.l.b16 %v5113
  %v5724 = vunpack.c.h.b16 %v5113
  %v5725 = vunpack.c.l.b16 %v5114
  %v5726 = vunpack.c.h.b16 %v5114
  %v5727 = vunpack.c.l.b16 %v5115
  %v5728 = vunpack.c.h.b16 %v5115
  %v5729 = vunpack.c.l.b16 %v5116
  %v5730 = vunpack.c.h.b16 %v5116
  %v5731 = vunpack.c.l.b16 %v5117
  %v5732 = vunpack.c.h.b16 %v5117
  %v5733 = vunpack.c.l.b16 %v5118
  %v5734 = vunpack.c.h.b16 %v5118
  %v5735 = vunpack.c.l.b16 %v5119
  %v5736 = vunpack.c.h.b16 %v5119
  %v5737 = vunpack.c.l.b16 %v5120
  %v5738 = vunpack.c.h.b16 %v5120
  %v5739 = vunpack.c.l.b16 %v5121
  %v5740 = vunpack.c.h.b16 %v5121
  %v5741 = vunpack.c.l.b16 %v5122
  %v5742 = vunpack.c.h.b16 %v5122
  %v5743 = vunpack.c.l.b16 %v5123
  %v5744 = vunpack.c.h.b16 %v5123
  %v5745 = vunpack.c.l.b16 %v5124
  %v5746 = vunpack.c.h.b16 %v5124
  %v5747 = vunpack.c.l.b16 %v5125
  %v5748 = vunpack.c.h.b16 %v5125
  %v5749 = vunpack.c.l.b16 %v5126
  %v5750 = vunpack.c.h.b16 %v5126
  %v5751 = vunpack.c.l.b16 %v5127
  %v5752 = vunpack.c.h.b16 %v5127
  %v5753 = vunpack.c.l.b16 %v5128
  %v5754 = vunpack.c.h.b16 %v5128
  %v5755 = vunpack.c.l.b16 %v5129
  %v5756 = vunpack.c.h.b16 %v5129
  %v5757 = vunpack.c.l.b16 %v5130
  %v5758 = vunpack.c.h.b16 %v5130
  %v5759 = vunpack.c.l.b16 %v5131
  %v5760 = vunpack.c.h.b16 %v5131
  %v5761 = vunpack.c.l.b16 %v5132
  %v5762 = vunpack.c.h.b16 %v5132
  %v5763 = vunpack.c.l.b16 %v5133
  %v5764 = vunpack.c.h.b16 %v5133
  %v5765 = vunpack.c.l.b16 %v5134
  %v5766 = vunpack.c.h.b16 %v5134
  %v5767 = vunpack.c.l.b16 %v5135
  %v5768 = vunpack.c.h.b16 %v5135
  %v5769 = vunpack.c.l.b16 %v5136
  %v5770 = vunpack.c.h.b16 %v5136
  %v5771 = vunpack.c.l.b16 %v5137
  %v5772 = vunpack.c.h.b16 %v5137
  %v5773 = vunpack.c.l.b16 %v5138
  %v5774 = vunpack.c.h.b16 %v5138
  %v5775 = vunpack.c.l.b16 %v5139
  %v5776 = vunpack.c.h.b16 %v5139
  %v5777 = vunpack.c.l.b16 %v5140
  %v5778 = vunpack.c.h.b16 %v5140
  %v5779 = vunpack.c.l.b16 %v5141
  %v5780 = vunpack.c.h.b16 %v5141
  %v5781 = vunpack.c.l.b16 %v5142
  %v5782 = vunpack.c.h.b16 %v5142
  %v5783 = vunpack.c.l.b16 %v5143
  %v5784 = vunpack.c.h.b16 %v5143
  %v5785 = vunpack.c.l.b16 %v5144
  %v5786 = vunpack.c.h.b16 %v5144
  %v5787 = vunpack.c.l.b16 %v5145
  %v5788 = vunpack.c.h.b16 %v5145
  %v5789 = vunpack.c.l.b16 %v5146
  %v5790 = vunpack.c.h.b16 %v5146
  %v5791 = vunpack.c.l.b16 %v5147
  %v5792 = vunpack.c.h.b16 %v5147
  %v5793 = vunpack.c.l.b16 %v5148
  %v5794 = vunpack.c.h.b16 %v5148
  %v5795 = vunpack.c.l.b16 %v5149
  %v5796 = vunpack.c.h.b16 %v5149
  %v5797 = vunpack.c.l.b16 %v5150
  %v5798 = vunpack.c.h.b16 %v5150
  %v5799 = vunpack.c.l.b16 %v5151
  %v5800 = vunpack.c.h.b16 %v5151
  %v5801 = vunpack.c.l.b16 %v5152
  %v5802 = vunpack.c.h.b16 %v5152
  %v5803 = vunpack.c.l.b16 %v5153
  %v5804 = vunpack.c.h.b16 %v5153
  %v5805 = vunpack.c.l.b16 %v5154
  %v5806 = vunpack.c.h.b16 %v5154
  %v5807 = vunpack.c.l.b16 %v5155
  %v5808 = vunpack.c.h.b16 %v5155
  %v5809 = vunpack.c.l.b16 %v5156
  %v5810 = vunpack.c.h.b16 %v5156
  %v5811 = vunpack.c.l.b16 %v5157
  %v5812 = vunpack.c.h.b16 %v5157
  %v5813 = vunpack.c.l.b16 %v5158
  %v5814 = vunpack.c.h.b16 %v5158
  %v5815 = vunpack.c.l.b16 %v5159
  %v5816 = vunpack.c.h.b16 %v5159
  %v5817 = vunpack.c.l.b16 %v5160
  %v5818 = vunpack.c.h.b16 %v5160
  %v5819 = vunpack.c.l.b16 %v5161
  %v5820 = vunpack.c.h.b16 %v5161
  %v5821 = vunpack.c.l.b16 %v5162
  %v5822 = vunpack.c.h.b16 %v5162
  %v5823 = vpack.c.b16 %v5601, %v5599
  %v5824 = vpack.c.b16 %v5602, %v5600
  %v5825 = vpack.c.b16 %v5605, %v5603
  %v5826 = vpack.c.b16 %v5606, %v5604
  %v5827 = vpack.c.b16 %v5609, %v5607
  %v5828 = vpack.c.b16 %v5610, %v5608
  %v5829 = vpack.c.b16 %v5613, %v5611
  %v5830 = vpack.c.b16 %v5614, %v5612
  %v5831 = vpack.c.b16 %v5617, %v5615
  %v5832 = vpack.c.b16 %v5618, %v5616
  %v5833 = vpack.c.b16 %v5621, %v5619
  %v5834 = vpack.c.b16 %v5622, %v5620
  %v5835 = vpack.c.b16 %v5625, %v5623
  %v5836 = vpack.c.b16 %v5626, %v5624
  %v5837 = vpack.c.b16 %v5629, %v5627
  %v5838 = vpack.c.b16 %v5630, %v5628
  %v5839 = vpack.c.b16 %v5633, %v5631
  %v5840 = vpack.c.b16 %v5634, %v5632
  %v5841 = vpack.c.b16 %v5637, %v5635
  %v5842 = vpack.c.b16 %v5638, %v5636
  %v5843 = vpack.c.b16 %v5641, %v5639
  %v5844 = vpack.c.b16 %v5642, %v5640
  %v5845 = vpack.c.b16 %v5645, %v5643
  %v5846 = vpack.c.b16 %v5646, %v5644
  %v5847 = vpack.c.b16 %v5649, %v5647
  %v5848 = vpack.c.b16 %v5650, %v5648
  %v5849 = vpack.c.b16 %v5653, %v5651
  %v5850 = vpack.c.b16 %v5654, %v5652
  %v5851 = vpack.c.b16 %v5657, %v5655
  %v5852 = vpack.c.b16 %v5658, %v5656
  %v5853 = vpack.c.b16 %v5661, %v5659
  %v5854 = vpack.c.b16 %v5662, %v5660
  %v5855 = vpack.c.b16 %v5665, %v5663
  %v5856 = vpack.c.b16 %v5666, %v5664
  %v5857 = vpack.c.b16 %v5669, %v5667
  %v5858 = vpack.c.b16 %v5670, %v5668
  %v5859 = vpack.c.b16 %v5673, %v5671
  %v5860 = vpack.c.b16 %v5674, %v5672
  %v5861 = vpack.c.b16 %v5677, %v5675
  %v5862 = vpack.c.b16 %v5678, %v5676
  %v5863 = vpack.c.b16 %v5681, %v5679
  %v5864 = vpack.c.b16 %v5682, %v5680
  %v5865 = vpack.c.b16 %v5685, %v5683
  %v5866 = vpack.c.b16 %v5686, %v5684
  %v5867 = vpack.c.b16 %v5689, %v5687
  %v5868 = vpack.c.b16 %v5690, %v5688
  %v5869 = vpack.c.b16 %v5693, %v5691
  %v5870 = vpack.c.b16 %v5694, %v5692
  %v5871 = vpack.c.b16 %v5697, %v5695
  %v5872 = vpack.c.b16 %v5698, %v5696
  %v5873 = vpack.c.b16 %v5701, %v5699
  %v5874 = vpack.c.b16 %v5702, %v5700
  %v5875 = vpack.c.b16 %v5705, %v5703
  %v5876 = vpack.c.b16 %v5706, %v5704
  %v5877 = vpack.c.b16 %v5709, %v5707
  %v5878 = vpack.c.b16 %v5710, %v5708
  %v5879 = vpack.c.b16 %v5713, %v5711
  %v5880 = vpack.c.b16 %v5714, %v5712
  %v5881 = vpack.c.b16 %v5717, %v5715
  %v5882 = vpack.c.b16 %v5718, %v5716
  %v5883 = vpack.c.b16 %v5721, %v5719
  %v5884 = vpack.c.b16 %v5722, %v5720
  %v5885 = vpack.c.b16 %v5725, %v5723
  %v5886 = vpack.c.b16 %v5726, %v5724
  %v5887 = vpack.c.b16 %v5729, %v5727
  %v5888 = vpack.c.b16 %v5730, %v5728
  %v5889 = vpack.c.b16 %v5733, %v5731
  %v5890 = vpack.c.b16 %v5734, %v5732
  %v5891 = vpack.c.b16 %v5737, %v5735
  %v5892 = vpack.c.b16 %v5738, %v5736
  %v5893 = vpack.c.b16 %v5741, %v5739
  %v5894 = vpack.c.b16 %v5742, %v5740
  %v5895 = vpack.c.b16 %v5745, %v5743
  %v5896 = vpack.c.b16 %v5746, %v5744
  %v5897 = vpack.c.b16 %v5749, %v5747
  %v5898 = vpack.c.b16 %v5750, %v5748
  %v5899 = vpack.c.b16 %v5753, %v5751
  %v5900 = vpack.c.b16 %v5754, %v5752
  %v5901 = vpack.c.b16 %v5757, %v5755
  %v5902 = vpack.c.b16 %v5758, %v5756
  %v5903 = vpack.c.b16 %v5761, %v5759
  %v5904 = vpack.c.b16 %v5762, %v5760
  %v5905 = vpack.c.b16 %v5765, %v5763
  %v5906 = vpack.c.b16 %v5766, %v5764
  %v5907 = vpack.c.b16 %v5769, %v5767
  %v5908 = vpack.c.b16 %v5770, %v5768
  %v5909 = vpack.c.b16 %v5773, %v5771
  %v5910 = vpack.c.b16 %v5774, %v5772
  %v5911 = vpack.c.b16 %v5777, %v5775
  %v5912 = vpack.c.b16 %v5778, %v5776
  %v5913 = vpack.c.b16 %v5781, %v5779
  %v5914 = vpack.c.b16 %v5782, %v5780
  %v5915 = vpack.c.b16 %v5785, %v5783
  %v5916 = vpack.c.b16 %v5786, %v5784
  %v5917 = vpack.c.b16 %v5789, %v5787
  %v5918 = vpack.c.b16 %v5790, %v5788
  %v5919 = vpack.c.b16 %v5793, %v5791
  %v5920 = vpack.c.b16 %v5794, %v5792
  %v5921 = vpack.c.b16 %v5797, %v5795
  %v5922 = vpack.c.b16 %v5798, %v5796
  %v5923 = vpack.c.b16 %v5801, %v5799
  %v5924 = vpack.c.b16 %v5802, %v5800
  %v5925 = vpack.c.b16 %v5805, %v5803
  %v5926 = vpack.c.b16 %v5806, %v5804
  %v5927 = vpack.c.b16 %v5809, %v5807
  %v5928 = vpack.c.b16 %v5810, %v5808
  %v5929 = vpack.c.b16 %v5813, %v5811
  %v5930 = vpack.c.b16 %v5814, %v5812
  %v5931 = vpack.c.b16 %v5817, %v5815
  %v5932 = vpack.c.b16 %v5818, %v5816
  %v5933 = vpack.c.b16 %v5821, %v5819
  %v5934 = vpack.c.b16 %v5822, %v5820
  %6047 = vmatprep.subr.bf16.mxu0 %v5838
  %6048 = vmatpush1.bf16.msra.mxu0 %v5837
  %6049 = vmatprep.subr.bf16.mxu0 %v5836
  %6050 = vmatpush1.bf16.msra.mxu0 %v5835
  %6051 = vmatprep.subr.bf16.mxu0 %v5834
  %6052 = vmatpush1.bf16.msra.mxu0 %v5833
  %6053 = vmatprep.subr.bf16.mxu0 %v5832
  %6054 = vmatpush1.bf16.msra.mxu0 %v5831
  %6055 = vmatprep.subr.bf16.mxu0 %v5830
  %6056 = vmatpush1.bf16.msra.mxu0 %v5829
  %6057 = vmatprep.subr.bf16.mxu0 %v5828
  %6058 = vmatpush1.bf16.msra.mxu0 %v5827
  %6059 = vmatprep.subr.bf16.mxu0 %v5826
  %6060 = vmatpush1.bf16.msra.mxu0 %v5825
  %6061 = vmatprep.subr.bf16.mxu0 %v5824
  %6062 = vmatpush1.bf16.msra.mxu0 %v5823
  %6063 = vmatprep.subr.bf16.mxu0 %v5854
  %6064 = vmatpush2.bf16.msra.mxu0 %v5853
  %6065 = vmatprep.subr.bf16.mxu0 %v5852
  %6066 = vmatpush2.bf16.msra.mxu0 %v5851
  %6067 = vmatprep.subr.bf16.mxu0 %v5850
  %6068 = vmatpush2.bf16.msra.mxu0 %v5849
  %6069 = vmatprep.subr.bf16.mxu0 %v5848
  %6070 = vmatpush2.bf16.msra.mxu0 %v5847
  %6071 = vmatprep.subr.bf16.mxu0 %v5846
  %6072 = vmatpush2.bf16.msra.mxu0 %v5845
  %6073 = vmatprep.subr.bf16.mxu0 %v5844
  %6074 = vmatpush2.bf16.msra.mxu0 %v5843
  %6075 = vmatprep.subr.bf16.mxu0 %v5842
  %6076 = vmatpush2.bf16.msra.mxu0 %v5841
  %6077 = vmatprep.subr.bf16.mxu0 %v5840
  %6078 = vmatpush2.bf16.msra.mxu0 %v5839
  %6079 = vmatprep.mubr.bf16.mxu0 %v5362
  %6080 = vmatmul.mubr.bf16.gmra.mxu0 %v5361
  %v6081 = vpop.f32.mrf.mxu0
  %v6082 = vadd.f32 0.0, %v6081
  %v6083 = vpop.f32.mrf.mxu0
  %v6084 = vadd.f32 0.0, %v6083
  %v6085 = vpop.f32.mrf.mxu0
  %v6086 = vadd.f32 0.0, %v6085
  %v6087 = vpop.f32.mrf.mxu0
  %v6088 = vadd.f32 0.0, %v6087
  %6089 = vmatprep.mubr.bf16.mxu0 %v5369
  %6090 = vmatmul.mubr.bf16.gmra.mxu0 %v5368
  %v6091 = vpop.f32.mrf.mxu0
  %v6092 = vadd.f32 0.0, %v6091
  %v6093 = vpop.f32.mrf.mxu0
  %v6094 = vadd.f32 0.0, %v6093
  %v6095 = vpop.f32.mrf.mxu0
  %v6096 = vadd.f32 0.0, %v6095
  %v6097 = vpop.f32.mrf.mxu0
  %v6098 = vadd.f32 0.0, %v6097
  %6099 = vmatprep.mubr.bf16.mxu0 %v5376
  %6100 = vmatmul.mubr.bf16.gmra.mxu0 %v5375
  %v6101 = vpop.f32.mrf.mxu0
  %v6102 = vadd.f32 0.0, %v6101
  %v6103 = vpop.f32.mrf.mxu0
  %v6104 = vadd.f32 0.0, %v6103
  %v6105 = vpop.f32.mrf.mxu0
  %v6106 = vadd.f32 0.0, %v6105
  %v6107 = vpop.f32.mrf.mxu0
  %v6108 = vadd.f32 0.0, %v6107
  %6109 = vmatprep.mubr.bf16.mxu0 %v5383
  %6110 = vmatmul.mubr.bf16.gmra.mxu0 %v5382
  %v6111 = vpop.f32.mrf.mxu0
  %v6112 = vadd.f32 0.0, %v6111
  %v6113 = vpop.f32.mrf.mxu0
  %v6114 = vadd.f32 0.0, %v6113
  %v6115 = vpop.f32.mrf.mxu0
  %v6116 = vadd.f32 0.0, %v6115
  %v6117 = vpop.f32.mrf.mxu0
  %v6118 = vadd.f32 0.0, %v6117
  %6119 = vmatprep.mubr.bf16.mxu0 %v5390
  %6120 = vmatmul.mubr.bf16.gmra.mxu0 %v5389
  %v6121 = vpop.f32.mrf.mxu0
  %v6122 = vadd.f32 0.0, %v6121
  %v6123 = vpop.f32.mrf.mxu0
  %v6124 = vadd.f32 0.0, %v6123
  %v6125 = vpop.f32.mrf.mxu0
  %v6126 = vadd.f32 0.0, %v6125
  %v6127 = vpop.f32.mrf.mxu0
  %v6128 = vadd.f32 0.0, %v6127
  %6129 = vmatprep.mubr.bf16.mxu0 %v5397
  %6130 = vmatmul.mubr.bf16.gmra.mxu0 %v5396
  %v6131 = vpop.f32.mrf.mxu0
  %v6132 = vadd.f32 0.0, %v6131
  %v6133 = vpop.f32.mrf.mxu0
  %v6134 = vadd.f32 0.0, %v6133
  %v6135 = vpop.f32.mrf.mxu0
  %v6136 = vadd.f32 0.0, %v6135
  %v6137 = vpop.f32.mrf.mxu0
  %v6138 = vadd.f32 0.0, %v6137
  %6139 = vmatprep.mubr.bf16.mxu0 %v5404
  %6140 = vmatmul.mubr.bf16.gmra.mxu0 %v5403
  %v6141 = vpop.f32.mrf.mxu0
  %v6142 = vadd.f32 0.0, %v6141
  %v6143 = vpop.f32.mrf.mxu0
  %v6144 = vadd.f32 0.0, %v6143
  %v6145 = vpop.f32.mrf.mxu0
  %v6146 = vadd.f32 0.0, %v6145
  %v6147 = vpop.f32.mrf.mxu0
  %v6148 = vadd.f32 0.0, %v6147
  %6149 = vmatprep.mubr.bf16.mxu0 %v5411
  %6150 = vmatmul.mubr.bf16.gmra.mxu0 %v5410
  %v6151 = vpop.f32.mrf.mxu0
  %v6152 = vadd.f32 0.0, %v6151
  %v6153 = vpop.f32.mrf.mxu0
  %v6154 = vadd.f32 0.0, %v6153
  %v6155 = vpop.f32.mrf.mxu0
  %v6156 = vadd.f32 0.0, %v6155
  %v6157 = vpop.f32.mrf.mxu0
  %v6158 = vadd.f32 0.0, %v6157
  %6159 = vmatprep.mubr.bf16.mxu0 %v5418
  %6160 = vmatmul.mubr.bf16.gmra.mxu0 %v5417
  %v6161 = vpop.f32.mrf.mxu0
  %v6162 = vadd.f32 0.0, %v6161
  %v6163 = vpop.f32.mrf.mxu0
  %v6164 = vadd.f32 0.0, %v6163
  %v6165 = vpop.f32.mrf.mxu0
  %v6166 = vadd.f32 0.0, %v6165
  %v6167 = vpop.f32.mrf.mxu0
  %v6168 = vadd.f32 0.0, %v6167
  %6169 = vdwg.mxu0
  %6170 = vmatprep.subr.bf16.mxu0 %v5870
  %6171 = vmatpush1.bf16.msra.mxu0 %v5869
  %6172 = vmatprep.subr.bf16.mxu0 %v5868
  %6173 = vmatpush1.bf16.msra.mxu0 %v5867
  %6174 = vmatprep.subr.bf16.mxu0 %v5866
  %6175 = vmatpush1.bf16.msra.mxu0 %v5865
  %6176 = vmatprep.subr.bf16.mxu0 %v5864
  %6177 = vmatpush1.bf16.msra.mxu0 %v5863
  %6178 = vmatprep.subr.bf16.mxu0 %v5862
  %6179 = vmatpush1.bf16.msra.mxu0 %v5861
  %6180 = vmatprep.subr.bf16.mxu0 %v5860
  %6181 = vmatpush1.bf16.msra.mxu0 %v5859
  %6182 = vmatprep.subr.bf16.mxu0 %v5858
  %6183 = vmatpush1.bf16.msra.mxu0 %v5857
  %6184 = vmatprep.subr.bf16.mxu0 %v5856
  %6185 = vmatpush1.bf16.msra.mxu0 %v5855
  %6186 = vmatprep.subr.bf16.mxu0 %v5886
  %6187 = vmatpush2.bf16.msra.mxu0 %v5885
  %6188 = vmatprep.subr.bf16.mxu0 %v5884
  %6189 = vmatpush2.bf16.msra.mxu0 %v5883
  %6190 = vmatprep.subr.bf16.mxu0 %v5882
  %6191 = vmatpush2.bf16.msra.mxu0 %v5881
  %6192 = vmatprep.subr.bf16.mxu0 %v5880
  %6193 = vmatpush2.bf16.msra.mxu0 %v5879
  %6194 = vmatprep.subr.bf16.mxu0 %v5878
  %6195 = vmatpush2.bf16.msra.mxu0 %v5877
  %6196 = vmatprep.subr.bf16.mxu0 %v5876
  %6197 = vmatpush2.bf16.msra.mxu0 %v5875
  %6198 = vmatprep.subr.bf16.mxu0 %v5874
  %6199 = vmatpush2.bf16.msra.mxu0 %v5873
  %6200 = vmatprep.subr.bf16.mxu0 %v5872
  %6201 = vmatpush2.bf16.msra.mxu0 %v5871
  %6202 = vmatprep.mubr.bf16.mxu0 %v5364
  %6203 = vmatmul.mubr.bf16.gmra.mxu0 %v5363
  %v6204 = vpop.f32.mrf.mxu0
  %v6205 = vadd.f32 %v6082, %v6204
  %v6206 = vpop.f32.mrf.mxu0
  %v6207 = vadd.f32 %v6084, %v6206
  %v6208 = vpop.f32.mrf.mxu0
  %v6209 = vadd.f32 %v6086, %v6208
  %v6210 = vpop.f32.mrf.mxu0
  %v6211 = vadd.f32 %v6088, %v6210
  %6212 = vmatprep.mubr.bf16.mxu0 %v5371
  %6213 = vmatmul.mubr.bf16.gmra.mxu0 %v5370
  %v6214 = vpop.f32.mrf.mxu0
  %v6215 = vadd.f32 %v6092, %v6214
  %v6216 = vpop.f32.mrf.mxu0
  %v6217 = vadd.f32 %v6094, %v6216
  %v6218 = vpop.f32.mrf.mxu0
  %v6219 = vadd.f32 %v6096, %v6218
  %v6220 = vpop.f32.mrf.mxu0
  %v6221 = vadd.f32 %v6098, %v6220
  %6222 = vmatprep.mubr.bf16.mxu0 %v5378
  %6223 = vmatmul.mubr.bf16.gmra.mxu0 %v5377
  %v6224 = vpop.f32.mrf.mxu0
  %v6225 = vadd.f32 %v6102, %v6224
  %v6226 = vpop.f32.mrf.mxu0
  %v6227 = vadd.f32 %v6104, %v6226
  %v6228 = vpop.f32.mrf.mxu0
  %v6229 = vadd.f32 %v6106, %v6228
  %v6230 = vpop.f32.mrf.mxu0
  %v6231 = vadd.f32 %v6108, %v6230
  %6232 = vmatprep.mubr.bf16.mxu0 %v5385
  %6233 = vmatmul.mubr.bf16.gmra.mxu0 %v5384
  %v6234 = vpop.f32.mrf.mxu0
  %v6235 = vadd.f32 %v6112, %v6234
  %v6236 = vpop.f32.mrf.mxu0
  %v6237 = vadd.f32 %v6114, %v6236
  %v6238 = vpop.f32.mrf.mxu0
  %v6239 = vadd.f32 %v6116, %v6238
  %v6240 = vpop.f32.mrf.mxu0
  %v6241 = vadd.f32 %v6118, %v6240
  %6242 = vmatprep.mubr.bf16.mxu0 %v5392
  %6243 = vmatmul.mubr.bf16.gmra.mxu0 %v5391
  %v6244 = vpop.f32.mrf.mxu0
  %v6245 = vadd.f32 %v6122, %v6244
  %v6246 = vpop.f32.mrf.mxu0
  %v6247 = vadd.f32 %v6124, %v6246
  %v6248 = vpop.f32.mrf.mxu0
  %v6249 = vadd.f32 %v6126, %v6248
  %v6250 = vpop.f32.mrf.mxu0
  %v6251 = vadd.f32 %v6128, %v6250
  %6252 = vmatprep.mubr.bf16.mxu0 %v5399
  %6253 = vmatmul.mubr.bf16.gmra.mxu0 %v5398
  %v6254 = vpop.f32.mrf.mxu0
  %v6255 = vadd.f32 %v6132, %v6254
  %v6256 = vpop.f32.mrf.mxu0
  %v6257 = vadd.f32 %v6134, %v6256
  %v6258 = vpop.f32.mrf.mxu0
  %v6259 = vadd.f32 %v6136, %v6258
  %v6260 = vpop.f32.mrf.mxu0
  %v6261 = vadd.f32 %v6138, %v6260
  %6262 = vmatprep.mubr.bf16.mxu0 %v5406
  %6263 = vmatmul.mubr.bf16.gmra.mxu0 %v5405
  %v6264 = vpop.f32.mrf.mxu0
  %v6265 = vadd.f32 %v6142, %v6264
  %v6266 = vpop.f32.mrf.mxu0
  %v6267 = vadd.f32 %v6144, %v6266
  %v6268 = vpop.f32.mrf.mxu0
  %v6269 = vadd.f32 %v6146, %v6268
  %v6270 = vpop.f32.mrf.mxu0
  %v6271 = vadd.f32 %v6148, %v6270
  %6272 = vmatprep.mubr.bf16.mxu0 %v5413
  %6273 = vmatmul.mubr.bf16.gmra.mxu0 %v5412
  %v6274 = vpop.f32.mrf.mxu0
  %v6275 = vadd.f32 %v6152, %v6274
  %v6276 = vpop.f32.mrf.mxu0
  %v6277 = vadd.f32 %v6154, %v6276
  %v6278 = vpop.f32.mrf.mxu0
  %v6279 = vadd.f32 %v6156, %v6278
  %v6280 = vpop.f32.mrf.mxu0
  %v6281 = vadd.f32 %v6158, %v6280
  %6282 = vmatprep.mubr.bf16.mxu0 %v5420
  %6283 = vmatmul.mubr.bf16.gmra.mxu0 %v5419
  %v6284 = vpop.f32.mrf.mxu0
  %v6285 = vadd.f32 %v6162, %v6284
  %v6286 = vpop.f32.mrf.mxu0
  %v6287 = vadd.f32 %v6164, %v6286
  %v6288 = vpop.f32.mrf.mxu0
  %v6289 = vadd.f32 %v6166, %v6288
  %v6290 = vpop.f32.mrf.mxu0
  %v6291 = vadd.f32 %v6168, %v6290
  %6292 = vdwg.mxu0
  %6293 = vmatprep.subr.bf16.mxu0 %v5902
  %6294 = vmatpush1.bf16.msra.mxu0 %v5901
  %6295 = vmatprep.subr.bf16.mxu0 %v5900
  %6296 = vmatpush1.bf16.msra.mxu0 %v5899
  %6297 = vmatprep.subr.bf16.mxu0 %v5898
  %6298 = vmatpush1.bf16.msra.mxu0 %v5897
  %6299 = vmatprep.subr.bf16.mxu0 %v5896
  %6300 = vmatpush1.bf16.msra.mxu0 %v5895
  %6301 = vmatprep.subr.bf16.mxu0 %v5894
  %6302 = vmatpush1.bf16.msra.mxu0 %v5893
  %6303 = vmatprep.subr.bf16.mxu0 %v5892
  %6304 = vmatpush1.bf16.msra.mxu0 %v5891
  %6305 = vmatprep.subr.bf16.mxu0 %v5890
  %6306 = vmatpush1.bf16.msra.mxu0 %v5889
  %6307 = vmatprep.subr.bf16.mxu0 %v5888
  %6308 = vmatpush1.bf16.msra.mxu0 %v5887
  %6309 = vmatprep.subr.bf16.mxu0 %v5918
  %6310 = vmatpush2.bf16.msra.mxu0 %v5917
  %6311 = vmatprep.subr.bf16.mxu0 %v5916
  %6312 = vmatpush2.bf16.msra.mxu0 %v5915
  %6313 = vmatprep.subr.bf16.mxu0 %v5914
  %6314 = vmatpush2.bf16.msra.mxu0 %v5913
  %6315 = vmatprep.subr.bf16.mxu0 %v5912
  %6316 = vmatpush2.bf16.msra.mxu0 %v5911
  %6317 = vmatprep.subr.bf16.mxu0 %v5910
  %6318 = vmatpush2.bf16.msra.mxu0 %v5909
  %6319 = vmatprep.subr.bf16.mxu0 %v5908
  %6320 = vmatpush2.bf16.msra.mxu0 %v5907
  %6321 = vmatprep.subr.bf16.mxu0 %v5906
  %6322 = vmatpush2.bf16.msra.mxu0 %v5905
  %6323 = vmatprep.subr.bf16.mxu0 %v5904
  %6324 = vmatpush2.bf16.msra.mxu0 %v5903
  %6325 = vmatprep.mubr.bf16.mxu0 %v5366
  %6326 = vmatmul.mubr.bf16.gmra.mxu0 %v5365
  %v6327 = vpop.f32.mrf.mxu0
  %v6328 = vadd.f32 %v6205, %v6327
  %v6329 = vpop.f32.mrf.mxu0
  %v6330 = vadd.f32 %v6207, %v6329
  %v6331 = vpop.f32.mrf.mxu0
  %v6332 = vadd.f32 %v6209, %v6331
  %v6333 = vpop.f32.mrf.mxu0
  %v6334 = vadd.f32 %v6211, %v6333
  %6335 = vmatprep.mubr.bf16.mxu0 %v5373
  %6336 = vmatmul.mubr.bf16.gmra.mxu0 %v5372
  %v6337 = vpop.f32.mrf.mxu0
  %v6338 = vadd.f32 %v6215, %v6337
  %v6339 = vpop.f32.mrf.mxu0
  %v6340 = vadd.f32 %v6217, %v6339
  %v6341 = vpop.f32.mrf.mxu0
  %v6342 = vadd.f32 %v6219, %v6341
  %v6343 = vpop.f32.mrf.mxu0
  %v6344 = vadd.f32 %v6221, %v6343
  %6345 = vmatprep.mubr.bf16.mxu0 %v5380
  %6346 = vmatmul.mubr.bf16.gmra.mxu0 %v5379
  %v6347 = vpop.f32.mrf.mxu0
  %v6348 = vadd.f32 %v6225, %v6347
  %v6349 = vpop.f32.mrf.mxu0
  %v6350 = vadd.f32 %v6227, %v6349
  %v6351 = vpop.f32.mrf.mxu0
  %v6352 = vadd.f32 %v6229, %v6351
  %v6353 = vpop.f32.mrf.mxu0
  %v6354 = vadd.f32 %v6231, %v6353
  %6355 = vmatprep.mubr.bf16.mxu0 %v5387
  %6356 = vmatmul.mubr.bf16.gmra.mxu0 %v5386
  %v6357 = vpop.f32.mrf.mxu0
  %v6358 = vadd.f32 %v6235, %v6357
  %v6359 = vpop.f32.mrf.mxu0
  %v6360 = vadd.f32 %v6237, %v6359
  %v6361 = vpop.f32.mrf.mxu0
  %v6362 = vadd.f32 %v6239, %v6361
  %v6363 = vpop.f32.mrf.mxu0
  %v6364 = vadd.f32 %v6241, %v6363
  %6365 = vmatprep.mubr.bf16.mxu0 %v5394
  %6366 = vmatmul.mubr.bf16.gmra.mxu0 %v5393
  %v6367 = vpop.f32.mrf.mxu0
  %v6368 = vadd.f32 %v6245, %v6367
  %v6369 = vpop.f32.mrf.mxu0
  %v6370 = vadd.f32 %v6247, %v6369
  %v6371 = vpop.f32.mrf.mxu0
  %v6372 = vadd.f32 %v6249, %v6371
  %v6373 = vpop.f32.mrf.mxu0
  %v6374 = vadd.f32 %v6251, %v6373
  %6375 = vmatprep.mubr.bf16.mxu0 %v5401
  %6376 = vmatmul.mubr.bf16.gmra.mxu0 %v5400
  %v6377 = vpop.f32.mrf.mxu0
  %v6378 = vadd.f32 %v6255, %v6377
  %v6379 = vpop.f32.mrf.mxu0
  %v6380 = vadd.f32 %v6257, %v6379
  %v6381 = vpop.f32.mrf.mxu0
  %v6382 = vadd.f32 %v6259, %v6381
  %v6383 = vpop.f32.mrf.mxu0
  %v6384 = vadd.f32 %v6261, %v6383
  %6385 = vmatprep.mubr.bf16.mxu0 %v5408
  %6386 = vmatmul.mubr.bf16.gmra.mxu0 %v5407
  %v6387 = vpop.f32.mrf.mxu0
  %v6388 = vadd.f32 %v6265, %v6387
  %v6389 = vpop.f32.mrf.mxu0
  %v6390 = vadd.f32 %v6267, %v6389
  %v6391 = vpop.f32.mrf.mxu0
  %v6392 = vadd.f32 %v6269, %v6391
  %v6393 = vpop.f32.mrf.mxu0
  %v6394 = vadd.f32 %v6271, %v6393
  %6395 = vmatprep.mubr.bf16.mxu0 %v5415
  %6396 = vmatmul.mubr.bf16.gmra.mxu0 %v5414
  %v6397 = vpop.f32.mrf.mxu0
  %v6398 = vadd.f32 %v6275, %v6397
  %v6399 = vpop.f32.mrf.mxu0
  %v6400 = vadd.f32 %v6277, %v6399
  %v6401 = vpop.f32.mrf.mxu0
  %v6402 = vadd.f32 %v6279, %v6401
  %v6403 = vpop.f32.mrf.mxu0
  %v6404 = vadd.f32 %v6281, %v6403
  %6405 = vmatprep.mubr.bf16.mxu0 %v5422
  %6406 = vmatmul.mubr.bf16.gmra.mxu0 %v5421
  %v6407 = vpop.f32.mrf.mxu0
  %v6408 = vadd.f32 %v6285, %v6407
  %v6409 = vpop.f32.mrf.mxu0
  %v6410 = vadd.f32 %v6287, %v6409
  %v6411 = vpop.f32.mrf.mxu0
  %v6412 = vadd.f32 %v6289, %v6411
  %v6413 = vpop.f32.mrf.mxu0
  %v6414 = vadd.f32 %v6291, %v6413
  %6415 = vdwg.mxu0
  %6416 = vmatprep.subr.bf16.mxu0 %v5934
  %6417 = vmatpush1.bf16.msra.mxu0 %v5933
  %6418 = vmatprep.subr.bf16.mxu0 %v5932
  %6419 = vmatpush1.bf16.msra.mxu0 %v5931
  %6420 = vmatprep.subr.bf16.mxu0 %v5930
  %6421 = vmatpush1.bf16.msra.mxu0 %v5929
  %6422 = vmatprep.subr.bf16.mxu0 %v5928
  %6423 = vmatpush1.bf16.msra.mxu0 %v5927
  %6424 = vmatprep.subr.bf16.mxu0 %v5926
  %6425 = vmatpush1.bf16.msra.mxu0 %v5925
  %6426 = vmatprep.subr.bf16.mxu0 %v5924
  %6427 = vmatpush1.bf16.msra.mxu0 %v5923
  %6428 = vmatprep.subr.bf16.mxu0 %v5922
  %6429 = vmatpush1.bf16.msra.mxu0 %v5921
  %6430 = vmatprep.subr.bf16.mxu0 %v5920
  %6431 = vmatpush1.bf16.msra.mxu0 %v5919
  %6432 = vmatprep.subr.bf16.mxu0 0
  %6433 = vmatpush2.bf16.msra.mxu0 0
  %6434 = vmatprep.subr.bf16.mxu0 0
  %6435 = vmatpush2.bf16.msra.mxu0 0
  %6436 = vmatprep.subr.bf16.mxu0 0
  %6437 = vmatpush2.bf16.msra.mxu0 0
  %6438 = vmatprep.subr.bf16.mxu0 0
  %6439 = vmatpush2.bf16.msra.mxu0 0
  %6440 = vmatprep.subr.bf16.mxu0 0
  %6441 = vmatpush2.bf16.msra.mxu0 0
  %6442 = vmatprep.subr.bf16.mxu0 0
  %6443 = vmatpush2.bf16.msra.mxu0 0
  %6444 = vmatprep.subr.bf16.mxu0 0
  %6445 = vmatpush2.bf16.msra.mxu0 0
  %6446 = vmatprep.subr.bf16.mxu0 0
  %6447 = vmatpush2.bf16.msra.mxu0 0
  %6448 = vmatprep.mubr.bf16.mxu0 0
  %6449 = vmatmul.mubr.bf16.gmra.mxu0 %v5367
  %v6450 = vpop.f32.mrf.mxu0
  %v6451 = vadd.f32 %v6328, %v6450
  %v6452 = vpop.f32.mrf.mxu0
  %v6453 = vadd.f32 %v6330, %v6452
  %v6454 = vpop.f32.mrf.mxu0
  %v6455 = vadd.f32 %v6332, %v6454
  %v6456 = vpop.f32.mrf.mxu0
  %v6457 = vadd.f32 %v6334, %v6456
  %6458 = vmatprep.mubr.bf16.mxu0 0
  %6459 = vmatmul.mubr.bf16.gmra.mxu0 %v5374
  %v6460 = vpop.f32.mrf.mxu0
  %v6461 = vadd.f32 %v6338, %v6460
  %v6462 = vpop.f32.mrf.mxu0
  %v6463 = vadd.f32 %v6340, %v6462
  %v6464 = vpop.f32.mrf.mxu0
  %v6465 = vadd.f32 %v6342, %v6464
  %v6466 = vpop.f32.mrf.mxu0
  %v6467 = vadd.f32 %v6344, %v6466
  %6468 = vmatprep.mubr.bf16.mxu0 0
  %6469 = vmatmul.mubr.bf16.gmra.mxu0 %v5381
  %v6470 = vpop.f32.mrf.mxu0
  %v6471 = vadd.f32 %v6348, %v6470
  %v6472 = vpop.f32.mrf.mxu0
  %v6473 = vadd.f32 %v6350, %v6472
  %v6474 = vpop.f32.mrf.mxu0
  %v6475 = vadd.f32 %v6352, %v6474
  %v6476 = vpop.f32.mrf.mxu0
  %v6477 = vadd.f32 %v6354, %v6476
  %6478 = vmatprep.mubr.bf16.mxu0 0
  %6479 = vmatmul.mubr.bf16.gmra.mxu0 %v5388
  %v6480 = vpop.f32.mrf.mxu0
  %v6481 = vadd.f32 %v6358, %v6480
  %v6482 = vpop.f32.mrf.mxu0
  %v6483 = vadd.f32 %v6360, %v6482
  %v6484 = vpop.f32.mrf.mxu0
  %v6485 = vadd.f32 %v6362, %v6484
  %v6486 = vpop.f32.mrf.mxu0
  %v6487 = vadd.f32 %v6364, %v6486
  %6488 = vmatprep.mubr.bf16.mxu0 0
  %6489 = vmatmul.mubr.bf16.gmra.mxu0 %v5395
  %v6490 = vpop.f32.mrf.mxu0
  %v6491 = vadd.f32 %v6368, %v6490
  %v6492 = vpop.f32.mrf.mxu0
  %v6493 = vadd.f32 %v6370, %v6492
  %v6494 = vpop.f32.mrf.mxu0
  %v6495 = vadd.f32 %v6372, %v6494
  %v6496 = vpop.f32.mrf.mxu0
  %v6497 = vadd.f32 %v6374, %v6496
  %6498 = vmatprep.mubr.bf16.mxu0 0
  %6499 = vmatmul.mubr.bf16.gmra.mxu0 %v5402
  %v6500 = vpop.f32.mrf.mxu0
  %v6501 = vadd.f32 %v6378, %v6500
  %v6502 = vpop.f32.mrf.mxu0
  %v6503 = vadd.f32 %v6380, %v6502
  %v6504 = vpop.f32.mrf.mxu0
  %v6505 = vadd.f32 %v6382, %v6504
  %v6506 = vpop.f32.mrf.mxu0
  %v6507 = vadd.f32 %v6384, %v6506
  %6508 = vmatprep.mubr.bf16.mxu0 0
  %6509 = vmatmul.mubr.bf16.gmra.mxu0 %v5409
  %v6510 = vpop.f32.mrf.mxu0
  %v6511 = vadd.f32 %v6388, %v6510
  %v6512 = vpop.f32.mrf.mxu0
  %v6513 = vadd.f32 %v6390, %v6512
  %v6514 = vpop.f32.mrf.mxu0
  %v6515 = vadd.f32 %v6392, %v6514
  %v6516 = vpop.f32.mrf.mxu0
  %v6517 = vadd.f32 %v6394, %v6516
  %6518 = vmatprep.mubr.bf16.mxu0 0
  %6519 = vmatmul.mubr.bf16.gmra.mxu0 %v5416
  %v6520 = vpop.f32.mrf.mxu0
  %v6521 = vadd.f32 %v6398, %v6520
  %v6522 = vpop.f32.mrf.mxu0
  %v6523 = vadd.f32 %v6400, %v6522
  %v6524 = vpop.f32.mrf.mxu0
  %v6525 = vadd.f32 %v6402, %v6524
  %v6526 = vpop.f32.mrf.mxu0
  %v6527 = vadd.f32 %v6404, %v6526
  %6528 = vmatprep.mubr.bf16.mxu0 0
  %6529 = vmatmul.mubr.bf16.gmra.mxu0 %v5423
  %v6530 = vpop.f32.mrf.mxu0
  %v6531 = vadd.f32 %v6408, %v6530
  %v6532 = vpop.f32.mrf.mxu0
  %v6533 = vadd.f32 %v6410, %v6532
  %v6534 = vpop.f32.mrf.mxu0
  %v6535 = vadd.f32 %v6412, %v6534
  %v6536 = vpop.f32.mrf.mxu0
  %v6537 = vadd.f32 %v6414, %v6536
  %6538 = vdwg.mxu0
  %6539 = vst [vmem:[%s5] sm:$0xff] %v6451
  %vm6540 = vcmask 523264
  %6541 = vst.msk [vmem:[%s5 + $0x8] sm:$0xff] %vm6540, %v6453
  %6542 = vst [vmem:[%s5 + $0x10] sm:$0xff] %v6455
  %6543 = vst.msk [vmem:[%s5 + $0x18] sm:$0xff] %vm6540, %v6457
  %6544 = vst [vmem:[%s5 + $0x20] sm:$0xff] %v6461
  %6545 = vst.msk [vmem:[%s5 + $0x28] sm:$0xff] %vm6540, %v6463
  %6546 = vst [vmem:[%s5 + $0x30] sm:$0xff] %v6465
  %6547 = vst.msk [vmem:[%s5 + $0x38] sm:$0xff] %vm6540, %v6467
  %6548 = vst [vmem:[%s5 + $0x40] sm:$0xff] %v6471
  %6549 = vst.msk [vmem:[%s5 + $0x48] sm:$0xff] %vm6540, %v6473
  %6550 = vst [vmem:[%s5 + $0x50] sm:$0xff] %v6475
  %6551 = vst.msk [vmem:[%s5 + $0x58] sm:$0xff] %vm6540, %v6477
  %6552 = vst [vmem:[%s5 + $0x60] sm:$0xff] %v6481
  %6553 = vst.msk [vmem:[%s5 + $0x68] sm:$0xff] %vm6540, %v6483
  %6554 = vst [vmem:[%s5 + $0x70] sm:$0xff] %v6485
  %6555 = vst.msk [vmem:[%s5 + $0x78] sm:$0xff] %vm6540, %v6487
  %6556 = vst [vmem:[%s5 + $0x80] sm:$0xff] %v6491
  %6557 = vst.msk [vmem:[%s5 + $0x88] sm:$0xff] %vm6540, %v6493
  %6558 = vst [vmem:[%s5 + $0x90] sm:$0xff] %v6495
  %6559 = vst.msk [vmem:[%s5 + $0x98] sm:$0xff] %vm6540, %v6497
  %6560 = vst [vmem:[%s5 + $0xa0] sm:$0xff] %v6501
  %6561 = vst.msk [vmem:[%s5 + $0xa8] sm:$0xff] %vm6540, %v6503
  %6562 = vst [vmem:[%s5 + $0xb0] sm:$0xff] %v6505
  %6563 = vst.msk [vmem:[%s5 + $0xb8] sm:$0xff] %vm6540, %v6507
  %6564 = vst [vmem:[%s5 + $0xc0] sm:$0xff] %v6511
  %6565 = vst.msk [vmem:[%s5 + $0xc8] sm:$0xff] %vm6540, %v6513
  %6566 = vst [vmem:[%s5 + $0xd0] sm:$0xff] %v6515
  %6567 = vst.msk [vmem:[%s5 + $0xd8] sm:$0xff] %vm6540, %v6517
  %6568 = vst [vmem:[%s5 + $0xe0] sm:$0xff] %v6521
  %6569 = vst.msk [vmem:[%s5 + $0xe8] sm:$0xff] %vm6540, %v6523
  %6570 = vst [vmem:[%s5 + $0xf0] sm:$0xff] %v6525
  %6571 = vst.msk [vmem:[%s5 + $0xf8] sm:$0xff] %vm6540, %v6527
  %6572 = vst [vmem:[%s5 + $0x100] sm:$0xff] %v6531
  %6573 = vst.msk [vmem:[%s5 + $0x108] sm:$0xff] %vm6540, %v6533
  %6574 = vst [vmem:[%s5 + $0x110] sm:$0xff] %v6535
  %6575 = vst.msk [vmem:[%s5 + $0x118] sm:$0xff] %vm6540, %v6537
  // Predicated region
  $region52: #{fused_forward.1} parent=0 // pred_check
    _
  $region53: #{fused_forward.1} parent=0 // pred_check_branch
    %6577 = sbr.rel (0) target = $region55
  $region54: #{fused_forward.1} parent=0 // pred_region
    _
  $region55: #{fused_forward.1} parent=0 // pred_fallthru
    _
  // Predicated region
  $region56: #{fused_forward.1} parent=0 // pred_check
    _
  $region57: #{fused_forward.1} parent=0 // pred_check_branch
    %6579 = sbr.rel (0) target = $region59
  $region58: #{fused_forward.1} parent=0 // pred_region
    _
  $region59: #{fused_forward.1} parent=0 // pred_fallthru
    _
  %6580 = vsyncmov [#allocation6]
  %s6581 = vpop.sfrf %6580
  %p6582 = scmp.eq.s32.totalorder %s6581, 0
  %p6583 = pneg %p6582
  %6585 = shalt.err (%p6583)

</llo_original>
